<compile_context>
chip_gen: v7x
topology: tpu7x:2x2x1
jax: 0.10.0
libtpu: 0.0.40
codegen_flags: <defaults>
</compile_context>

<pallas_src>
import functools

import jax
import jax.numpy as jnp
from jax import lax
from jax.experimental import pallas as pl
from jax.experimental.pallas import tpu as pltpu

BN_EPS = 1e-5
LANE = 128  # lane width; fc3's Cout=9 is padded to this for dense stores


# --------------------- kernel 1: fused conv stack + max pool ----------------

def _conv_max_kernel(x_ref, w1_ref, b1_ref, w2_ref, b2_ref, w3_ref, b3_ref,
                     o_ref, *, tile_n, total_n, n_tiles):
    """One (1, TN, Cin) tile of points -> running max into the (1,1,1024) output."""
    n_idx = pl.program_id(1)

    @pl.when(n_idx == 0)
    def _():
        o_ref[...] = jnp.full(o_ref.shape, -jnp.inf, dtype=o_ref.dtype)

    x = x_ref[0]                                                    # (TN, Cin) f32
    # conv1 (+folded bn1) + relu — tiny K, kept f32.
    h = jnp.dot(x, w1_ref[...], preferred_element_type=jnp.float32) + b1_ref[...]
    h = jnp.maximum(h, 0.0)                                         # (TN, 64)
    # conv2 / conv3 — bf16 operands on the MXU, f32 accumulation.
    h = jnp.dot(h.astype(jnp.bfloat16), w2_ref[...],
                preferred_element_type=jnp.float32) + b2_ref[...]
    h = jnp.maximum(h, 0.0)                                         # (TN, 128)
    h = jnp.dot(h.astype(jnp.bfloat16), w3_ref[...],
                preferred_element_type=jnp.float32) + b3_ref[...]
    h = jnp.maximum(h, 0.0)                                         # (TN, 1024)

    def _update(ht):
        o_ref[0] = jnp.maximum(o_ref[0], jnp.max(ht, axis=0, keepdims=True))

    if total_n % tile_n != 0:
        # Only the last tile has garbage rows; mask them (with -inf, right
        # before the reduction) only there so the VPU work isn't paid per tile.
        @pl.when(n_idx == n_tiles - 1)
        def _():
            row = lax.broadcasted_iota(jnp.int32, (tile_n, 1), 0) + n_idx * tile_n
            _update(jnp.where(row < total_n, h, -jnp.inf))

        @pl.when(n_idx != n_tiles - 1)
        def _():
            _update(h)
    else:
        _update(h)


def conv_max_pool(x_bnc, w1, b1, w2, b2, w3, b3, *, tile_n=1024):
    """x_bnc: [B, N, Cin] -> [B, 1024] (fused conv/BN/ReLU stack + max over N)."""
    B, N, C = x_bnc.shape
    tn = N if N <= tile_n else tile_n          # tn is a multiple of 8, or == N
    n_tiles = pl.cdiv(N, tn)
    kernel = functools.partial(_conv_max_kernel, tile_n=tn, total_n=N,
                               n_tiles=n_tiles)
    pooled = pl.pallas_call(
        kernel,
        out_shape=jax.ShapeDtypeStruct((B, 1, 1024), jnp.float32),
        grid=(B, n_tiles),
        in_specs=[
            pl.BlockSpec((1, tn, C),   lambda b, n: (b, n, 0)),
            pl.BlockSpec((C, 64),      lambda b, n: (0, 0)),
            pl.BlockSpec((1, 64),      lambda b, n: (0, 0)),
            pl.BlockSpec((64, 128),    lambda b, n: (0, 0)),
            pl.BlockSpec((1, 128),     lambda b, n: (0, 0)),
            pl.BlockSpec((128, 1024),  lambda b, n: (0, 0)),
            pl.BlockSpec((1, 1024),    lambda b, n: (0, 0)),
        ],
        out_specs=pl.BlockSpec((1, 1, 1024), lambda b, n: (b, 0, 0)),
        compiler_params=pltpu.CompilerParams(
            dimension_semantics=("parallel", "arbitrary"),
            vmem_limit_bytes=32 * 1024 * 1024),
    )(x_bnc, w1, b1, w2, b2, w3, b3)
    return pooled.reshape(B, 1024)


# ------------------------- kernel 2: fused FC head --------------------------

def _fc_head_kernel(h_ref, w1_ref, b1_ref, w2_ref, b2_ref, w3_ref, b3_ref,
                    o_ref):
    # Weights are stored bf16 (halves the dominating weight DMA) and cast back
    # to f32 here so the K=1024/512/256 reductions accumulate in f32.
    h = h_ref[...]
    h = jnp.maximum(
        jnp.dot(h, w1_ref[...].astype(jnp.float32),
                preferred_element_type=jnp.float32) + b1_ref[...], 0.0)   # (B, 512)
    h = jnp.maximum(
        jnp.dot(h, w2_ref[...].astype(jnp.float32),
                preferred_element_type=jnp.float32) + b2_ref[...], 0.0)   # (B, 256)
    o_ref[...] = (jnp.dot(h, w3_ref[...].astype(jnp.float32),
                          preferred_element_type=jnp.float32)
                  + b3_ref[...])                                          # (B, 128)


def fc_head(h, w1, b1, w2, b2, w3p, b3p):
    """h: [B, 1024] -> [B, 128] (fc1/fc2/fc3 fused; fc3 lane-padded to 128)."""
    B = h.shape[0]
    return pl.pallas_call(
        _fc_head_kernel,
        out_shape=jax.ShapeDtypeStruct((B, LANE), jnp.float32),
        grid=(1,),
        in_specs=[
            pl.BlockSpec((B, 1024),    lambda i: (0, 0)),
            pl.BlockSpec((1024, 512),  lambda i: (0, 0)),
            pl.BlockSpec((1, 512),     lambda i: (0, 0)),
            pl.BlockSpec((512, 256),   lambda i: (0, 0)),
            pl.BlockSpec((1, 256),     lambda i: (0, 0)),
            pl.BlockSpec((256, LANE),  lambda i: (0, 0)),
            pl.BlockSpec((1, LANE),    lambda i: (0, 0)),
        ],
        out_specs=pl.BlockSpec((B, LANE), lambda i: (0, 0)),
    )(h, w1, b1, w2, b2, w3p, b3p)


# ------------------------------ forward pass --------------------------------

def stn3d_forward(x_bcn, p, *, tile_n=1024):
    """STN3d forward.  x_bcn: [B, input_dim, N] (PyTorch Conv1d layout) -> [B, 3, 3]."""
    B = x_bcn.shape[0]
    # TODO(synk): take channels-last input upstream (or consume (B,C,N) blocks
    # with a transposed-lhs first matmul) to drop this HBM transpose pass.
    x_bnc = jnp.transpose(x_bcn, (0, 2, 1)).astype(jnp.float32)
    pooled = conv_max_pool(x_bnc,
                           p['c1_w'], p['c1_b'],
                           p['c2_w'], p['c2_b'],
                           p['c3_w'], p['c3_b'], tile_n=tile_n)    # [B, 1024]
    out = fc_head(pooled,
                  p['f1_w'], p['f1_b'],
                  p['f2_w'], p['f2_b'],
                  p['f3_w_pad'], p['f3_b_pad'])                    # [B, 128]
    return out[:, :9].reshape(B, 3, 3)


# ------------------------------- parameters ---------------------------------

def make_params(key, input_dim=10):
    """Raw params in PyTorch semantics: conv/fc weights + eval-mode BN stats."""
    keys = iter(jax.random.split(key, 32))

    def w(*shape, s=0.1):
        return s * jax.random.normal(next(keys), shape, dtype=jnp.float32)

    raw = {}
    raw['c1_w'] = w(input_dim, 64);  raw['c1_b'] = w(64)
    raw['c2_w'] = w(64, 128);        raw['c2_b'] = w(128)
    raw['c3_w'] = w(128, 1024);      raw['c3_b'] = w(1024)
    raw['f1_w'] = w(1024, 512);      raw['f1_b'] = w(512)
    raw['f2_w'] = w(512, 256);       raw['f2_b'] = w(256)
    raw['f3_w'] = w(256, 9);         raw['f3_b'] = w(9)
    # BatchNorm eval-mode params: (gamma, beta, running_mean, running_var)
    for name, c in [('bn1', 64), ('bn2', 128), ('bn3', 1024)]:
        raw[name] = (jnp.ones((c,), jnp.float32), jnp.zeros((c,), jnp.float32),
                     jnp.zeros((c,), jnp.float32), jnp.ones((c,), jnp.float32))
    return raw


def prepare_params(raw):
    """One-time host-side prep:
    - fold eval-mode BN (gamma, beta, mean, var) into the 1x1-conv weights/biases,
    - cast the big GEMM weights (conv2/conv3, fc1/fc2/fc3) to bf16,
    - pad fc3 to a lane-dense Cout=128 and fold the +eye(3) init into its bias,
    - reshape biases to (1, C) rows (kept f32).
    """
    def fold_bn(w, b, gamma, beta, mean, var):
        s = gamma / jnp.sqrt(var + BN_EPS)
        return w * s[None, :], (b - mean) * s + beta

    c1w, c1b = fold_bn(raw['c1_w'], raw['c1_b'], *raw['bn1'])
    c2w, c2b = fold_bn(raw['c2_w'], raw['c2_b'], *raw['bn2'])
    c3w, c3b = fold_bn(raw['c3_w'], raw['c3_b'], *raw['bn3'])

    p = {}
    p['c1_w'] = c1w                                   # tiny K=input_dim, keep f32
    p['c2_w'] = c2w.astype(jnp.bfloat16)              # bf16 MXU operand
    p['c3_w'] = c3w.astype(jnp.bfloat16)              # bf16 MXU operand
    p['c1_b'] = c1b.reshape(1, -1)
    p['c2_b'] = c2b.reshape(1, -1)
    p['c3_b'] = c3b.reshape(1, -1)

    p['f1_w'] = raw['f1_w'].astype(jnp.bfloat16)      # fc head is weight-DMA bound
    p['f2_w'] = raw['f2_w'].astype(jnp.bfloat16)
    p['f1_b'] = raw['f1_b'].reshape(1, -1)
    p['f2_b'] = raw['f2_b'].reshape(1, -1)
    # fc3 (256, 9) -> (256, 128); fold identity (eye(3).view(1,9)) into the bias.
    f3w = jnp.zeros((256, LANE), jnp.float32).at[:, :9].set(raw['f3_w'])
    p['f3_w_pad'] = f3w.astype(jnp.bfloat16)
    b3 = jnp.zeros((LANE,), jnp.float32).at[:9].set(
        raw['f3_b'] + jnp.eye(3, dtype=jnp.float32).reshape(9))
    p['f3_b_pad'] = b3.reshape(1, LANE)
    return p


# ------------------------------ pure-JAX reference ---------------------------

def ref_forward(x_bcn, raw):
    xb = jnp.transpose(x_bcn, (0, 2, 1))

    def bn(h, g, b_, m, v):
        return (h - m) / jnp.sqrt(v + BN_EPS) * g + b_

    h = jax.nn.relu(bn(xb @ raw['c1_w'] + raw['c1_b'], *raw['bn1']))
    h = jax.nn.relu(bn(h @ raw['c2_w'] + raw['c2_b'], *raw['bn2']))
    h = jax.nn.relu(bn(h @ raw['c3_w'] + raw['c3_b'], *raw['bn3']))
    h = jnp.max(h, axis=1)                                    # max over points
    h = jax.nn.relu(h @ raw['f1_w'] + raw['f1_b'])
    h = jax.nn.relu(h @ raw['f2_w'] + raw['f2_b'])
    h = h @ raw['f3_w'] + raw['f3_b'] + jnp.eye(3, dtype=jnp.float32).reshape(1, 9)
    return h.reshape(-1, 3, 3)


# ---------------------------------- main -------------------------------------

if __name__ == "__main__":
    B, N, INPUT_DIM = 2, 16, 10
    key = jax.random.PRNGKey(0)
    kp, kx = jax.random.split(key)

    raw = make_params(kp, input_dim=INPUT_DIM)
    params = prepare_params(raw)
    x = jax.random.normal(kx, (B, INPUT_DIM, N), dtype=jnp.float32)  # [B, C, N]

    fwd = jax.jit(stn3d_forward)
    out = fwd(x, params)
    jax.block_until_ready(out)

    assert out.shape == (B, 3, 3)
    ref = ref_forward(x, raw)
    # Tolerance sized for the bf16 operand casts (conv2/conv3 GEMMs + bf16-stored
    # fc weights) propagated through the 1024->512->256 head; f32 accumulation
    # is kept everywhere.
    assert bool(jnp.allclose(out, ref, rtol=5e-2, atol=5e-2)), "mismatch vs reference"
    print("KERNEL_OK")
</pallas_src>

<mosaic_0001>
module attributes {stable_mosaic.version = 11 : i64} {
  func.func @_fc_head_kernel(%arg0: i32, %arg1: memref<2x1024xf32, #tpu.memory_space<vmem>>, %arg2: memref<1024x512xbf16, #tpu.memory_space<vmem>>, %arg3: memref<1x512xf32, #tpu.memory_space<vmem>>, %arg4: memref<512x256xbf16, #tpu.memory_space<vmem>>, %arg5: memref<1x256xf32, #tpu.memory_space<vmem>>, %arg6: memref<256x128xbf16, #tpu.memory_space<vmem>>, %arg7: memref<1x128xf32, #tpu.memory_space<vmem>>, %arg8: memref<2x128xf32, #tpu.memory_space<vmem>>) attributes {dimension_semantics = [#tpu.dimension_semantics<arbitrary>], iteration_bounds = array<i64: 1>, scalar_prefetch = 0 : i64, scratch_operands = 0 : i64, tpu.core_type = #tpu.core_type<tc>, window_params = [{pipeline_mode = #tpu.pipeline_mode<synchronous>, transform_indices = @transform_0, window_bounds = array<i64: 2, 1024>}, {pipeline_mode = #tpu.pipeline_mode<synchronous>, transform_indices = @transform_1, window_bounds = array<i64: 1024, 512>}, {pipeline_mode = #tpu.pipeline_mode<synchronous>, transform_indices = @transform_2, window_bounds = array<i64: 1, 512>}, {pipeline_mode = #tpu.pipeline_mode<synchronous>, transform_indices = @transform_3, window_bounds = array<i64: 512, 256>}, {pipeline_mode = #tpu.pipeline_mode<synchronous>, transform_indices = @transform_4, window_bounds = array<i64: 1, 256>}, {pipeline_mode = #tpu.pipeline_mode<synchronous>, transform_indices = @transform_5, window_bounds = array<i64: 256, 128>}, {pipeline_mode = #tpu.pipeline_mode<synchronous>, transform_indices = @transform_6, window_bounds = array<i64: 1, 128>}, {pipeline_mode = #tpu.pipeline_mode<synchronous>, transform_indices = @transform_7, window_bounds = array<i64: 2, 128>}]} {
    %c0 = arith.constant 0 : index
    %c0_0 = arith.constant 0 : index
    %0 = vector.load %arg1[%c0, %c0_0] : memref<2x1024xf32, #tpu.memory_space<vmem>>, vector<2x1024xf32>
    %c0_1 = arith.constant 0 : index
    %c0_2 = arith.constant 0 : index
    %1 = vector.load %arg2[%c0_1, %c0_2] : memref<1024x512xbf16, #tpu.memory_space<vmem>>, vector<1024x512xbf16>
    %2 = arith.extf %1 : vector<1024x512xbf16> to vector<1024x512xf32>
    %cst = arith.constant dense<0.000000e+00> : vector<2x512xf32>
    %3 = tpu.matmul %0, %2, %cst {dimension_numbers = #tpu.dot_dimension_numbers<[1], [0], [0], [1], [0, 0, 1, 1], [], []>} : vector<2x1024xf32>, vector<1024x512xf32>, vector<2x512xf32> -> vector<2x512xf32>
    %c0_3 = arith.constant 0 : index
    %c0_4 = arith.constant 0 : index
    %4 = vector.load %arg3[%c0_3, %c0_4] : memref<1x512xf32, #tpu.memory_space<vmem>>, vector<1x512xf32>
    %5 = vector.broadcast %4 : vector<1x512xf32> to vector<2x512xf32>
    %6 = arith.addf %3, %5 : vector<2x512xf32>
    %cst_5 = arith.constant 0.000000e+00 : f32
    %7 = vector.broadcast %cst_5 : f32 to vector<2x512xf32>
    %8 = arith.maximumf %6, %7 : vector<2x512xf32>
    %c0_6 = arith.constant 0 : index
    %c0_7 = arith.constant 0 : index
    %9 = vector.load %arg4[%c0_6, %c0_7] : memref<512x256xbf16, #tpu.memory_space<vmem>>, vector<512x256xbf16>
    %10 = arith.extf %9 : vector<512x256xbf16> to vector<512x256xf32>
    %cst_8 = arith.constant dense<0.000000e+00> : vector<2x256xf32>
    %11 = tpu.matmul %8, %10, %cst_8 {dimension_numbers = #tpu.dot_dimension_numbers<[1], [0], [0], [1], [0, 0, 1, 1], [], []>} : vector<2x512xf32>, vector<512x256xf32>, vector<2x256xf32> -> vector<2x256xf32>
    %c0_9 = arith.constant 0 : index
    %c0_10 = arith.constant 0 : index
    %12 = vector.load %arg5[%c0_9, %c0_10] : memref<1x256xf32, #tpu.memory_space<vmem>>, vector<1x256xf32>
    %13 = vector.broadcast %12 : vector<1x256xf32> to vector<2x256xf32>
    %14 = arith.addf %11, %13 : vector<2x256xf32>
    %cst_11 = arith.constant 0.000000e+00 : f32
    %15 = vector.broadcast %cst_11 : f32 to vector<2x256xf32>
    %16 = arith.maximumf %14, %15 : vector<2x256xf32>
    %c0_12 = arith.constant 0 : index
    %c0_13 = arith.constant 0 : index
    %17 = vector.load %arg6[%c0_12, %c0_13] : memref<256x128xbf16, #tpu.memory_space<vmem>>, vector<256x128xbf16>
    %18 = arith.extf %17 : vector<256x128xbf16> to vector<256x128xf32>
    %cst_14 = arith.constant dense<0.000000e+00> : vector<2x128xf32>
    %19 = tpu.matmul %16, %18, %cst_14 {dimension_numbers = #tpu.dot_dimension_numbers<[1], [0], [0], [1], [0, 0, 1, 1], [], []>} : vector<2x256xf32>, vector<256x128xf32>, vector<2x128xf32> -> vector<2x128xf32>
    %c0_15 = arith.constant 0 : index
    %c0_16 = arith.constant 0 : index
    %20 = vector.load %arg7[%c0_15, %c0_16] : memref<1x128xf32, #tpu.memory_space<vmem>>, vector<1x128xf32>
    %21 = vector.broadcast %20 : vector<1x128xf32> to vector<2x128xf32>
    %22 = arith.addf %19, %21 : vector<2x128xf32>
    %c0_17 = arith.constant 0 : index
    %c0_18 = arith.constant 0 : index
    %23 = vector.load %arg8[%c0_17, %c0_18] : memref<2x128xf32, #tpu.memory_space<vmem>>, vector<2x128xf32>
    tpu.vector_store %arg8[%c0_17, %c0_18], %22 {strides = array<i32>} : memref<2x128xf32, #tpu.memory_space<vmem>>, vector<2x128xf32>,
    return
  }
  func.func @transform_0(%arg0: i32) -> (i32, i32) {
    %c0_i32 = arith.constant 0 : i32
    %c0_i32_0 = arith.constant 0 : i32
    %c0_i32_1 = arith.constant 0 : i32
    return %c0_i32, %c0_i32_0 : i32, i32
  }
  func.func @transform_1(%arg0: i32) -> (i32, i32) {
    %c0_i32 = arith.constant 0 : i32
    %c0_i32_0 = arith.constant 0 : i32
    %c0_i32_1 = arith.constant 0 : i32
    return %c0_i32, %c0_i32_0 : i32, i32
  }
  func.func @transform_2(%arg0: i32) -> (i32, i32) {
    %c0_i32 = arith.constant 0 : i32
    %c0_i32_0 = arith.constant 0 : i32
    %c0_i32_1 = arith.constant 0 : i32
    return %c0_i32, %c0_i32_0 : i32, i32
  }
  func.func @transform_3(%arg0: i32) -> (i32, i32) {
    %c0_i32 = arith.constant 0 : i32
    %c0_i32_0 = arith.constant 0 : i32
    %c0_i32_1 = arith.constant 0 : i32
    return %c0_i32, %c0_i32_0 : i32, i32
  }
  func.func @transform_4(%arg0: i32) -> (i32, i32) {
    %c0_i32 = arith.constant 0 : i32
    %c0_i32_0 = arith.constant 0 : i32
    %c0_i32_1 = arith.constant 0 : i32
    return %c0_i32, %c0_i32_0 : i32, i32
  }
  func.func @transform_5(%arg0: i32) -> (i32, i32) {
    %c0_i32 = arith.constant 0 : i32
    %c0_i32_0 = arith.constant 0 : i32
    %c0_i32_1 = arith.constant 0 : i32
    return %c0_i32, %c0_i32_0 : i32, i32
  }
  func.func @transform_6(%arg0: i32) -> (i32, i32) {
    %c0_i32 = arith.constant 0 : i32
    %c0_i32_0 = arith.constant 0 : i32
    %c0_i32_1 = arith.constant 0 : i32
    return %c0_i32, %c0_i32_0 : i32, i32
  }
  func.func @transform_7(%arg0: i32) -> (i32, i32) {
    %c0_i32 = arith.constant 0 : i32
    %c0_i32_0 = arith.constant 0 : i32
    %c0_i32_1 = arith.constant 0 : i32
    return %c0_i32, %c0_i32_0 : i32, i32
  }
}

module attributes {stable_mosaic.version = 11 : i64} {
  func.func @_conv_max_kernel(%arg0: i32, %arg1: i32, %arg2: memref<1x16x10xf32, #tpu.memory_space<vmem>>, %arg3: memref<10x64xf32, #tpu.memory_space<vmem>>, %arg4: memref<1x64xf32, #tpu.memory_space<vmem>>, %arg5: memref<64x128xbf16, #tpu.memory_space<vmem>>, %arg6: memref<1x128xf32, #tpu.memory_space<vmem>>, %arg7: memref<128x1024xbf16, #tpu.memory_space<vmem>>, %arg8: memref<1x1024xf32, #tpu.memory_space<vmem>>, %arg9: memref<1x1x1024xf32, #tpu.memory_space<vmem>>) attributes {dimension_semantics = [#tpu.dimension_semantics<parallel>, #tpu.dimension_semantics<arbitrary>], iteration_bounds = array<i64: 2, 1>, scalar_prefetch = 0 : i64, scratch_operands = 0 : i64, tpu.core_type = #tpu.core_type<tc>, window_params = [{transform_indices = @transform_0, window_bounds = array<i64: 1, 16, 10>}, {pipeline_mode = #tpu.pipeline_mode<synchronous>, transform_indices = @transform_1, window_bounds = array<i64: 10, 64>}, {pipeline_mode = #tpu.pipeline_mode<synchronous>, transform_indices = @transform_2, window_bounds = array<i64: 1, 64>}, {pipeline_mode = #tpu.pipeline_mode<synchronous>, transform_indices = @transform_3, window_bounds = array<i64: 64, 128>}, {pipeline_mode = #tpu.pipeline_mode<synchronous>, transform_indices = @transform_4, window_bounds = array<i64: 1, 128>}, {pipeline_mode = #tpu.pipeline_mode<synchronous>, transform_indices = @transform_5, window_bounds = array<i64: 128, 1024>}, {pipeline_mode = #tpu.pipeline_mode<synchronous>, transform_indices = @transform_6, window_bounds = array<i64: 1, 1024>}, {transform_indices = @transform_7, window_bounds = array<i64: 1, 1, 1024>}]} {
    %c0_i32 = arith.constant 0 : i32
    %0 = arith.cmpi eq, %arg1, %c0_i32 : i32
    %1 = arith.extui %0 : i1 to i32
    %c0_i32_0 = arith.constant 0 : i32
    %2 = arith.cmpi ne, %1, %c0_i32_0 : i32
    scf.if %2 {
      %cst_27 = arith.constant 0xFF800000 : f32
      %36 = vector.broadcast %cst_27 : f32 to vector<1x1x1024xf32>
      %c0_28 = arith.constant 0 : index
      %c0_29 = arith.constant 0 : index
      %c0_30 = arith.constant 0 : index
      %37 = vector.load %arg9[%c0_28, %c0_29, %c0_30] : memref<1x1x1024xf32, #tpu.memory_space<vmem>>, vector<1x1x1024xf32>
      tpu.vector_store %arg9[%c0_28, %c0_29, %c0_30], %36 {strides = array<i32>} : memref<1x1x1024xf32, #tpu.memory_space<vmem>>, vector<1x1x1024xf32>,
    } else {
    }
    %c0 = arith.constant 0 : index
    %c0_1 = arith.constant 0 : index
    %c0_2 = arith.constant 0 : index
    %3 = vector.load %arg2[%c0, %c0_1, %c0_2] : memref<1x16x10xf32, #tpu.memory_space<vmem>>, vector<1x16x10xf32>
    %4 = vector.shape_cast %3 : vector<1x16x10xf32> to vector<16x10xf32>
    %c0_3 = arith.constant 0 : index
    %c0_4 = arith.constant 0 : index
    %5 = vector.load %arg3[%c0_3, %c0_4] : memref<10x64xf32, #tpu.memory_space<vmem>>, vector<10x64xf32>
    %cst = arith.constant dense<0.000000e+00> : vector<16x64xf32>
    %6 = tpu.matmul %4, %5, %cst {dimension_numbers = #tpu.dot_dimension_numbers<[1], [0], [0], [1], [0, 0, 1, 1], [], []>} : vector<16x10xf32>, vector<10x64xf32>, vector<16x64xf32> -> vector<16x64xf32>
    %c0_5 = arith.constant 0 : index
    %c0_6 = arith.constant 0 : index
    %7 = vector.load %arg4[%c0_5, %c0_6] : memref<1x64xf32, #tpu.memory_space<vmem>>, vector<1x64xf32>
    %8 = vector.broadcast %7 : vector<1x64xf32> to vector<16x64xf32>
    %9 = arith.addf %6, %8 : vector<16x64xf32>
    %cst_7 = arith.constant 0.000000e+00 : f32
    %10 = vector.broadcast %cst_7 : f32 to vector<16x64xf32>
    %11 = arith.maximumf %9, %10 : vector<16x64xf32>
    %12 = arith.truncf %11 : vector<16x64xf32> to vector<16x64xbf16>
    %c0_8 = arith.constant 0 : index
    %c0_9 = arith.constant 0 : index
    %13 = vector.load %arg5[%c0_8, %c0_9] : memref<64x128xbf16, #tpu.memory_space<vmem>>, vector<64x128xbf16>
    %cst_10 = arith.constant dense<0.000000e+00> : vector<16x128xf32>
    %14 = tpu.matmul %12, %13, %cst_10 {dimension_numbers = #tpu.dot_dimension_numbers<[1], [0], [0], [1], [0, 0, 1, 1], [], []>} : vector<16x64xbf16>, vector<64x128xbf16>, vector<16x128xf32> -> vector<16x128xf32>
    %c0_11 = arith.constant 0 : index
    %c0_12 = arith.constant 0 : index
    %15 = vector.load %arg6[%c0_11, %c0_12] : memref<1x128xf32, #tpu.memory_space<vmem>>, vector<1x128xf32>
    %16 = vector.broadcast %15 : vector<1x128xf32> to vector<16x128xf32>
    %17 = arith.addf %14, %16 : vector<16x128xf32>
    %cst_13 = arith.constant 0.000000e+00 : f32
    %18 = vector.broadcast %cst_13 : f32 to vector<16x128xf32>
    %19 = arith.maximumf %17, %18 : vector<16x128xf32>
    %20 = arith.truncf %19 : vector<16x128xf32> to vector<16x128xbf16>
    %c0_14 = arith.constant 0 : index
    %c0_15 = arith.constant 0 : index
    %21 = vector.load %arg7[%c0_14, %c0_15] : memref<128x1024xbf16, #tpu.memory_space<vmem>>, vector<128x1024xbf16>
    %cst_16 = arith.constant dense<0.000000e+00> : vector<16x1024xf32>
    %22 = tpu.matmul %20, %21, %cst_16 {dimension_numbers = #tpu.dot_dimension_numbers<[1], [0], [0], [1], [0, 0, 1, 1], [], []>} : vector<16x128xbf16>, vector<128x1024xbf16>, vector<16x1024xf32> -> vector<16x1024xf32>
    %c0_17 = arith.constant 0 : index
    %c0_18 = arith.constant 0 : index
    %23 = vector.load %arg8[%c0_17, %c0_18] : memref<1x1024xf32, #tpu.memory_space<vmem>>, vector<1x1024xf32>
    %24 = vector.broadcast %23 : vector<1x1024xf32> to vector<16x1024xf32>
    %25 = arith.addf %22, %24 : vector<16x1024xf32>
    %cst_19 = arith.constant 0.000000e+00 : f32
    %26 = vector.broadcast %cst_19 : f32 to vector<16x1024xf32>
    %27 = arith.maximumf %25, %26 : vector<16x1024xf32>
    %c0_20 = arith.constant 0 : index
    %c0_21 = arith.constant 0 : index
    %c0_22 = arith.constant 0 : index
    %28 = vector.load %arg9[%c0_20, %c0_21, %c0_22] : memref<1x1x1024xf32, #tpu.memory_space<vmem>>, vector<1x1x1024xf32>
    %29 = vector.shape_cast %28 : vector<1x1x1024xf32> to vector<1x1024xf32>
    %cst_23 = arith.constant dense<0xFF800000> : vector<1024xf32>
    %30 = vector.multi_reduction <maximumf>, %27, %cst_23 [0] : vector<16x1024xf32> to vector<1024xf32>
    %31 = vector.shape_cast %30 : vector<1024xf32> to vector<1x1024xf32>
    %32 = arith.maximumf %29, %31 : vector<1x1024xf32>
    %c0_24 = arith.constant 0 : index
    %c0_25 = arith.constant 0 : index
    %c0_26 = arith.constant 0 : index
    %33 = vector.load %arg9[%c0_24, %c0_25, %c0_26] : memref<1x1x1024xf32, #tpu.memory_space<vmem>>, vector<1x1x1024xf32>
    %34 = vector.shape_cast %33 : vector<1x1x1024xf32> to vector<1x1024xf32>
    %35 = vector.shape_cast %32 : vector<1x1024xf32> to vector<1x1x1024xf32>
    tpu.vector_store %arg9[%c0_24, %c0_25, %c0_26], %35 {strides = array<i32>} : memref<1x1x1024xf32, #tpu.memory_space<vmem>>, vector<1x1x1024xf32>,
    return
  }
  func.func @transform_0(%arg0: i32, %arg1: i32) -> (i32, i32, i32) {
    %c0_i32 = arith.constant 0 : i32
    %c0_i32_0 = arith.constant 0 : i32
    return %arg0, %arg1, %c0_i32 : i32, i32, i32
  }
  func.func @transform_1(%arg0: i32, %arg1: i32) -> (i32, i32) {
    %c0_i32 = arith.constant 0 : i32
    %c0_i32_0 = arith.constant 0 : i32
    %c0_i32_1 = arith.constant 0 : i32
    return %c0_i32, %c0_i32_0 : i32, i32
  }
  func.func @transform_2(%arg0: i32, %arg1: i32) -> (i32, i32) {
    %c0_i32 = arith.constant 0 : i32
    %c0_i32_0 = arith.constant 0 : i32
    %c0_i32_1 = arith.constant 0 : i32
    return %c0_i32, %c0_i32_0 : i32, i32
  }
  func.func @transform_3(%arg0: i32, %arg1: i32) -> (i32, i32) {
    %c0_i32 = arith.constant 0 : i32
    %c0_i32_0 = arith.constant 0 : i32
    %c0_i32_1 = arith.constant 0 : i32
    return %c0_i32, %c0_i32_0 : i32, i32
  }
  func.func @transform_4(%arg0: i32, %arg1: i32) -> (i32, i32) {
    %c0_i32 = arith.constant 0 : i32
    %c0_i32_0 = arith.constant 0 : i32
    %c0_i32_1 = arith.constant 0 : i32
    return %c0_i32, %c0_i32_0 : i32, i32
  }
  func.func @transform_5(%arg0: i32, %arg1: i32) -> (i32, i32) {
    %c0_i32 = arith.constant 0 : i32
    %c0_i32_0 = arith.constant 0 : i32
    %c0_i32_1 = arith.constant 0 : i32
    return %c0_i32, %c0_i32_0 : i32, i32
  }
  func.func @transform_6(%arg0: i32, %arg1: i32) -> (i32, i32) {
    %c0_i32 = arith.constant 0 : i32
    %c0_i32_0 = arith.constant 0 : i32
    %c0_i32_1 = arith.constant 0 : i32
    return %c0_i32, %c0_i32_0 : i32, i32
  }
  func.func @transform_7(%arg0: i32, %arg1: i32) -> (i32, i32, i32) {
    %c0_i32 = arith.constant 0 : i32
    %c0_i32_0 = arith.constant 0 : i32
    %c0_i32_1 = arith.constant 0 : i32
    return %arg0, %c0_i32, %c0_i32_0 : i32, i32, i32
  }
}

</mosaic_0001>

<llo_original>
// kernel: stn3d_forward.2
$region0: #{stn3d_forward.2}
  #allocation0 [shape = 'u32[]', space=smem, size = 0x4, offset = 0x4, fixed_abs, tag = 'smem constant byte address 0x4 - core index']
  #allocation1 [shape = 'u32[144,128]{1,0:T(1,128)}', space=vmem, size = 0x12000, scoped, tag = 'internal scratch']
  %s0 = inlined_call_operand.vmem [shape: f32[2,16,10], index: 0, kind: input, shape index: {}]
  %s1 = inlined_call_operand.hbm [shape: f32[10,64], index: 1, kind: input, shape index: {}]
  %s2 = inlined_call_operand.hbm [shape: f32[1,64], index: 2, kind: input, shape index: {}]
  %s3 = inlined_call_operand.hbm [shape: bf16[64,128], index: 3, kind: input, shape index: {}]
  %s4 = inlined_call_operand.hbm [shape: f32[1,128], index: 4, kind: input, shape index: {}]
  %s5 = inlined_call_operand.hbm [shape: bf16[128,1024], index: 5, kind: input, shape index: {}]
  %s6 = inlined_call_operand.hbm [shape: f32[1,1024], index: 6, kind: input, shape index: {}]
  %s7 = inlined_call_operand.vmem [shape: f32[2,1,1024], index: 7, kind: output, shape index: {}]
  %s8 = sld [smem:[#allocation0]]
  $region89: #{stn3d_forward.2} parent=0
    _
  %s10 = ssub.s32 1, %s8
  %s11 = scalar_select 0, %s10, %s8
  $region1: #{stn3d_forward.2} parent=0
    #allocation2 [shape = 'u8[8192]{0}', space=vmem, size = 0x2000, scoped, tag = 'input window, operand 1, single buffered']
    #allocation3 [shape = 's32[2]{0}', space=sflag, size = 0x8, scoped, tag = 'scoped memory for stn3d_forward.2']
    #allocation4 [shape = 'u8[512]{0}', space=vmem, size = 0x400, scoped, tag = 'input window, operand 2, single buffered']
    #allocation5 [shape = 's32[1]{0}', space=sflag, size = 0x4, scoped, tag = 'scoped memory for stn3d_forward.2']
    #allocation6 [shape = 'u8[16384]{0}', space=vmem, size = 0x4000, scoped, tag = 'input window, operand 3, single buffered']
    #allocation7 [shape = 'u8[512]{0}', space=vmem, size = 0x400, scoped, tag = 'input window, operand 4, single buffered']
    #allocation8 [shape = 's32[1]{0}', space=sflag, size = 0x4, scoped, tag = 'scoped memory for stn3d_forward.2']
    #allocation9 [shape = 'u8[262144]{0}', space=vmem, size = 0x40000, scoped, tag = 'input window, operand 5, single buffered']
    #allocation10 [shape = 'u8[4096]{0}', space=vmem, size = 0x1000, scoped, tag = 'input window, operand 6, single buffered']
    #allocation11 [shape = 's32[1]{0}', space=sflag, size = 0x4, scoped, tag = 'scoped memory for stn3d_forward.2']
    %12 = vsyncpa [#allocation3], 0
    %13 = vsyncpa [#allocation5], 0
    %14 = vsyncpa [#allocation8], 0
    %15 = vsyncpa [#allocation11], 0
    loop: start=0, step=1, limit=4
    $region2: #{stn3d_forward.2} parent=1 // loop_pre_header
      _
    $region3: #{stn3d_forward.2} parent=1 // loop_header
      %s17 = sphi 0, %s21
      %p18 = scmp.ge.s32.totalorder %s17, 4
      %s24 = sphi 0, %s36
      %s25 = sphi 0, %s32
      %s26 = sphi 0, %s24
      %s27 = sphi 0, %s25
      %s28 = sphi 0, %s26
      %s29 = sphi 0, %s27
      %s41 = sphi 0, %s43
      %s44 = sphi 0, %s41
      %s45 = sphi 0, %s44
      %s61 = sphi 0, %s45
      %s65 = sphi 0, %s65
      %s67 = sphi 0, %s65
      %s68 = sphi 0, %s67
      %s82 = sphi 0, %s68
      %s86 = sphi 0, %s86
      %s88 = sphi 0, %s86
      %s89 = sphi 0, %s88
      %s103 = sphi 0, %s89
      %s107 = sphi 0, %s107
      %s109 = sphi 0, %s107
      %s110 = sphi 0, %s109
      %s124 = sphi 0, %s110
      %s128 = sphi 0, %s128
      %s130 = sphi 0, %s128
      %s131 = sphi 0, %s130
      %s145 = sphi 0, %s131
      %s149 = sphi 0, %s149
      %s151 = sphi 0, %s149
      %s152 = sphi 0, %s151
      %s166 = sphi 0, %s152
      %s170 = sphi 0, %s170
      %s172 = sphi 0, %s170
      %s173 = sphi 0, %s172
      %s187 = sphi 0, %s173
      %s193 = sphi 0, %s195
      %s196 = sphi 0, %s193
      %s197 = sphi 0, %s196
      %s213 = sphi 0, %s197
    $region4: #{stn3d_forward.2} parent=1 // loop_header_branch
      %20 = sbr.rel (%p18) target = $region8
    $region5: #{stn3d_forward.2} parent=1 // loop_body
      %s22 = ssub.s32 %s17, 1
      %s23 = ssub.s32 %s17, 2
      %s30 = sadd.s32 1, %s25
      %p31 = scmp.ge.s32.totalorder %s30, 1
      %s32 = scalar_select %p31, 0, %s30
      %s33 = sadd.s32 1, %s24
      %s34 = scalar_select %p31, %s33, %s24
      %p35 = scmp.ge.s32.totalorder %s34, 2
      %s36 = scalar_select %p35, 0, %s34
      %s37 = ssub.s32 %s24, %s36
      %s38 = ssub.s32 %s25, %s32
      %s39 = sor.u32 %s37, %s38
      %p40 = scmp.eq.s32.totalorder %s39, 0
      %s42 = sadd.s32 %s41, 1
      %s43 = scalar_select %p40, %s41, %s42
      %p46 = pneg %p40
      %p47 = scmp.eq.s32.totalorder %s17, 1
      %p48 = por %p46, %p47
      %p49 = scmp.ne.s32.totalorder %s41, %s44
      %p50 = scmp.eq.s32.totalorder %s17, 0
      %p51 = por %p49, %p50
      %p52 = scmp.ne.s32.totalorder %s41, %s44
      %p53 = scmp.eq.s32.totalorder %s22, 1
      %p54 = por %p52, %p53
      %p55 = scmp.ne.s32.totalorder %s44, %s45
      %p56 = scmp.eq.s32.totalorder %s22, 0
      %p57 = por %p55, %p56
      %p58 = scmp.ne.s32.totalorder %s44, %s45
      %p59 = scmp.eq.s32.totalorder %s23, 1
      %p60 = por %p58, %p59
      %p62 = scmp.ne.s32.totalorder %s45, %s61
      %p63 = scmp.eq.s32.totalorder %s23, 0
      %p64 = por %p62, %p63
      %s66 = sadd.s32 %s65, 1
      %p69 = scmp.eq.s32.totalorder %s17, 1
      %p70 = scmp.ne.s32.totalorder %s65, %s67
      %p71 = scmp.eq.s32.totalorder %s17, 0
      %p72 = por %p70, %p71
      %p73 = scmp.ne.s32.totalorder %s65, %s67
      %p74 = scmp.eq.s32.totalorder %s22, 1
      %p75 = por %p73, %p74
      %p76 = scmp.ne.s32.totalorder %s67, %s68
      %p77 = scmp.eq.s32.totalorder %s22, 0
      %p78 = por %p76, %p77
      %p79 = scmp.ne.s32.totalorder %s67, %s68
      %p80 = scmp.eq.s32.totalorder %s23, 1
      %p81 = por %p79, %p80
      %p83 = scmp.ne.s32.totalorder %s68, %s82
      %p84 = scmp.eq.s32.totalorder %s23, 0
      %p85 = por %p83, %p84
      %s87 = sadd.s32 %s86, 1
      %p90 = scmp.eq.s32.totalorder %s17, 1
      %p91 = scmp.ne.s32.totalorder %s86, %s88
      %p92 = scmp.eq.s32.totalorder %s17, 0
      %p93 = por %p91, %p92
      %p94 = scmp.ne.s32.totalorder %s86, %s88
      %p95 = scmp.eq.s32.totalorder %s22, 1
      %p96 = por %p94, %p95
      %p97 = scmp.ne.s32.totalorder %s88, %s89
      %p98 = scmp.eq.s32.totalorder %s22, 0
      %p99 = por %p97, %p98
      %p100 = scmp.ne.s32.totalorder %s88, %s89
      %p101 = scmp.eq.s32.totalorder %s23, 1
      %p102 = por %p100, %p101
      %p104 = scmp.ne.s32.totalorder %s89, %s103
      %p105 = scmp.eq.s32.totalorder %s23, 0
      %p106 = por %p104, %p105
      %s108 = sadd.s32 %s107, 1
      %p111 = scmp.eq.s32.totalorder %s17, 1
      %p112 = scmp.ne.s32.totalorder %s107, %s109
      %p113 = scmp.eq.s32.totalorder %s17, 0
      %p114 = por %p112, %p113
      %p115 = scmp.ne.s32.totalorder %s107, %s109
      %p116 = scmp.eq.s32.totalorder %s22, 1
      %p117 = por %p115, %p116
      %p118 = scmp.ne.s32.totalorder %s109, %s110
      %p119 = scmp.eq.s32.totalorder %s22, 0
      %p120 = por %p118, %p119
      %p121 = scmp.ne.s32.totalorder %s109, %s110
      %p122 = scmp.eq.s32.totalorder %s23, 1
      %p123 = por %p121, %p122
      %p125 = scmp.ne.s32.totalorder %s110, %s124
      %p126 = scmp.eq.s32.totalorder %s23, 0
      %p127 = por %p125, %p126
      %s129 = sadd.s32 %s128, 1
      %p132 = scmp.eq.s32.totalorder %s17, 1
      %p133 = scmp.ne.s32.totalorder %s128, %s130
      %p134 = scmp.eq.s32.totalorder %s17, 0
      %p135 = por %p133, %p134
      %p136 = scmp.ne.s32.totalorder %s128, %s130
      %p137 = scmp.eq.s32.totalorder %s22, 1
      %p138 = por %p136, %p137
      %p139 = scmp.ne.s32.totalorder %s130, %s131
      %p140 = scmp.eq.s32.totalorder %s22, 0
      %p141 = por %p139, %p140
      %p142 = scmp.ne.s32.totalorder %s130, %s131
      %p143 = scmp.eq.s32.totalorder %s23, 1
      %p144 = por %p142, %p143
      %p146 = scmp.ne.s32.totalorder %s131, %s145
      %p147 = scmp.eq.s32.totalorder %s23, 0
      %p148 = por %p146, %p147
      %s150 = sadd.s32 %s149, 1
      %p153 = scmp.eq.s32.totalorder %s17, 1
      %p154 = scmp.ne.s32.totalorder %s149, %s151
      %p155 = scmp.eq.s32.totalorder %s17, 0
      %p156 = por %p154, %p155
      %p157 = scmp.ne.s32.totalorder %s149, %s151
      %p158 = scmp.eq.s32.totalorder %s22, 1
      %p159 = por %p157, %p158
      %p160 = scmp.ne.s32.totalorder %s151, %s152
      %p161 = scmp.eq.s32.totalorder %s22, 0
      %p162 = por %p160, %p161
      %p163 = scmp.ne.s32.totalorder %s151, %s152
      %p164 = scmp.eq.s32.totalorder %s23, 1
      %p165 = por %p163, %p164
      %p167 = scmp.ne.s32.totalorder %s152, %s166
      %p168 = scmp.eq.s32.totalorder %s23, 0
      %p169 = por %p167, %p168
      %s171 = sadd.s32 %s170, 1
      %p174 = scmp.eq.s32.totalorder %s17, 1
      %p175 = scmp.ne.s32.totalorder %s170, %s172
      %p176 = scmp.eq.s32.totalorder %s17, 0
      %p177 = por %p175, %p176
      %p178 = scmp.ne.s32.totalorder %s170, %s172
      %p179 = scmp.eq.s32.totalorder %s22, 1
      %p180 = por %p178, %p179
      %p181 = scmp.ne.s32.totalorder %s172, %s173
      %p182 = scmp.eq.s32.totalorder %s22, 0
      %p183 = por %p181, %p182
      %p184 = scmp.ne.s32.totalorder %s172, %s173
      %p185 = scmp.eq.s32.totalorder %s23, 1
      %p186 = por %p184, %p185
      %p188 = scmp.ne.s32.totalorder %s173, %s187
      %p189 = scmp.eq.s32.totalorder %s23, 0
      %p190 = por %p188, %p189
      %s191 = ssub.s32 %s24, %s36
      %p192 = scmp.eq.s32.totalorder %s191, 0
      %s194 = sadd.s32 %s193, 1
      %s195 = scalar_select %p192, %s193, %s194
      %p198 = pneg %p192
      %p199 = scmp.eq.s32.totalorder %s17, 1
      %p200 = por %p198, %p199
      %p201 = scmp.ne.s32.totalorder %s193, %s196
      %p202 = scmp.eq.s32.totalorder %s17, 0
      %p203 = por %p201, %p202
      %p204 = scmp.ne.s32.totalorder %s193, %s196
      %p205 = scmp.eq.s32.totalorder %s22, 1
      %p206 = por %p204, %p205
      %p207 = scmp.ne.s32.totalorder %s196, %s197
      %p208 = scmp.eq.s32.totalorder %s22, 0
      %p209 = por %p207, %p208
      %p210 = scmp.ne.s32.totalorder %s196, %s197
      %p211 = scmp.eq.s32.totalorder %s23, 1
      %p212 = por %p210, %p211
      %p214 = scmp.ne.s32.totalorder %s197, %s213
      %p215 = scmp.eq.s32.totalorder %s23, 0
      %p216 = por %p214, %p215
      %p217 = scmp.le.s32.totalorder 1, %s17
      %p218 = scmp.lt.s32.totalorder %s17, 3
      %p219 = pnand %p217, %p218
      %p220 = pneg %p219
      // Predicated region
      $region9: #{stn3d_forward.2} parent=5 // pred_check
        _
      $region10: #{stn3d_forward.2} parent=5 // pred_check_branch
        %222 = sbr.rel (%p219) target = $region12
      $region11: #{stn3d_forward.2} parent=5 // pred_region
        %s223 = ssub.s32 %s17, 1
        // Predicated region
        $region13: #{stn3d_forward.2} parent=11 // pred_check
          %p224 = pneg %p78
        $region14: #{stn3d_forward.2} parent=11 // pred_check_branch
          %226 = sbr.rel (%p224) target = $region16
        $region15: #{stn3d_forward.2} parent=11 // pred_region
          %s228 = ssub.s32 256, 256
          %229 = vsyncadd [#allocation3], %s228
          %s230 = sshll.u32 [#allocation2], 4
          %s231 = int_to_ptr.vmem [resolvable:$true] %s230
          %236 = dma.hbm_to_vmem [thread:$0]  %s1, 256, %s231, [#allocation3], 128, 128, 8
        $region16: #{stn3d_forward.2} parent=11 // pred_fallthru
          _
        // Predicated region
        $region17: #{stn3d_forward.2} parent=11 // pred_check
          %p237 = pneg %p99
        $region18: #{stn3d_forward.2} parent=11 // pred_check_branch
          %239 = sbr.rel (%p237) target = $region20
        $region19: #{stn3d_forward.2} parent=11 // pred_region
          %s241 = ssub.s32 16, 16
          %242 = vsyncadd [#allocation5], %s241
          %s244 = sshll.u32 [#allocation4], 4
          %s245 = int_to_ptr.vmem [resolvable:$true] %s244
          %247 = dma.hbm_to_vmem [thread:$0]  %s2, 16, %s245, [#allocation5]
        $region20: #{stn3d_forward.2} parent=11 // pred_fallthru
          _
        // Predicated region
        $region21: #{stn3d_forward.2} parent=11 // pred_check
          %p248 = pneg %p120
        $region22: #{stn3d_forward.2} parent=11 // pred_check_branch
          %250 = sbr.rel (%p248) target = $region24
        $region23: #{stn3d_forward.2} parent=11 // pred_region
          %s252 = ssub.s32 512, 512
          %253 = vsyncadd [#allocation5], %s252
          %s254 = sshll.u32 [#allocation6], 4
          %s255 = int_to_ptr.vmem [resolvable:$true] %s254
          %260 = dma.hbm_to_vmem [thread:$0]  %s3, 512, %s255, [#allocation5], 64, 64, 4
        $region24: #{stn3d_forward.2} parent=11 // pred_fallthru
          _
        // Predicated region
        $region25: #{stn3d_forward.2} parent=11 // pred_check
          %p261 = pneg %p141
        $region26: #{stn3d_forward.2} parent=11 // pred_check_branch
          %263 = sbr.rel (%p261) target = $region28
        $region27: #{stn3d_forward.2} parent=11 // pred_region
          %s265 = ssub.s32 16, 16
          %266 = vsyncadd [#allocation8], %s265
          %s268 = sshll.u32 [#allocation7], 4
          %s269 = int_to_ptr.vmem [resolvable:$true] %s268
          %271 = dma.hbm_to_vmem [thread:$0]  %s4, 16, %s269, [#allocation8]
        $region28: #{stn3d_forward.2} parent=11 // pred_fallthru
          _
        // Predicated region
        $region29: #{stn3d_forward.2} parent=11 // pred_check
          %p272 = pneg %p162
        $region30: #{stn3d_forward.2} parent=11 // pred_check_branch
          %274 = sbr.rel (%p272) target = $region32
        $region31: #{stn3d_forward.2} parent=11 // pred_region
          %s276 = ssub.s32 8192, 8192
          %277 = vsyncadd [#allocation8], %s276
          %s278 = sshll.u32 [#allocation9], 4
          %s279 = int_to_ptr.vmem [resolvable:$true] %s278
          %284 = dma.hbm_to_vmem [thread:$0]  %s5, 8192, %s279, [#allocation8], 512, 512, 32
        $region32: #{stn3d_forward.2} parent=11 // pred_fallthru
          _
        // Predicated region
        $region33: #{stn3d_forward.2} parent=11 // pred_check
          %p285 = pneg %p183
        $region34: #{stn3d_forward.2} parent=11 // pred_check_branch
          %287 = sbr.rel (%p285) target = $region36
        $region35: #{stn3d_forward.2} parent=11 // pred_region
          %s289 = ssub.s32 128, 128
          %290 = vsyncadd [#allocation11], %s289
          %s292 = sshll.u32 [#allocation10], 4
          %s293 = int_to_ptr.vmem [resolvable:$true] %s292
          %295 = dma.hbm_to_vmem [thread:$0]  %s6, 128, %s293, [#allocation11]
        $region36: #{stn3d_forward.2} parent=11 // pred_fallthru
          _
      $region12: #{stn3d_forward.2} parent=5 // pred_fallthru
        _
      %p296 = scmp.lt.s32.totalorder %s17, 2
      // Predicated region
      $region37: #{stn3d_forward.2} parent=5 // pred_check
        %p297 = pneg %p296
      $region38: #{stn3d_forward.2} parent=5 // pred_check_branch
        %299 = sbr.rel (%p297) target = $region40
      $region39: #{stn3d_forward.2} parent=5 // pred_region
        // Predicated region
        $region41: #{stn3d_forward.2} parent=39 // pred_check
          %p300 = pneg %p51
        $region42: #{stn3d_forward.2} parent=39 // pred_check_branch
          %302 = sbr.rel (%p300) target = $region44
        $region43: #{stn3d_forward.2} parent=39 // pred_region
          %s303 = smul.u32 2, %s25
          %p304 = scmp.lt.s32.totalorder %s24, 1
          %s305 = scalar_select %p304, %s24, 1
          %p306 = scmp.lt.s32.totalorder %s303, 1
          %s307 = scalar_select %p306, %s303, 1
          %s308 = smul.addr %s305, 2
          %s309 = sadd.s32 %s307, %s308
          %s310 = smul.addr %s309, 8
          %s311 = scalar_lea.vmem %s0, %s310
          %s312 = smul.u32 2, %s25
        $region44: #{stn3d_forward.2} parent=39 // pred_fallthru
          _
      $region40: #{stn3d_forward.2} parent=5 // pred_fallthru
        _
      %p313 = scmp.le.s32.totalorder 1, %s17
      %p314 = scmp.lt.s32.totalorder %s17, 3
      %p315 = pnand %p313, %p314
      %p316 = pneg %p315
      // Predicated region
      $region45: #{stn3d_forward.2} parent=5 // pred_check
        _
      $region46: #{stn3d_forward.2} parent=5 // pred_check_branch
        %318 = sbr.rel (%p315) target = $region48
      $region47: #{stn3d_forward.2} parent=5 // pred_region
        %s319 = ssub.s32 %s17, 1
        // Predicated region
        $region49: #{stn3d_forward.2} parent=47 // pred_check
          %p320 = pneg %p78
        $region50: #{stn3d_forward.2} parent=47 // pred_check_branch
          %322 = sbr.rel (%p320) target = $region52
        $region51: #{stn3d_forward.2} parent=47 // pred_region
          %323 = dma.done [#allocation3], 256
        $region52: #{stn3d_forward.2} parent=47 // pred_fallthru
          _
        // Predicated region
        $region53: #{stn3d_forward.2} parent=47 // pred_check
          %p324 = pneg %p99
        $region54: #{stn3d_forward.2} parent=47 // pred_check_branch
          %326 = sbr.rel (%p324) target = $region56
        $region55: #{stn3d_forward.2} parent=47 // pred_region
          %327 = dma.done [#allocation5], 16
        $region56: #{stn3d_forward.2} parent=47 // pred_fallthru
          _
        // Predicated region
        $region57: #{stn3d_forward.2} parent=47 // pred_check
          %p328 = pneg %p120
        $region58: #{stn3d_forward.2} parent=47 // pred_check_branch
          %330 = sbr.rel (%p328) target = $region60
        $region59: #{stn3d_forward.2} parent=47 // pred_region
          %331 = dma.done [#allocation5], 512
        $region60: #{stn3d_forward.2} parent=47 // pred_fallthru
          _
        // Predicated region
        $region61: #{stn3d_forward.2} parent=47 // pred_check
          %p332 = pneg %p141
        $region62: #{stn3d_forward.2} parent=47 // pred_check_branch
          %334 = sbr.rel (%p332) target = $region64
        $region63: #{stn3d_forward.2} parent=47 // pred_region
          %335 = dma.done [#allocation8], 16
        $region64: #{stn3d_forward.2} parent=47 // pred_fallthru
          _
        // Predicated region
        $region65: #{stn3d_forward.2} parent=47 // pred_check
          %p336 = pneg %p162
        $region66: #{stn3d_forward.2} parent=47 // pred_check_branch
          %338 = sbr.rel (%p336) target = $region68
        $region67: #{stn3d_forward.2} parent=47 // pred_region
          %339 = dma.done [#allocation8], 8192
        $region68: #{stn3d_forward.2} parent=47 // pred_fallthru
          _
        // Predicated region
        $region69: #{stn3d_forward.2} parent=47 // pred_check
          %p340 = pneg %p183
        $region70: #{stn3d_forward.2} parent=47 // pred_check_branch
          %342 = sbr.rel (%p340) target = $region72
        $region71: #{stn3d_forward.2} parent=47 // pred_region
          %343 = dma.done [#allocation11], 128
        $region72: #{stn3d_forward.2} parent=47 // pred_fallthru
          _
        %s344 = smul.u32 2, %s27
        %p345 = scmp.lt.s32.totalorder %s26, 1
        %s346 = scalar_select %p345, %s26, 1
        %p347 = scmp.lt.s32.totalorder %s344, 1
        %s348 = scalar_select %p347, %s344, 1
        %s349 = smul.addr %s346, 2
        %s350 = sadd.s32 %s348, %s349
        %s351 = smul.addr %s350, 8
        %s352 = scalar_lea.vmem %s0, %s351
        %p353 = pneg %p57
        %p354 = pneg %p54
        %p355 = pneg %p78
        %p356 = pneg %p75
        %p357 = pneg %p99
        %p358 = pneg %p96
        %p359 = pneg %p120
        %p360 = pneg %p117
        %p361 = pneg %p141
        %p362 = pneg %p138
        %p363 = pneg %p162
        %p364 = pneg %p159
        %p365 = pneg %p183
        %p366 = pneg %p180
        %p367 = pneg %p209
        %p368 = pneg %p206
        %p369 = scmp.lt.s32.totalorder %s26, 1
        %s370 = scalar_select %p369, %s26, 1
        %s371 = smul.addr %s370, 8
        %s372 = scalar_lea.vmem %s7, %s371
        %s373 = smul.u32 2, %s27
        %p374 = scmp.lt.s32.totalorder %s26, 1
        %s375 = scalar_select %p374, %s26, 1
        %p376 = scmp.lt.s32.totalorder %s373, 1
        %s377 = scalar_select %p376, %s373, 1
        %s378 = smul.addr %s375, 2
        %s379 = sadd.s32 %s377, %s378
        %s380 = smul.addr %s379, 8
        %s381 = scalar_lea.vmem %s0, %s380
        %s382 = smul.u32 2, %s27
        %p383 = scmp.lt.s32.totalorder %s26, 1
        %s384 = scalar_select %p383, %s26, 1
        %s385 = smul.addr %s384, 8
        %s386 = scalar_lea.vmem %s7, %s385
        %p388 = scmp.eq.s32.totalorder %s27, 0
        // Predicated region
        $region73: #{stn3d_forward.2} parent=47 // pred_check
          %p389 = pneg %p388
        $region74: #{stn3d_forward.2} parent=47 // pred_check_branch
          %391 = sbr.rel (%p389) target = $region76
        $region75: #{stn3d_forward.2} parent=47 // pred_region
          %392 = vst [vmem:[%s386] sm:$0xff] -inf
        $region76: #{stn3d_forward.2} parent=47 // pred_fallthru
          _
        %v393 = vld [vmem:[%s381] sm:$0xff]
        %v394 = vld [vmem:[%s381 + $0x8] sm:$0xff]
        %v395 = vld [vmem:[#allocation2] sm:$0xff]
        %v396 = vld [vmem:[#allocation2 + $0x8] sm:$0x3]
        %v397 = vld [vmem:[#allocation4] sm:$0x1]
        %v399 = vlaneseq
        %v400 = vshrl.u32 %v399, 7
        %v401 = vsub.s32 0, %v400
        %v402 = vrot.slane %v397, %v401
        %vm404 = vcmask 80896
        %v406 = vsel %vm404, %v393, 0
        %v409 = vsel %vm404, %v394, 0
        %vm411 = vcmask 1041408
        %v413 = vsel %vm411, %v396, 0
        %415 = vmatprep.subr.mxu0 0.0
        %416 = vmatpush1.msra.mxu0 %v395
        %417 = vmatprep.subr.mxu0 0.0
        %418 = vmatpush1.msra.mxu0 %v413
        %419 = vmatprep.subr.mxu0 0.0
        %420 = vmatpush1.msra.mxu0 0.0
        %421 = vmatprep.subr.mxu0 0.0
        %422 = vmatpush1.msra.mxu0 0.0
        %423 = vmatprep.subr.mxu0 0.0
        %424 = vmatpush1.msra.mxu0 0.0
        %425 = vmatprep.subr.mxu0 0.0
        %426 = vmatpush1.msra.mxu0 0.0
        %427 = vmatprep.subr.mxu0 0.0
        %428 = vmatpush1.msra.mxu0 0.0
        %429 = vmatprep.subr.mxu0 0.0
        %430 = vmatpush1.msra.mxu0 0.0
        %431 = vmatprep.subr.mxu0 0.0
        %432 = vmatpush1.msra.mxu0 0.0
        %433 = vmatprep.subr.mxu0 0.0
        %434 = vmatpush1.msra.mxu0 0.0
        %435 = vmatprep.subr.mxu0 0.0
        %436 = vmatpush1.msra.mxu0 0.0
        %437 = vmatprep.subr.mxu0 0.0
        %438 = vmatpush1.msra.mxu0 0.0
        %439 = vmatprep.subr.mxu0 0.0
        %440 = vmatpush1.msra.mxu0 0.0
        %441 = vmatprep.subr.mxu0 0.0
        %442 = vmatpush1.msra.mxu0 0.0
        %443 = vmatprep.subr.mxu0 0.0
        %444 = vmatpush1.msra.mxu0 0.0
        %445 = vmatprep.subr.mxu0 0.0
        %446 = vmatpush1.msra.mxu0 0.0
        %447 = vmatprep.subr.mxu0 0.0
        %448 = vmatpush1.msra.mxu0 0.0
        %449 = vmatprep.subr.mxu0 0.0
        %450 = vmatpush1.msra.mxu0 0.0
        %451 = vmatprep.subr.mxu0 0.0
        %452 = vmatpush1.msra.mxu0 0.0
        %453 = vmatprep.subr.mxu0 0.0
        %454 = vmatpush1.msra.mxu0 0.0
        %455 = vmatprep.subr.mxu0 0.0
        %456 = vmatpush1.msra.mxu0 0.0
        %457 = vmatprep.subr.mxu0 0.0
        %458 = vmatpush1.msra.mxu0 0.0
        %459 = vmatprep.subr.mxu0 0.0
        %460 = vmatpush1.msra.mxu0 0.0
        %461 = vmatprep.subr.mxu0 0.0
        %462 = vmatpush1.msra.mxu0 0.0
        %463 = vmatprep.subr.mxu0 0.0
        %464 = vmatpush1.msra.mxu0 0.0
        %465 = vmatprep.subr.mxu0 0.0
        %466 = vmatpush1.msra.mxu0 0.0
        %467 = vmatprep.subr.mxu0 0.0
        %468 = vmatpush1.msra.mxu0 0.0
        %469 = vmatprep.subr.mxu0 0.0
        %470 = vmatpush1.msra.mxu0 0.0
        %471 = vmatprep.subr.mxu0 0.0
        %472 = vmatpush1.msra.mxu0 0.0
        %473 = vmatprep.subr.mxu0 0.0
        %474 = vmatpush1.msra.mxu0 0.0
        %475 = vmatprep.subr.mxu0 0.0
        %476 = vmatpush1.msra.mxu0 0.0
        %477 = vmatprep.subr.mxu0 0.0
        %478 = vmatpush1.msra.mxu0 0.0
        %479 = vmatprep.mubr.f32.mxu0 0.0
        %480 = vmatmul.mubr.f32.gmra.mrb[0].mxu0 %v406
        %v481 = vpop.f32.mrb[0].mxu0
        %v482 = vadd.f32 %v402, %v481
        %v483 = vpop.f32.mrb[0].mxu0
        %484 = vmatprep.mubr.f32.mxu0 0.0
        %485 = vmatmul.mubr.f32.gmra.mrb[0].mxu0 %v409
        %v486 = vpop.f32.mrb[0].mxu0
        %v487 = vadd.f32 %v402, %v486
        %v488 = vpop.f32.mrb[0].mxu0
        %489 = vdwg.mxu0
        %v490 = vmax.f32 %v482, 0.0
        %v491 = vmax.f32 %v487, 0.0
        %v492 = vpack.c.bf16 %v491, %v490
        %v493 = vld [vmem:[#allocation6] sm:$0xf]
        %v494 = vld [vmem:[#allocation6 + $0x4] sm:$0xf]
        %v495 = vld [vmem:[#allocation6 + $0x8] sm:$0xf]
        %v496 = vld [vmem:[#allocation6 + $0xc] sm:$0xf]
        %v497 = vld [vmem:[#allocation6 + $0x10] sm:$0xf]
        %v498 = vld [vmem:[#allocation6 + $0x14] sm:$0xf]
        %v499 = vld [vmem:[#allocation6 + $0x18] sm:$0xf]
        %v500 = vld [vmem:[#allocation6 + $0x1c] sm:$0xf]
        %v501 = vld [vmem:[#allocation7] sm:$0x1]
        %v503 = vlaneseq
        %v504 = vshrl.u32 %v503, 7
        %v505 = vsub.s32 0, %v504
        %v506 = vrot.slane %v501, %v505
        %v516 = vunpack.c.l.b16 %v493
        %v517 = vunpack.c.l.b16 %v494
        %v518 = vunpack.c.l.b16 %v495
        %v519 = vunpack.c.l.b16 %v496
        %v520 = vunpack.c.l.b16 %v497
        %v521 = vunpack.c.l.b16 %v498
        %v522 = vunpack.c.l.b16 %v499
        %v523 = vunpack.c.l.b16 %v500
        %v524 = vpack.c.b16 %v517, %v516
        %v525 = vpack.c.b16 %v519, %v518
        %v526 = vpack.c.b16 %v521, %v520
        %v527 = vpack.c.b16 %v523, %v522
        %vm532 = vcmask 523264
        %v534 = vsel %vm532, %v492, 0
        %536 = vmatprep.subr.bf16.mxu0 0
        %537 = vmatpush1.bf16.msra.mxu0 %v524
        %538 = vmatprep.subr.bf16.mxu0 0
        %539 = vmatpush1.bf16.msra.mxu0 %v525
        %540 = vmatprep.subr.bf16.mxu0 0
        %541 = vmatpush1.bf16.msra.mxu0 %v526
        %542 = vmatprep.subr.bf16.mxu0 0
        %543 = vmatpush1.bf16.msra.mxu0 %v527
        %544 = vmatprep.subr.bf16.mxu0 0
        %545 = vmatpush1.bf16.msra.mxu0 0
        %546 = vmatprep.subr.bf16.mxu0 0
        %547 = vmatpush1.bf16.msra.mxu0 0
        %548 = vmatprep.subr.bf16.mxu0 0
        %549 = vmatpush1.bf16.msra.mxu0 0
        %550 = vmatprep.subr.bf16.mxu0 0
        %551 = vmatpush1.bf16.msra.mxu0 0
        %552 = vmatprep.subr.bf16.mxu0 0
        %553 = vmatpush1.bf16.msra.mxu0 0
        %554 = vmatprep.subr.bf16.mxu0 0
        %555 = vmatpush1.bf16.msra.mxu0 0
        %556 = vmatprep.subr.bf16.mxu0 0
        %557 = vmatpush1.bf16.msra.mxu0 0
        %558 = vmatprep.subr.bf16.mxu0 0
        %559 = vmatpush1.bf16.msra.mxu0 0
        %560 = vmatprep.subr.bf16.mxu0 0
        %561 = vmatpush1.bf16.msra.mxu0 0
        %562 = vmatprep.subr.bf16.mxu0 0
        %563 = vmatpush1.bf16.msra.mxu0 0
        %564 = vmatprep.subr.bf16.mxu0 0
        %565 = vmatpush1.bf16.msra.mxu0 0
        %566 = vmatprep.subr.bf16.mxu0 0
        %567 = vmatpush1.bf16.msra.mxu0 0
        %568 = vmatprep.mubr.bf16.mxu0 0
        %569 = vmatmul.mubr.bf16.gmra.mrb[0].mxu0 %v534
        %v570 = vpop.f32.mrb[0].mxu0
        %v571 = vadd.f32 %v506, %v570
        %v572 = vpop.f32.mrb[0].mxu0
        %v573 = vpop.f32.mrb[0].mxu0
        %v574 = vadd.f32 %v506, %v573
        %v575 = vpop.f32.mrb[0].mxu0
        %576 = vdwg.mxu0
        %v577 = vmax.f32 %v571, 0.0
        %v578 = vmax.f32 %v574, 0.0
        %v579 = vpack.c.bf16 %v578, %v577
        %v580 = vld [vmem:[#allocation9] sm:$0xff]
        %v581 = vld [vmem:[#allocation9 + $0x8] sm:$0xff]
        %v582 = vld [vmem:[#allocation9 + $0x10] sm:$0xff]
        %v583 = vld [vmem:[#allocation9 + $0x18] sm:$0xff]
        %v584 = vld [vmem:[#allocation9 + $0x20] sm:$0xff]
        %v585 = vld [vmem:[#allocation9 + $0x28] sm:$0xff]
        %v586 = vld [vmem:[#allocation9 + $0x30] sm:$0xff]
        %v587 = vld [vmem:[#allocation9 + $0x38] sm:$0xff]
        %v588 = vld [vmem:[#allocation9 + $0x40] sm:$0xff]
        %v589 = vld [vmem:[#allocation9 + $0x48] sm:$0xff]
        %v590 = vld [vmem:[#allocation9 + $0x50] sm:$0xff]
        %v591 = vld [vmem:[#allocation9 + $0x58] sm:$0xff]
        %v592 = vld [vmem:[#allocation9 + $0x60] sm:$0xff]
        %v593 = vld [vmem:[#allocation9 + $0x68] sm:$0xff]
        %v594 = vld [vmem:[#allocation9 + $0x70] sm:$0xff]
        %v595 = vld [vmem:[#allocation9 + $0x78] sm:$0xff]
        %v596 = vld [vmem:[#allocation9 + $0x80] sm:$0xff]
        %v597 = vld [vmem:[#allocation9 + $0x88] sm:$0xff]
        %v598 = vld [vmem:[#allocation9 + $0x90] sm:$0xff]
        %v599 = vld [vmem:[#allocation9 + $0x98] sm:$0xff]
        %v600 = vld [vmem:[#allocation9 + $0xa0] sm:$0xff]
        %v601 = vld [vmem:[#allocation9 + $0xa8] sm:$0xff]
        %v602 = vld [vmem:[#allocation9 + $0xb0] sm:$0xff]
        %v603 = vld [vmem:[#allocation9 + $0xb8] sm:$0xff]
        %v604 = vld [vmem:[#allocation9 + $0xc0] sm:$0xff]
        %v605 = vld [vmem:[#allocation9 + $0xc8] sm:$0xff]
        %v606 = vld [vmem:[#allocation9 + $0xd0] sm:$0xff]
        %v607 = vld [vmem:[#allocation9 + $0xd8] sm:$0xff]
        %v608 = vld [vmem:[#allocation9 + $0xe0] sm:$0xff]
        %v609 = vld [vmem:[#allocation9 + $0xe8] sm:$0xff]
        %v610 = vld [vmem:[#allocation9 + $0xf0] sm:$0xff]
        %v611 = vld [vmem:[#allocation9 + $0xf8] sm:$0xff]
        %v612 = vld [vmem:[#allocation9 + $0x100] sm:$0xff]
        %v613 = vld [vmem:[#allocation9 + $0x108] sm:$0xff]
        %v614 = vld [vmem:[#allocation9 + $0x110] sm:$0xff]
        %v615 = vld [vmem:[#allocation9 + $0x118] sm:$0xff]
        %v616 = vld [vmem:[#allocation9 + $0x120] sm:$0xff]
        %v617 = vld [vmem:[#allocation9 + $0x128] sm:$0xff]
        %v618 = vld [vmem:[#allocation9 + $0x130] sm:$0xff]
        %v619 = vld [vmem:[#allocation9 + $0x138] sm:$0xff]
        %v620 = vld [vmem:[#allocation9 + $0x140] sm:$0xff]
        %v621 = vld [vmem:[#allocation9 + $0x148] sm:$0xff]
        %v622 = vld [vmem:[#allocation9 + $0x150] sm:$0xff]
        %v623 = vld [vmem:[#allocation9 + $0x158] sm:$0xff]
        %v624 = vld [vmem:[#allocation9 + $0x160] sm:$0xff]
        %v625 = vld [vmem:[#allocation9 + $0x168] sm:$0xff]
        %v626 = vld [vmem:[#allocation9 + $0x170] sm:$0xff]
        %v627 = vld [vmem:[#allocation9 + $0x178] sm:$0xff]
        %v628 = vld [vmem:[#allocation9 + $0x180] sm:$0xff]
        %v629 = vld [vmem:[#allocation9 + $0x188] sm:$0xff]
        %v630 = vld [vmem:[#allocation9 + $0x190] sm:$0xff]
        %v631 = vld [vmem:[#allocation9 + $0x198] sm:$0xff]
        %v632 = vld [vmem:[#allocation9 + $0x1a0] sm:$0xff]
        %v633 = vld [vmem:[#allocation9 + $0x1a8] sm:$0xff]
        %v634 = vld [vmem:[#allocation9 + $0x1b0] sm:$0xff]
        %v635 = vld [vmem:[#allocation9 + $0x1b8] sm:$0xff]
        %v636 = vld [vmem:[#allocation9 + $0x1c0] sm:$0xff]
        %v637 = vld [vmem:[#allocation9 + $0x1c8] sm:$0xff]
        %v638 = vld [vmem:[#allocation9 + $0x1d0] sm:$0xff]
        %v639 = vld [vmem:[#allocation9 + $0x1d8] sm:$0xff]
        %v640 = vld [vmem:[#allocation9 + $0x1e0] sm:$0xff]
        %v641 = vld [vmem:[#allocation9 + $0x1e8] sm:$0xff]
        %v642 = vld [vmem:[#allocation9 + $0x1f0] sm:$0xff]
        %v643 = vld [vmem:[#allocation9 + $0x1f8] sm:$0xff]
        %v644 = vld [vmem:[#allocation10] sm:$0xff]
        %v646 = vlaneseq
        %v647 = vshrl.u32 %v646, 7
        %v648 = vsub.s32 0, %v647
        %v649 = vrot.slane %v644, %v648
        %v650 = vlaneseq
        %v651 = vshrl.u32 %v650, 7
        %v652 = vsub.s32 1, %v651
        %v653 = vrot.slane %v644, %v652
        %v654 = vlaneseq
        %v655 = vshrl.u32 %v654, 7
        %v656 = vsub.s32 2, %v655
        %v657 = vrot.slane %v644, %v656
        %v658 = vlaneseq
        %v659 = vshrl.u32 %v658, 7
        %v660 = vsub.s32 3, %v659
        %v661 = vrot.slane %v644, %v660
        %v662 = vlaneseq
        %v663 = vshrl.u32 %v662, 7
        %v664 = vsub.s32 4, %v663
        %v665 = vrot.slane %v644, %v664
        %v666 = vlaneseq
        %v667 = vshrl.u32 %v666, 7
        %v668 = vsub.s32 5, %v667
        %v669 = vrot.slane %v644, %v668
        %v670 = vlaneseq
        %v671 = vshrl.u32 %v670, 7
        %v672 = vsub.s32 6, %v671
        %v673 = vrot.slane %v644, %v672
        %v674 = vlaneseq
        %v675 = vshrl.u32 %v674, 7
        %v676 = vsub.s32 7, %v675
        %v677 = vrot.slane %v644, %v676
        %v750 = vunpack.c.l.b16 %v580
        %v751 = vunpack.c.h.b16 %v580
        %v752 = vunpack.c.l.b16 %v581
        %v753 = vunpack.c.h.b16 %v581
        %v754 = vunpack.c.l.b16 %v582
        %v755 = vunpack.c.h.b16 %v582
        %v756 = vunpack.c.l.b16 %v583
        %v757 = vunpack.c.h.b16 %v583
        %v758 = vunpack.c.l.b16 %v584
        %v759 = vunpack.c.h.b16 %v584
        %v760 = vunpack.c.l.b16 %v585
        %v761 = vunpack.c.h.b16 %v585
        %v762 = vunpack.c.l.b16 %v586
        %v763 = vunpack.c.h.b16 %v586
        %v764 = vunpack.c.l.b16 %v587
        %v765 = vunpack.c.h.b16 %v587
        %v766 = vunpack.c.l.b16 %v588
        %v767 = vunpack.c.h.b16 %v588
        %v768 = vunpack.c.l.b16 %v589
        %v769 = vunpack.c.h.b16 %v589
        %v770 = vunpack.c.l.b16 %v590
        %v771 = vunpack.c.h.b16 %v590
        %v772 = vunpack.c.l.b16 %v591
        %v773 = vunpack.c.h.b16 %v591
        %v774 = vunpack.c.l.b16 %v592
        %v775 = vunpack.c.h.b16 %v592
        %v776 = vunpack.c.l.b16 %v593
        %v777 = vunpack.c.h.b16 %v593
        %v778 = vunpack.c.l.b16 %v594
        %v779 = vunpack.c.h.b16 %v594
        %v780 = vunpack.c.l.b16 %v595
        %v781 = vunpack.c.h.b16 %v595
        %v782 = vunpack.c.l.b16 %v596
        %v783 = vunpack.c.h.b16 %v596
        %v784 = vunpack.c.l.b16 %v597
        %v785 = vunpack.c.h.b16 %v597
        %v786 = vunpack.c.l.b16 %v598
        %v787 = vunpack.c.h.b16 %v598
        %v788 = vunpack.c.l.b16 %v599
        %v789 = vunpack.c.h.b16 %v599
        %v790 = vunpack.c.l.b16 %v600
        %v791 = vunpack.c.h.b16 %v600
        %v792 = vunpack.c.l.b16 %v601
        %v793 = vunpack.c.h.b16 %v601
        %v794 = vunpack.c.l.b16 %v602
        %v795 = vunpack.c.h.b16 %v602
        %v796 = vunpack.c.l.b16 %v603
        %v797 = vunpack.c.h.b16 %v603
        %v798 = vunpack.c.l.b16 %v604
        %v799 = vunpack.c.h.b16 %v604
        %v800 = vunpack.c.l.b16 %v605
        %v801 = vunpack.c.h.b16 %v605
        %v802 = vunpack.c.l.b16 %v606
        %v803 = vunpack.c.h.b16 %v606
        %v804 = vunpack.c.l.b16 %v607
        %v805 = vunpack.c.h.b16 %v607
        %v806 = vunpack.c.l.b16 %v608
        %v807 = vunpack.c.h.b16 %v608
        %v808 = vunpack.c.l.b16 %v609
        %v809 = vunpack.c.h.b16 %v609
        %v810 = vunpack.c.l.b16 %v610
        %v811 = vunpack.c.h.b16 %v610
        %v812 = vunpack.c.l.b16 %v611
        %v813 = vunpack.c.h.b16 %v611
        %v814 = vunpack.c.l.b16 %v612
        %v815 = vunpack.c.h.b16 %v612
        %v816 = vunpack.c.l.b16 %v613
        %v817 = vunpack.c.h.b16 %v613
        %v818 = vunpack.c.l.b16 %v614
        %v819 = vunpack.c.h.b16 %v614
        %v820 = vunpack.c.l.b16 %v615
        %v821 = vunpack.c.h.b16 %v615
        %v822 = vunpack.c.l.b16 %v616
        %v823 = vunpack.c.h.b16 %v616
        %v824 = vunpack.c.l.b16 %v617
        %v825 = vunpack.c.h.b16 %v617
        %v826 = vunpack.c.l.b16 %v618
        %v827 = vunpack.c.h.b16 %v618
        %v828 = vunpack.c.l.b16 %v619
        %v829 = vunpack.c.h.b16 %v619
        %v830 = vunpack.c.l.b16 %v620
        %v831 = vunpack.c.h.b16 %v620
        %v832 = vunpack.c.l.b16 %v621
        %v833 = vunpack.c.h.b16 %v621
        %v834 = vunpack.c.l.b16 %v622
        %v835 = vunpack.c.h.b16 %v622
        %v836 = vunpack.c.l.b16 %v623
        %v837 = vunpack.c.h.b16 %v623
        %v838 = vunpack.c.l.b16 %v624
        %v839 = vunpack.c.h.b16 %v624
        %v840 = vunpack.c.l.b16 %v625
        %v841 = vunpack.c.h.b16 %v625
        %v842 = vunpack.c.l.b16 %v626
        %v843 = vunpack.c.h.b16 %v626
        %v844 = vunpack.c.l.b16 %v627
        %v845 = vunpack.c.h.b16 %v627
        %v846 = vunpack.c.l.b16 %v628
        %v847 = vunpack.c.h.b16 %v628
        %v848 = vunpack.c.l.b16 %v629
        %v849 = vunpack.c.h.b16 %v629
        %v850 = vunpack.c.l.b16 %v630
        %v851 = vunpack.c.h.b16 %v630
        %v852 = vunpack.c.l.b16 %v631
        %v853 = vunpack.c.h.b16 %v631
        %v854 = vunpack.c.l.b16 %v632
        %v855 = vunpack.c.h.b16 %v632
        %v856 = vunpack.c.l.b16 %v633
        %v857 = vunpack.c.h.b16 %v633
        %v858 = vunpack.c.l.b16 %v634
        %v859 = vunpack.c.h.b16 %v634
        %v860 = vunpack.c.l.b16 %v635
        %v861 = vunpack.c.h.b16 %v635
        %v862 = vunpack.c.l.b16 %v636
        %v863 = vunpack.c.h.b16 %v636
        %v864 = vunpack.c.l.b16 %v637
        %v865 = vunpack.c.h.b16 %v637
        %v866 = vunpack.c.l.b16 %v638
        %v867 = vunpack.c.h.b16 %v638
        %v868 = vunpack.c.l.b16 %v639
        %v869 = vunpack.c.h.b16 %v639
        %v870 = vunpack.c.l.b16 %v640
        %v871 = vunpack.c.h.b16 %v640
        %v872 = vunpack.c.l.b16 %v641
        %v873 = vunpack.c.h.b16 %v641
        %v874 = vunpack.c.l.b16 %v642
        %v875 = vunpack.c.h.b16 %v642
        %v876 = vunpack.c.l.b16 %v643
        %v877 = vunpack.c.h.b16 %v643
        %v878 = vpack.c.b16 %v758, %v750
        %v879 = vpack.c.b16 %v759, %v751
        %v880 = vpack.c.b16 %v760, %v752
        %v881 = vpack.c.b16 %v761, %v753
        %v882 = vpack.c.b16 %v762, %v754
        %v883 = vpack.c.b16 %v763, %v755
        %v884 = vpack.c.b16 %v764, %v756
        %v885 = vpack.c.b16 %v765, %v757
        %v886 = vpack.c.b16 %v774, %v766
        %v887 = vpack.c.b16 %v775, %v767
        %v888 = vpack.c.b16 %v776, %v768
        %v889 = vpack.c.b16 %v777, %v769
        %v890 = vpack.c.b16 %v778, %v770
        %v891 = vpack.c.b16 %v779, %v771
        %v892 = vpack.c.b16 %v780, %v772
        %v893 = vpack.c.b16 %v781, %v773
        %v894 = vpack.c.b16 %v790, %v782
        %v895 = vpack.c.b16 %v791, %v783
        %v896 = vpack.c.b16 %v792, %v784
        %v897 = vpack.c.b16 %v793, %v785
        %v898 = vpack.c.b16 %v794, %v786
        %v899 = vpack.c.b16 %v795, %v787
        %v900 = vpack.c.b16 %v796, %v788
        %v901 = vpack.c.b16 %v797, %v789
        %v902 = vpack.c.b16 %v806, %v798
        %v903 = vpack.c.b16 %v807, %v799
        %v904 = vpack.c.b16 %v808, %v800
        %v905 = vpack.c.b16 %v809, %v801
        %v906 = vpack.c.b16 %v810, %v802
        %v907 = vpack.c.b16 %v811, %v803
        %v908 = vpack.c.b16 %v812, %v804
        %v909 = vpack.c.b16 %v813, %v805
        %v910 = vpack.c.b16 %v822, %v814
        %v911 = vpack.c.b16 %v823, %v815
        %v912 = vpack.c.b16 %v824, %v816
        %v913 = vpack.c.b16 %v825, %v817
        %v914 = vpack.c.b16 %v826, %v818
        %v915 = vpack.c.b16 %v827, %v819
        %v916 = vpack.c.b16 %v828, %v820
        %v917 = vpack.c.b16 %v829, %v821
        %v918 = vpack.c.b16 %v838, %v830
        %v919 = vpack.c.b16 %v839, %v831
        %v920 = vpack.c.b16 %v840, %v832
        %v921 = vpack.c.b16 %v841, %v833
        %v922 = vpack.c.b16 %v842, %v834
        %v923 = vpack.c.b16 %v843, %v835
        %v924 = vpack.c.b16 %v844, %v836
        %v925 = vpack.c.b16 %v845, %v837
        %v926 = vpack.c.b16 %v854, %v846
        %v927 = vpack.c.b16 %v855, %v847
        %v928 = vpack.c.b16 %v856, %v848
        %v929 = vpack.c.b16 %v857, %v849
        %v930 = vpack.c.b16 %v858, %v850
        %v931 = vpack.c.b16 %v859, %v851
        %v932 = vpack.c.b16 %v860, %v852
        %v933 = vpack.c.b16 %v861, %v853
        %v934 = vpack.c.b16 %v870, %v862
        %v935 = vpack.c.b16 %v871, %v863
        %v936 = vpack.c.b16 %v872, %v864
        %v937 = vpack.c.b16 %v873, %v865
        %v938 = vpack.c.b16 %v874, %v866
        %v939 = vpack.c.b16 %v875, %v867
        %v940 = vpack.c.b16 %v876, %v868
        %v941 = vpack.c.b16 %v877, %v869
        %1006 = vmatprep.subr.bf16.mxu0 %v879
        %1007 = vmatpush1.bf16.msra.mxu0 %v878
        %1008 = vmatprep.subr.bf16.mxu0 %v887
        %1009 = vmatpush1.bf16.msra.mxu0 %v886
        %1010 = vmatprep.subr.bf16.mxu0 %v895
        %1011 = vmatpush1.bf16.msra.mxu0 %v894
        %1012 = vmatprep.subr.bf16.mxu0 %v903
        %1013 = vmatpush1.bf16.msra.mxu0 %v902
        %1014 = vmatprep.subr.bf16.mxu0 %v911
        %1015 = vmatpush1.bf16.msra.mxu0 %v910
        %1016 = vmatprep.subr.bf16.mxu0 %v919
        %1017 = vmatpush1.bf16.msra.mxu0 %v918
        %1018 = vmatprep.subr.bf16.mxu0 %v927
        %1019 = vmatpush1.bf16.msra.mxu0 %v926
        %1020 = vmatprep.subr.bf16.mxu0 %v935
        %1021 = vmatpush1.bf16.msra.mxu0 %v934
        %1022 = vmatprep.subr.bf16.mxu0 0
        %1023 = vmatpush1.bf16.msra.mxu0 0
        %1024 = vmatprep.subr.bf16.mxu0 0
        %1025 = vmatpush1.bf16.msra.mxu0 0
        %1026 = vmatprep.subr.bf16.mxu0 0
        %1027 = vmatpush1.bf16.msra.mxu0 0
        %1028 = vmatprep.subr.bf16.mxu0 0
        %1029 = vmatpush1.bf16.msra.mxu0 0
        %1030 = vmatprep.subr.bf16.mxu0 0
        %1031 = vmatpush1.bf16.msra.mxu0 0
        %1032 = vmatprep.subr.bf16.mxu0 0
        %1033 = vmatpush1.bf16.msra.mxu0 0
        %1034 = vmatprep.subr.bf16.mxu0 0
        %1035 = vmatpush1.bf16.msra.mxu0 0
        %1036 = vmatprep.subr.bf16.mxu0 0
        %1037 = vmatpush1.bf16.msra.mxu0 0
        %1038 = vmatprep.mubr.bf16.mxu0 0
        %1039 = vmatmul.mubr.bf16.gmra.mrb[0].mxu0 %v579
        %v1040 = vpop.f32.mrb[0].mxu0
        %v1041 = vadd.f32 %v649, %v1040
        %v1042 = vpop.f32.mrb[0].mxu0
        %v1043 = vadd.f32 %v653, %v1042
        %v1044 = vpop.f32.mrb[0].mxu0
        %v1045 = vadd.f32 %v649, %v1044
        %v1046 = vpop.f32.mrb[0].mxu0
        %v1047 = vadd.f32 %v653, %v1046
        %1048 = vdwg.mxu0
        %1049 = vmatprep.subr.bf16.mxu0 %v881
        %1050 = vmatpush1.bf16.msra.mxu0 %v880
        %1051 = vmatprep.subr.bf16.mxu0 %v889
        %1052 = vmatpush1.bf16.msra.mxu0 %v888
        %1053 = vmatprep.subr.bf16.mxu0 %v897
        %1054 = vmatpush1.bf16.msra.mxu0 %v896
        %1055 = vmatprep.subr.bf16.mxu0 %v905
        %1056 = vmatpush1.bf16.msra.mxu0 %v904
        %1057 = vmatprep.subr.bf16.mxu0 %v913
        %1058 = vmatpush1.bf16.msra.mxu0 %v912
        %1059 = vmatprep.subr.bf16.mxu0 %v921
        %1060 = vmatpush1.bf16.msra.mxu0 %v920
        %1061 = vmatprep.subr.bf16.mxu0 %v929
        %1062 = vmatpush1.bf16.msra.mxu0 %v928
        %1063 = vmatprep.subr.bf16.mxu0 %v937
        %1064 = vmatpush1.bf16.msra.mxu0 %v936
        %1065 = vmatprep.subr.bf16.mxu0 0
        %1066 = vmatpush1.bf16.msra.mxu0 0
        %1067 = vmatprep.subr.bf16.mxu0 0
        %1068 = vmatpush1.bf16.msra.mxu0 0
        %1069 = vmatprep.subr.bf16.mxu0 0
        %1070 = vmatpush1.bf16.msra.mxu0 0
        %1071 = vmatprep.subr.bf16.mxu0 0
        %1072 = vmatpush1.bf16.msra.mxu0 0
        %1073 = vmatprep.subr.bf16.mxu0 0
        %1074 = vmatpush1.bf16.msra.mxu0 0
        %1075 = vmatprep.subr.bf16.mxu0 0
        %1076 = vmatpush1.bf16.msra.mxu0 0
        %1077 = vmatprep.subr.bf16.mxu0 0
        %1078 = vmatpush1.bf16.msra.mxu0 0
        %1079 = vmatprep.subr.bf16.mxu0 0
        %1080 = vmatpush1.bf16.msra.mxu0 0
        %1081 = vmatprep.mubr.bf16.mxu0 0
        %1082 = vmatmul.mubr.bf16.gmra.mrb[0].mxu0 %v579
        %v1083 = vpop.f32.mrb[0].mxu0
        %v1084 = vadd.f32 %v657, %v1083
        %v1085 = vpop.f32.mrb[0].mxu0
        %v1086 = vadd.f32 %v661, %v1085
        %v1087 = vpop.f32.mrb[0].mxu0
        %v1088 = vadd.f32 %v657, %v1087
        %v1089 = vpop.f32.mrb[0].mxu0
        %v1090 = vadd.f32 %v661, %v1089
        %1091 = vdwg.mxu0
        %1092 = vmatprep.subr.bf16.mxu0 %v883
        %1093 = vmatpush1.bf16.msra.mxu0 %v882
        %1094 = vmatprep.subr.bf16.mxu0 %v891
        %1095 = vmatpush1.bf16.msra.mxu0 %v890
        %1096 = vmatprep.subr.bf16.mxu0 %v899
        %1097 = vmatpush1.bf16.msra.mxu0 %v898
        %1098 = vmatprep.subr.bf16.mxu0 %v907
        %1099 = vmatpush1.bf16.msra.mxu0 %v906
        %1100 = vmatprep.subr.bf16.mxu0 %v915
        %1101 = vmatpush1.bf16.msra.mxu0 %v914
        %1102 = vmatprep.subr.bf16.mxu0 %v923
        %1103 = vmatpush1.bf16.msra.mxu0 %v922
        %1104 = vmatprep.subr.bf16.mxu0 %v931
        %1105 = vmatpush1.bf16.msra.mxu0 %v930
        %1106 = vmatprep.subr.bf16.mxu0 %v939
        %1107 = vmatpush1.bf16.msra.mxu0 %v938
        %1108 = vmatprep.subr.bf16.mxu0 0
        %1109 = vmatpush1.bf16.msra.mxu0 0
        %1110 = vmatprep.subr.bf16.mxu0 0
        %1111 = vmatpush1.bf16.msra.mxu0 0
        %1112 = vmatprep.subr.bf16.mxu0 0
        %1113 = vmatpush1.bf16.msra.mxu0 0
        %1114 = vmatprep.subr.bf16.mxu0 0
        %1115 = vmatpush1.bf16.msra.mxu0 0
        %1116 = vmatprep.subr.bf16.mxu0 0
        %1117 = vmatpush1.bf16.msra.mxu0 0
        %1118 = vmatprep.subr.bf16.mxu0 0
        %1119 = vmatpush1.bf16.msra.mxu0 0
        %1120 = vmatprep.subr.bf16.mxu0 0
        %1121 = vmatpush1.bf16.msra.mxu0 0
        %1122 = vmatprep.subr.bf16.mxu0 0
        %1123 = vmatpush1.bf16.msra.mxu0 0
        %1124 = vmatprep.mubr.bf16.mxu0 0
        %1125 = vmatmul.mubr.bf16.gmra.mrb[0].mxu0 %v579
        %v1126 = vpop.f32.mrb[0].mxu0
        %v1127 = vadd.f32 %v665, %v1126
        %v1128 = vpop.f32.mrb[0].mxu0
        %v1129 = vadd.f32 %v669, %v1128
        %v1130 = vpop.f32.mrb[0].mxu0
        %v1131 = vadd.f32 %v665, %v1130
        %v1132 = vpop.f32.mrb[0].mxu0
        %v1133 = vadd.f32 %v669, %v1132
        %1134 = vdwg.mxu0
        %1135 = vmatprep.subr.bf16.mxu0 %v885
        %1136 = vmatpush1.bf16.msra.mxu0 %v884
        %1137 = vmatprep.subr.bf16.mxu0 %v893
        %1138 = vmatpush1.bf16.msra.mxu0 %v892
        %1139 = vmatprep.subr.bf16.mxu0 %v901
        %1140 = vmatpush1.bf16.msra.mxu0 %v900
        %1141 = vmatprep.subr.bf16.mxu0 %v909
        %1142 = vmatpush1.bf16.msra.mxu0 %v908
        %1143 = vmatprep.subr.bf16.mxu0 %v917
        %1144 = vmatpush1.bf16.msra.mxu0 %v916
        %1145 = vmatprep.subr.bf16.mxu0 %v925
        %1146 = vmatpush1.bf16.msra.mxu0 %v924
        %1147 = vmatprep.subr.bf16.mxu0 %v933
        %1148 = vmatpush1.bf16.msra.mxu0 %v932
        %1149 = vmatprep.subr.bf16.mxu0 %v941
        %1150 = vmatpush1.bf16.msra.mxu0 %v940
        %1151 = vmatprep.subr.bf16.mxu0 0
        %1152 = vmatpush1.bf16.msra.mxu0 0
        %1153 = vmatprep.subr.bf16.mxu0 0
        %1154 = vmatpush1.bf16.msra.mxu0 0
        %1155 = vmatprep.subr.bf16.mxu0 0
        %1156 = vmatpush1.bf16.msra.mxu0 0
        %1157 = vmatprep.subr.bf16.mxu0 0
        %1158 = vmatpush1.bf16.msra.mxu0 0
        %1159 = vmatprep.subr.bf16.mxu0 0
        %1160 = vmatpush1.bf16.msra.mxu0 0
        %1161 = vmatprep.subr.bf16.mxu0 0
        %1162 = vmatpush1.bf16.msra.mxu0 0
        %1163 = vmatprep.subr.bf16.mxu0 0
        %1164 = vmatpush1.bf16.msra.mxu0 0
        %1165 = vmatprep.subr.bf16.mxu0 0
        %1166 = vmatpush1.bf16.msra.mxu0 0
        %1167 = vmatprep.mubr.bf16.mxu0 0
        %1168 = vmatmul.mubr.bf16.gmra.mrb[0].mxu0 %v579
        %v1169 = vpop.f32.mrb[0].mxu0
        %v1170 = vadd.f32 %v673, %v1169
        %v1171 = vpop.f32.mrb[0].mxu0
        %v1172 = vadd.f32 %v677, %v1171
        %v1173 = vpop.f32.mrb[0].mxu0
        %v1174 = vadd.f32 %v673, %v1173
        %v1175 = vpop.f32.mrb[0].mxu0
        %v1176 = vadd.f32 %v677, %v1175
        %1177 = vdwg.mxu0
        %v1178 = vmax.f32 %v1041, 0.0
        %v1179 = vmax.f32 %v1043, 0.0
        %v1180 = vmax.f32 %v1084, 0.0
        %v1181 = vmax.f32 %v1086, 0.0
        %v1182 = vmax.f32 %v1127, 0.0
        %v1183 = vmax.f32 %v1129, 0.0
        %v1184 = vmax.f32 %v1170, 0.0
        %v1185 = vmax.f32 %v1172, 0.0
        %v1186 = vmax.f32 %v1045, 0.0
        %v1187 = vmax.f32 %v1047, 0.0
        %v1188 = vmax.f32 %v1088, 0.0
        %v1189 = vmax.f32 %v1090, 0.0
        %v1190 = vmax.f32 %v1131, 0.0
        %v1191 = vmax.f32 %v1133, 0.0
        %v1192 = vmax.f32 %v1174, 0.0
        %v1193 = vmax.f32 %v1176, 0.0
        %v1194 = vld [vmem:[%s386] sm:$0xff]
        %v1195 = vmax.f32 %v1178, %v1186
        %v1196 = vrot.slane %v1195, 4
        %v1197 = vmax.f32 %v1195, %v1196
        %v1198 = vrot.slane %v1197, 2
        %v1199 = vmax.f32 %v1197, %v1198
        %v1200 = vrot.slane %v1199, 1
        %v1201 = vmax.f32 %v1199, %v1200
        %v1202 = vmax.f32 %v1179, %v1187
        %v1203 = vrot.slane %v1202, 4
        %v1204 = vmax.f32 %v1202, %v1203
        %v1205 = vrot.slane %v1204, 2
        %v1206 = vmax.f32 %v1204, %v1205
        %v1207 = vrot.slane %v1206, 1
        %v1208 = vmax.f32 %v1206, %v1207
        %v1209 = vmax.f32 %v1180, %v1188
        %v1210 = vrot.slane %v1209, 4
        %v1211 = vmax.f32 %v1209, %v1210
        %v1212 = vrot.slane %v1211, 2
        %v1213 = vmax.f32 %v1211, %v1212
        %v1214 = vrot.slane %v1213, 1
        %v1215 = vmax.f32 %v1213, %v1214
        %v1216 = vmax.f32 %v1181, %v1189
        %v1217 = vrot.slane %v1216, 4
        %v1218 = vmax.f32 %v1216, %v1217
        %v1219 = vrot.slane %v1218, 2
        %v1220 = vmax.f32 %v1218, %v1219
        %v1221 = vrot.slane %v1220, 1
        %v1222 = vmax.f32 %v1220, %v1221
        %v1223 = vmax.f32 %v1182, %v1190
        %v1224 = vrot.slane %v1223, 4
        %v1225 = vmax.f32 %v1223, %v1224
        %v1226 = vrot.slane %v1225, 2
        %v1227 = vmax.f32 %v1225, %v1226
        %v1228 = vrot.slane %v1227, 1
        %v1229 = vmax.f32 %v1227, %v1228
        %v1230 = vmax.f32 %v1183, %v1191
        %v1231 = vrot.slane %v1230, 4
        %v1232 = vmax.f32 %v1230, %v1231
        %v1233 = vrot.slane %v1232, 2
        %v1234 = vmax.f32 %v1232, %v1233
        %v1235 = vrot.slane %v1234, 1
        %v1236 = vmax.f32 %v1234, %v1235
        %v1237 = vmax.f32 %v1184, %v1192
        %v1238 = vrot.slane %v1237, 4
        %v1239 = vmax.f32 %v1237, %v1238
        %v1240 = vrot.slane %v1239, 2
        %v1241 = vmax.f32 %v1239, %v1240
        %v1242 = vrot.slane %v1241, 1
        %v1243 = vmax.f32 %v1241, %v1242
        %v1244 = vmax.f32 %v1185, %v1193
        %v1245 = vrot.slane %v1244, 4
        %v1246 = vmax.f32 %v1244, %v1245
        %v1247 = vrot.slane %v1246, 2
        %v1248 = vmax.f32 %v1246, %v1247
        %v1249 = vrot.slane %v1248, 1
        %v1250 = vmax.f32 %v1248, %v1249
        %v1259 = vcombine.low %v1201, %v1208
        %v1260 = vcombine.low %v1215, %v1222
        %v1261 = vcombine.low %v1229, %v1236
        %v1262 = vcombine.low %v1243, %v1250
        %v1264 = vunpack.c.l.s4 1966171168
        %v1265 = vunpack.c.0.s8 %v1264
        %v1266 = vlaneseq
        %v1267 = vshrl.u32 %v1266, 7
        %v1268 = vsub.s32 %v1265, %v1267
        %v1269 = vrot.slane %v1259, %v1268
        %v1271 = vunpack.c.l.s4 1966171168
        %v1272 = vunpack.c.0.s8 %v1271
        %v1273 = vlaneseq
        %v1274 = vshrl.u32 %v1273, 7
        %v1275 = vsub.s32 %v1272, %v1274
        %v1276 = vrot.slane %v1260, %v1275
        %v1278 = vunpack.c.l.s4 1966171168
        %v1279 = vunpack.c.0.s8 %v1278
        %v1280 = vlaneseq
        %v1281 = vshrl.u32 %v1280, 7
        %v1282 = vsub.s32 %v1279, %v1281
        %v1283 = vrot.slane %v1261, %v1282
        %v1285 = vunpack.c.l.s4 1966171168
        %v1286 = vunpack.c.0.s8 %v1285
        %v1287 = vlaneseq
        %v1288 = vshrl.u32 %v1287, 7
        %v1289 = vsub.s32 %v1286, %v1288
        %v1290 = vrot.slane %v1262, %v1289
        %v1291 = vcombine.low %v1269, %v1276
        %v1292 = vcombine.low %v1283, %v1290
        %v1294 = vunpack.c.l.s4 1966171168
        %v1295 = vunpack.c.0.s8 %v1294
        %v1296 = vlaneseq
        %v1297 = vshrl.u32 %v1296, 7
        %v1298 = vsub.s32 %v1295, %v1297
        %v1299 = vrot.slane %v1291, %v1298
        %v1301 = vunpack.c.l.s4 1966171168
        %v1302 = vunpack.c.0.s8 %v1301
        %v1303 = vlaneseq
        %v1304 = vshrl.u32 %v1303, 7
        %v1305 = vsub.s32 %v1302, %v1304
        %v1306 = vrot.slane %v1292, %v1305
        %v1307 = vcombine.low %v1299, %v1306
        %v1309 = vmax.f32 %v1194, %v1307
        %1310 = vst [vmem:[%s386] sm:$0xff] %v1309
        %p1311 = scmp.lt.s32.totalorder %s26, 1
        %s1312 = scalar_select %p1311, %s26, 1
        %s1313 = smul.addr %s1312, 8
        %s1314 = scalar_lea.vmem %s7, %s1313
        // Predicated region
        $region77: #{stn3d_forward.2} parent=47 // pred_check
          %p1315 = pneg %p206
        $region78: #{stn3d_forward.2} parent=47 // pred_check_branch
          %1317 = sbr.rel (%p1315) target = $region80
        $region79: #{stn3d_forward.2} parent=47 // pred_region
          _
        $region80: #{stn3d_forward.2} parent=47 // pred_fallthru
          _
      $region48: #{stn3d_forward.2} parent=5 // pred_fallthru
        _
      %p1318 = scmp.le.s32.totalorder 2, %s17
      // Predicated region
      $region81: #{stn3d_forward.2} parent=5 // pred_check
        %p1319 = pneg %p1318
      $region82: #{stn3d_forward.2} parent=5 // pred_check_branch
        %1321 = sbr.rel (%p1319) target = $region84
      $region83: #{stn3d_forward.2} parent=5 // pred_region
        %s1322 = ssub.s32 %s17, 2
        // Predicated region
        $region85: #{stn3d_forward.2} parent=83 // pred_check
          %p1323 = pneg %p212
        $region86: #{stn3d_forward.2} parent=83 // pred_check_branch
          %1325 = sbr.rel (%p1323) target = $region88
        $region87: #{stn3d_forward.2} parent=83 // pred_region
          %p1326 = scmp.lt.s32.totalorder %s28, 1
          %s1327 = scalar_select %p1326, %s28, 1
          %s1328 = smul.addr %s1327, 8
          %s1329 = scalar_lea.vmem %s7, %s1328
        $region88: #{stn3d_forward.2} parent=83 // pred_fallthru
          _
      $region84: #{stn3d_forward.2} parent=5 // pred_fallthru
        _
    $region6: #{stn3d_forward.2} parent=1 // loop_footer
      %s21 = sadd.s32 1, %s17
    $region7: #{stn3d_forward.2} parent=1 // loop_footer_branch
      %16 = sbr.rel target = $region3
    $region8: #{stn3d_forward.2} parent=1 // loop_exit
      _
    %1330 = vsyncpa [#allocation3], 1
    %s1331 = scalar_lea.sflag [#allocation3], 1
    %1332 = vsyncpa %s1331, 1
    %1333 = vsyncpa [#allocation5], 1
    %1334 = vsyncpa [#allocation8], 1
    %1335 = vsyncpa [#allocation11], 1

// kernel: stn3d_forward.3
$region0: #{stn3d_forward.3}
  #allocation0 [shape = 'u32[]', space=smem, size = 0x4, offset = 0x4, fixed_abs, tag = 'smem constant byte address 0x4 - core index']
  #allocation1 [shape = 'u32[144,128]{1,0:T(1,128)}', space=vmem, size = 0x12000, scoped, tag = 'internal scratch']
  %s0 = inlined_call_operand.vmem [shape: f32[2,1024], index: 0, kind: input, shape index: {}]
  %s1 = inlined_call_operand.hbm [shape: bf16[1024,512], index: 1, kind: input, shape index: {}]
  %s2 = inlined_call_operand.vmem [shape: f32[1,512], index: 2, kind: input, shape index: {}]
  %s3 = inlined_call_operand.vmem [shape: bf16[512,256], index: 3, kind: input, shape index: {}]
  %s4 = inlined_call_operand.vmem [shape: f32[1,256], index: 4, kind: input, shape index: {}]
  %s5 = inlined_call_operand.vmem [shape: bf16[256,128], index: 5, kind: input, shape index: {}]
  %s6 = inlined_call_operand.vmem [shape: f32[1,128], index: 6, kind: input, shape index: {}]
  %s7 = inlined_call_operand.vmem [shape: f32[2,128], index: 7, kind: output, shape index: {}]
  %s8 = sld [smem:[#allocation0]]
  $region42: #{stn3d_forward.3} parent=0
    _
  %s10 = ssub.s32 1, %s8
  %s11 = scalar_select 0, %s10, %s8
  $region1: #{stn3d_forward.3} parent=0
    #allocation2 [shape = 'u8[1048576]{0}', space=vmem, size = 0x100000, scoped, tag = 'input window, operand 1, single buffered']
    #allocation3 [shape = 's32[1]{0}', space=sflag, size = 0x4, scoped, tag = 'scoped memory for stn3d_forward.3']
    %12 = vsyncpa [#allocation3], 0
    // Predicated region
    $region2: #{stn3d_forward.3} parent=1 // pred_check
      _
    $region3: #{stn3d_forward.3} parent=1 // pred_check_branch
      %14 = sbr.rel (0) target = $region5
    $region4: #{stn3d_forward.3} parent=1 // pred_region
      _
    $region5: #{stn3d_forward.3} parent=1 // pred_fallthru
      _
    // Predicated region
    $region6: #{stn3d_forward.3} parent=1 // pred_check
      _
    $region7: #{stn3d_forward.3} parent=1 // pred_check_branch
      %16 = sbr.rel (0) target = $region9
    $region8: #{stn3d_forward.3} parent=1 // pred_region
      %s18 = ssub.s32 32768, 32768
      %19 = vsyncadd [#allocation3], %s18
      %s20 = sshll.u32 [#allocation2], 4
      %s21 = int_to_ptr.vmem [resolvable:$true] %s20
      %26 = dma.hbm_to_vmem [thread:$0]  %s1, 32768, %s21, [#allocation3], 256, 256, 16
    $region9: #{stn3d_forward.3} parent=1 // pred_fallthru
      _
    // Predicated region
    $region10: #{stn3d_forward.3} parent=1 // pred_check
      _
    $region11: #{stn3d_forward.3} parent=1 // pred_check_branch
      %28 = sbr.rel (0) target = $region13
    $region12: #{stn3d_forward.3} parent=1 // pred_region
      _
    $region13: #{stn3d_forward.3} parent=1 // pred_fallthru
      _
    // Predicated region
    $region14: #{stn3d_forward.3} parent=1 // pred_check
      _
    $region15: #{stn3d_forward.3} parent=1 // pred_check_branch
      %30 = sbr.rel (0) target = $region17
    $region16: #{stn3d_forward.3} parent=1 // pred_region
      _
    $region17: #{stn3d_forward.3} parent=1 // pred_fallthru
      _
    // Predicated region
    $region18: #{stn3d_forward.3} parent=1 // pred_check
      _
    $region19: #{stn3d_forward.3} parent=1 // pred_check_branch
      %32 = sbr.rel (0) target = $region21
    $region20: #{stn3d_forward.3} parent=1 // pred_region
      _
    $region21: #{stn3d_forward.3} parent=1 // pred_fallthru
      _
    // Predicated region
    $region22: #{stn3d_forward.3} parent=1 // pred_check
      _
    $region23: #{stn3d_forward.3} parent=1 // pred_check_branch
      %34 = sbr.rel (0) target = $region25
    $region24: #{stn3d_forward.3} parent=1 // pred_region
      _
    $region25: #{stn3d_forward.3} parent=1 // pred_fallthru
      _
    // Predicated region
    $region26: #{stn3d_forward.3} parent=1 // pred_check
      _
    $region27: #{stn3d_forward.3} parent=1 // pred_check_branch
      %36 = sbr.rel (0) target = $region29
    $region28: #{stn3d_forward.3} parent=1 // pred_region
      _
    $region29: #{stn3d_forward.3} parent=1 // pred_fallthru
      _
    // Predicated region
    $region30: #{stn3d_forward.3} parent=1 // pred_check
      _
    $region31: #{stn3d_forward.3} parent=1 // pred_check_branch
      %38 = sbr.rel (0) target = $region33
    $region32: #{stn3d_forward.3} parent=1 // pred_region
      %39 = dma.done [#allocation3], 32768
    $region33: #{stn3d_forward.3} parent=1 // pred_fallthru
      _
    %v40 = vld [vmem:[%s0] sm:$0xff]
    %v41 = vld [vmem:[%s0 + $0x8] sm:$0xff]
    %v42 = vld [vmem:[#allocation2] sm:$0xff]
    %v43 = vld [vmem:[#allocation2 + $0x8] sm:$0xff]
    %v44 = vld [vmem:[#allocation2 + $0x10] sm:$0xff]
    %v45 = vld [vmem:[#allocation2 + $0x18] sm:$0xff]
    %v46 = vld [vmem:[#allocation2 + $0x20] sm:$0xff]
    %v47 = vld [vmem:[#allocation2 + $0x28] sm:$0xff]
    %v48 = vld [vmem:[#allocation2 + $0x30] sm:$0xff]
    %v49 = vld [vmem:[#allocation2 + $0x38] sm:$0xff]
    %v50 = vld [vmem:[#allocation2 + $0x40] sm:$0xff]
    %v51 = vld [vmem:[#allocation2 + $0x48] sm:$0xff]
    %v52 = vld [vmem:[#allocation2 + $0x50] sm:$0xff]
    %v53 = vld [vmem:[#allocation2 + $0x58] sm:$0xff]
    %v54 = vld [vmem:[#allocation2 + $0x60] sm:$0xff]
    %v55 = vld [vmem:[#allocation2 + $0x68] sm:$0xff]
    %v56 = vld [vmem:[#allocation2 + $0x70] sm:$0xff]
    %v57 = vld [vmem:[#allocation2 + $0x78] sm:$0xff]
    %v58 = vld [vmem:[#allocation2 + $0x80] sm:$0xff]
    %v59 = vld [vmem:[#allocation2 + $0x88] sm:$0xff]
    %v60 = vld [vmem:[#allocation2 + $0x90] sm:$0xff]
    %v61 = vld [vmem:[#allocation2 + $0x98] sm:$0xff]
    %v62 = vld [vmem:[#allocation2 + $0xa0] sm:$0xff]
    %v63 = vld [vmem:[#allocation2 + $0xa8] sm:$0xff]
    %v64 = vld [vmem:[#allocation2 + $0xb0] sm:$0xff]
    %v65 = vld [vmem:[#allocation2 + $0xb8] sm:$0xff]
    %v66 = vld [vmem:[#allocation2 + $0xc0] sm:$0xff]
    %v67 = vld [vmem:[#allocation2 + $0xc8] sm:$0xff]
    %v68 = vld [vmem:[#allocation2 + $0xd0] sm:$0xff]
    %v69 = vld [vmem:[#allocation2 + $0xd8] sm:$0xff]
    %v70 = vld [vmem:[#allocation2 + $0xe0] sm:$0xff]
    %v71 = vld [vmem:[#allocation2 + $0xe8] sm:$0xff]
    %v72 = vld [vmem:[#allocation2 + $0xf0] sm:$0xff]
    %v73 = vld [vmem:[#allocation2 + $0xf8] sm:$0xff]
    %v74 = vld [vmem:[#allocation2 + $0x100] sm:$0xff]
    %v75 = vld [vmem:[#allocation2 + $0x108] sm:$0xff]
    %v76 = vld [vmem:[#allocation2 + $0x110] sm:$0xff]
    %v77 = vld [vmem:[#allocation2 + $0x118] sm:$0xff]
    %v78 = vld [vmem:[#allocation2 + $0x120] sm:$0xff]
    %v79 = vld [vmem:[#allocation2 + $0x128] sm:$0xff]
    %v80 = vld [vmem:[#allocation2 + $0x130] sm:$0xff]
    %v81 = vld [vmem:[#allocation2 + $0x138] sm:$0xff]
    %v82 = vld [vmem:[#allocation2 + $0x140] sm:$0xff]
    %v83 = vld [vmem:[#allocation2 + $0x148] sm:$0xff]
    %v84 = vld [vmem:[#allocation2 + $0x150] sm:$0xff]
    %v85 = vld [vmem:[#allocation2 + $0x158] sm:$0xff]
    %v86 = vld [vmem:[#allocation2 + $0x160] sm:$0xff]
    %v87 = vld [vmem:[#allocation2 + $0x168] sm:$0xff]
    %v88 = vld [vmem:[#allocation2 + $0x170] sm:$0xff]
    %v89 = vld [vmem:[#allocation2 + $0x178] sm:$0xff]
    %v90 = vld [vmem:[#allocation2 + $0x180] sm:$0xff]
    %v91 = vld [vmem:[#allocation2 + $0x188] sm:$0xff]
    %v92 = vld [vmem:[#allocation2 + $0x190] sm:$0xff]
    %v93 = vld [vmem:[#allocation2 + $0x198] sm:$0xff]
    %v94 = vld [vmem:[#allocation2 + $0x1a0] sm:$0xff]
    %v95 = vld [vmem:[#allocation2 + $0x1a8] sm:$0xff]
    %v96 = vld [vmem:[#allocation2 + $0x1b0] sm:$0xff]
    %v97 = vld [vmem:[#allocation2 + $0x1b8] sm:$0xff]
    %v98 = vld [vmem:[#allocation2 + $0x1c0] sm:$0xff]
    %v99 = vld [vmem:[#allocation2 + $0x1c8] sm:$0xff]
    %v100 = vld [vmem:[#allocation2 + $0x1d0] sm:$0xff]
    %v101 = vld [vmem:[#allocation2 + $0x1d8] sm:$0xff]
    %v102 = vld [vmem:[#allocation2 + $0x1e0] sm:$0xff]
    %v103 = vld [vmem:[#allocation2 + $0x1e8] sm:$0xff]
    %v104 = vld [vmem:[#allocation2 + $0x1f0] sm:$0xff]
    %v105 = vld [vmem:[#allocation2 + $0x1f8] sm:$0xff]
    %v106 = vld [vmem:[#allocation2 + $0x200] sm:$0xff]
    %v107 = vld [vmem:[#allocation2 + $0x208] sm:$0xff]
    %v108 = vld [vmem:[#allocation2 + $0x210] sm:$0xff]
    %v109 = vld [vmem:[#allocation2 + $0x218] sm:$0xff]
    %v110 = vld [vmem:[#allocation2 + $0x220] sm:$0xff]
    %v111 = vld [vmem:[#allocation2 + $0x228] sm:$0xff]
    %v112 = vld [vmem:[#allocation2 + $0x230] sm:$0xff]
    %v113 = vld [vmem:[#allocation2 + $0x238] sm:$0xff]
    %v114 = vld [vmem:[#allocation2 + $0x240] sm:$0xff]
    %v115 = vld [vmem:[#allocation2 + $0x248] sm:$0xff]
    %v116 = vld [vmem:[#allocation2 + $0x250] sm:$0xff]
    %v117 = vld [vmem:[#allocation2 + $0x258] sm:$0xff]
    %v118 = vld [vmem:[#allocation2 + $0x260] sm:$0xff]
    %v119 = vld [vmem:[#allocation2 + $0x268] sm:$0xff]
    %v120 = vld [vmem:[#allocation2 + $0x270] sm:$0xff]
    %v121 = vld [vmem:[#allocation2 + $0x278] sm:$0xff]
    %v122 = vld [vmem:[#allocation2 + $0x280] sm:$0xff]
    %v123 = vld [vmem:[#allocation2 + $0x288] sm:$0xff]
    %v124 = vld [vmem:[#allocation2 + $0x290] sm:$0xff]
    %v125 = vld [vmem:[#allocation2 + $0x298] sm:$0xff]
    %v126 = vld [vmem:[#allocation2 + $0x2a0] sm:$0xff]
    %v127 = vld [vmem:[#allocation2 + $0x2a8] sm:$0xff]
    %v128 = vld [vmem:[#allocation2 + $0x2b0] sm:$0xff]
    %v129 = vld [vmem:[#allocation2 + $0x2b8] sm:$0xff]
    %v130 = vld [vmem:[#allocation2 + $0x2c0] sm:$0xff]
    %v131 = vld [vmem:[#allocation2 + $0x2c8] sm:$0xff]
    %v132 = vld [vmem:[#allocation2 + $0x2d0] sm:$0xff]
    %v133 = vld [vmem:[#allocation2 + $0x2d8] sm:$0xff]
    %v134 = vld [vmem:[#allocation2 + $0x2e0] sm:$0xff]
    %v135 = vld [vmem:[#allocation2 + $0x2e8] sm:$0xff]
    %v136 = vld [vmem:[#allocation2 + $0x2f0] sm:$0xff]
    %v137 = vld [vmem:[#allocation2 + $0x2f8] sm:$0xff]
    %v138 = vld [vmem:[#allocation2 + $0x300] sm:$0xff]
    %v139 = vld [vmem:[#allocation2 + $0x308] sm:$0xff]
    %v140 = vld [vmem:[#allocation2 + $0x310] sm:$0xff]
    %v141 = vld [vmem:[#allocation2 + $0x318] sm:$0xff]
    %v142 = vld [vmem:[#allocation2 + $0x320] sm:$0xff]
    %v143 = vld [vmem:[#allocation2 + $0x328] sm:$0xff]
    %v144 = vld [vmem:[#allocation2 + $0x330] sm:$0xff]
    %v145 = vld [vmem:[#allocation2 + $0x338] sm:$0xff]
    %v146 = vld [vmem:[#allocation2 + $0x340] sm:$0xff]
    %v147 = vld [vmem:[#allocation2 + $0x348] sm:$0xff]
    %v148 = vld [vmem:[#allocation2 + $0x350] sm:$0xff]
    %v149 = vld [vmem:[#allocation2 + $0x358] sm:$0xff]
    %v150 = vld [vmem:[#allocation2 + $0x360] sm:$0xff]
    %v151 = vld [vmem:[#allocation2 + $0x368] sm:$0xff]
    %v152 = vld [vmem:[#allocation2 + $0x370] sm:$0xff]
    %v153 = vld [vmem:[#allocation2 + $0x378] sm:$0xff]
    %v154 = vld [vmem:[#allocation2 + $0x380] sm:$0xff]
    %v155 = vld [vmem:[#allocation2 + $0x388] sm:$0xff]
    %v156 = vld [vmem:[#allocation2 + $0x390] sm:$0xff]
    %v157 = vld [vmem:[#allocation2 + $0x398] sm:$0xff]
    %v158 = vld [vmem:[#allocation2 + $0x3a0] sm:$0xff]
    %v159 = vld [vmem:[#allocation2 + $0x3a8] sm:$0xff]
    %v160 = vld [vmem:[#allocation2 + $0x3b0] sm:$0xff]
    %v161 = vld [vmem:[#allocation2 + $0x3b8] sm:$0xff]
    %v162 = vld [vmem:[#allocation2 + $0x3c0] sm:$0xff]
    %v163 = vld [vmem:[#allocation2 + $0x3c8] sm:$0xff]
    %v164 = vld [vmem:[#allocation2 + $0x3d0] sm:$0xff]
    %v165 = vld [vmem:[#allocation2 + $0x3d8] sm:$0xff]
    %v166 = vld [vmem:[#allocation2 + $0x3e0] sm:$0xff]
    %v167 = vld [vmem:[#allocation2 + $0x3e8] sm:$0xff]
    %v168 = vld [vmem:[#allocation2 + $0x3f0] sm:$0xff]
    %v169 = vld [vmem:[#allocation2 + $0x3f8] sm:$0xff]
    %v170 = vld [vmem:[#allocation2 + $0x400] sm:$0xff]
    %v171 = vld [vmem:[#allocation2 + $0x408] sm:$0xff]
    %v172 = vld [vmem:[#allocation2 + $0x410] sm:$0xff]
    %v173 = vld [vmem:[#allocation2 + $0x418] sm:$0xff]
    %v174 = vld [vmem:[#allocation2 + $0x420] sm:$0xff]
    %v175 = vld [vmem:[#allocation2 + $0x428] sm:$0xff]
    %v176 = vld [vmem:[#allocation2 + $0x430] sm:$0xff]
    %v177 = vld [vmem:[#allocation2 + $0x438] sm:$0xff]
    %v178 = vld [vmem:[#allocation2 + $0x440] sm:$0xff]
    %v179 = vld [vmem:[#allocation2 + $0x448] sm:$0xff]
    %v180 = vld [vmem:[#allocation2 + $0x450] sm:$0xff]
    %v181 = vld [vmem:[#allocation2 + $0x458] sm:$0xff]
    %v182 = vld [vmem:[#allocation2 + $0x460] sm:$0xff]
    %v183 = vld [vmem:[#allocation2 + $0x468] sm:$0xff]
    %v184 = vld [vmem:[#allocation2 + $0x470] sm:$0xff]
    %v185 = vld [vmem:[#allocation2 + $0x478] sm:$0xff]
    %v186 = vld [vmem:[#allocation2 + $0x480] sm:$0xff]
    %v187 = vld [vmem:[#allocation2 + $0x488] sm:$0xff]
    %v188 = vld [vmem:[#allocation2 + $0x490] sm:$0xff]
    %v189 = vld [vmem:[#allocation2 + $0x498] sm:$0xff]
    %v190 = vld [vmem:[#allocation2 + $0x4a0] sm:$0xff]
    %v191 = vld [vmem:[#allocation2 + $0x4a8] sm:$0xff]
    %v192 = vld [vmem:[#allocation2 + $0x4b0] sm:$0xff]
    %v193 = vld [vmem:[#allocation2 + $0x4b8] sm:$0xff]
    %v194 = vld [vmem:[#allocation2 + $0x4c0] sm:$0xff]
    %v195 = vld [vmem:[#allocation2 + $0x4c8] sm:$0xff]
    %v196 = vld [vmem:[#allocation2 + $0x4d0] sm:$0xff]
    %v197 = vld [vmem:[#allocation2 + $0x4d8] sm:$0xff]
    %v198 = vld [vmem:[#allocation2 + $0x4e0] sm:$0xff]
    %v199 = vld [vmem:[#allocation2 + $0x4e8] sm:$0xff]
    %v200 = vld [vmem:[#allocation2 + $0x4f0] sm:$0xff]
    %v201 = vld [vmem:[#allocation2 + $0x4f8] sm:$0xff]
    %v202 = vld [vmem:[#allocation2 + $0x500] sm:$0xff]
    %v203 = vld [vmem:[#allocation2 + $0x508] sm:$0xff]
    %v204 = vld [vmem:[#allocation2 + $0x510] sm:$0xff]
    %v205 = vld [vmem:[#allocation2 + $0x518] sm:$0xff]
    %v206 = vld [vmem:[#allocation2 + $0x520] sm:$0xff]
    %v207 = vld [vmem:[#allocation2 + $0x528] sm:$0xff]
    %v208 = vld [vmem:[#allocation2 + $0x530] sm:$0xff]
    %v209 = vld [vmem:[#allocation2 + $0x538] sm:$0xff]
    %v210 = vld [vmem:[#allocation2 + $0x540] sm:$0xff]
    %v211 = vld [vmem:[#allocation2 + $0x548] sm:$0xff]
    %v212 = vld [vmem:[#allocation2 + $0x550] sm:$0xff]
    %v213 = vld [vmem:[#allocation2 + $0x558] sm:$0xff]
    %v214 = vld [vmem:[#allocation2 + $0x560] sm:$0xff]
    %v215 = vld [vmem:[#allocation2 + $0x568] sm:$0xff]
    %v216 = vld [vmem:[#allocation2 + $0x570] sm:$0xff]
    %v217 = vld [vmem:[#allocation2 + $0x578] sm:$0xff]
    %v218 = vld [vmem:[#allocation2 + $0x580] sm:$0xff]
    %v219 = vld [vmem:[#allocation2 + $0x588] sm:$0xff]
    %v220 = vld [vmem:[#allocation2 + $0x590] sm:$0xff]
    %v221 = vld [vmem:[#allocation2 + $0x598] sm:$0xff]
    %v222 = vld [vmem:[#allocation2 + $0x5a0] sm:$0xff]
    %v223 = vld [vmem:[#allocation2 + $0x5a8] sm:$0xff]
    %v224 = vld [vmem:[#allocation2 + $0x5b0] sm:$0xff]
    %v225 = vld [vmem:[#allocation2 + $0x5b8] sm:$0xff]
    %v226 = vld [vmem:[#allocation2 + $0x5c0] sm:$0xff]
    %v227 = vld [vmem:[#allocation2 + $0x5c8] sm:$0xff]
    %v228 = vld [vmem:[#allocation2 + $0x5d0] sm:$0xff]
    %v229 = vld [vmem:[#allocation2 + $0x5d8] sm:$0xff]
    %v230 = vld [vmem:[#allocation2 + $0x5e0] sm:$0xff]
    %v231 = vld [vmem:[#allocation2 + $0x5e8] sm:$0xff]
    %v232 = vld [vmem:[#allocation2 + $0x5f0] sm:$0xff]
    %v233 = vld [vmem:[#allocation2 + $0x5f8] sm:$0xff]
    %v234 = vld [vmem:[#allocation2 + $0x600] sm:$0xff]
    %v235 = vld [vmem:[#allocation2 + $0x608] sm:$0xff]
    %v236 = vld [vmem:[#allocation2 + $0x610] sm:$0xff]
    %v237 = vld [vmem:[#allocation2 + $0x618] sm:$0xff]
    %v238 = vld [vmem:[#allocation2 + $0x620] sm:$0xff]
    %v239 = vld [vmem:[#allocation2 + $0x628] sm:$0xff]
    %v240 = vld [vmem:[#allocation2 + $0x630] sm:$0xff]
    %v241 = vld [vmem:[#allocation2 + $0x638] sm:$0xff]
    %v242 = vld [vmem:[#allocation2 + $0x640] sm:$0xff]
    %v243 = vld [vmem:[#allocation2 + $0x648] sm:$0xff]
    %v244 = vld [vmem:[#allocation2 + $0x650] sm:$0xff]
    %v245 = vld [vmem:[#allocation2 + $0x658] sm:$0xff]
    %v246 = vld [vmem:[#allocation2 + $0x660] sm:$0xff]
    %v247 = vld [vmem:[#allocation2 + $0x668] sm:$0xff]
    %v248 = vld [vmem:[#allocation2 + $0x670] sm:$0xff]
    %v249 = vld [vmem:[#allocation2 + $0x678] sm:$0xff]
    %v250 = vld [vmem:[#allocation2 + $0x680] sm:$0xff]
    %v251 = vld [vmem:[#allocation2 + $0x688] sm:$0xff]
    %v252 = vld [vmem:[#allocation2 + $0x690] sm:$0xff]
    %v253 = vld [vmem:[#allocation2 + $0x698] sm:$0xff]
    %v254 = vld [vmem:[#allocation2 + $0x6a0] sm:$0xff]
    %v255 = vld [vmem:[#allocation2 + $0x6a8] sm:$0xff]
    %v256 = vld [vmem:[#allocation2 + $0x6b0] sm:$0xff]
    %v257 = vld [vmem:[#allocation2 + $0x6b8] sm:$0xff]
    %v258 = vld [vmem:[#allocation2 + $0x6c0] sm:$0xff]
    %v259 = vld [vmem:[#allocation2 + $0x6c8] sm:$0xff]
    %v260 = vld [vmem:[#allocation2 + $0x6d0] sm:$0xff]
    %v261 = vld [vmem:[#allocation2 + $0x6d8] sm:$0xff]
    %v262 = vld [vmem:[#allocation2 + $0x6e0] sm:$0xff]
    %v263 = vld [vmem:[#allocation2 + $0x6e8] sm:$0xff]
    %v264 = vld [vmem:[#allocation2 + $0x6f0] sm:$0xff]
    %v265 = vld [vmem:[#allocation2 + $0x6f8] sm:$0xff]
    %v266 = vld [vmem:[#allocation2 + $0x700] sm:$0xff]
    %v267 = vld [vmem:[#allocation2 + $0x708] sm:$0xff]
    %v268 = vld [vmem:[#allocation2 + $0x710] sm:$0xff]
    %v269 = vld [vmem:[#allocation2 + $0x718] sm:$0xff]
    %v270 = vld [vmem:[#allocation2 + $0x720] sm:$0xff]
    %v271 = vld [vmem:[#allocation2 + $0x728] sm:$0xff]
    %v272 = vld [vmem:[#allocation2 + $0x730] sm:$0xff]
    %v273 = vld [vmem:[#allocation2 + $0x738] sm:$0xff]
    %v274 = vld [vmem:[#allocation2 + $0x740] sm:$0xff]
    %v275 = vld [vmem:[#allocation2 + $0x748] sm:$0xff]
    %v276 = vld [vmem:[#allocation2 + $0x750] sm:$0xff]
    %v277 = vld [vmem:[#allocation2 + $0x758] sm:$0xff]
    %v278 = vld [vmem:[#allocation2 + $0x760] sm:$0xff]
    %v279 = vld [vmem:[#allocation2 + $0x768] sm:$0xff]
    %v280 = vld [vmem:[#allocation2 + $0x770] sm:$0xff]
    %v281 = vld [vmem:[#allocation2 + $0x778] sm:$0xff]
    %v282 = vld [vmem:[#allocation2 + $0x780] sm:$0xff]
    %v283 = vld [vmem:[#allocation2 + $0x788] sm:$0xff]
    %v284 = vld [vmem:[#allocation2 + $0x790] sm:$0xff]
    %v285 = vld [vmem:[#allocation2 + $0x798] sm:$0xff]
    %v286 = vld [vmem:[#allocation2 + $0x7a0] sm:$0xff]
    %v287 = vld [vmem:[#allocation2 + $0x7a8] sm:$0xff]
    %v288 = vld [vmem:[#allocation2 + $0x7b0] sm:$0xff]
    %v289 = vld [vmem:[#allocation2 + $0x7b8] sm:$0xff]
    %v290 = vld [vmem:[#allocation2 + $0x7c0] sm:$0xff]
    %v291 = vld [vmem:[#allocation2 + $0x7c8] sm:$0xff]
    %v292 = vld [vmem:[#allocation2 + $0x7d0] sm:$0xff]
    %v293 = vld [vmem:[#allocation2 + $0x7d8] sm:$0xff]
    %v294 = vld [vmem:[#allocation2 + $0x7e0] sm:$0xff]
    %v295 = vld [vmem:[#allocation2 + $0x7e8] sm:$0xff]
    %v296 = vld [vmem:[#allocation2 + $0x7f0] sm:$0xff]
    %v297 = vld [vmem:[#allocation2 + $0x7f8] sm:$0xff]
    %v298 = vunpack.c.l.bf16 %v42
    %v299 = vunpack.c.h.bf16 %v42
    %v300 = vunpack.c.l.bf16 %v43
    %v301 = vunpack.c.h.bf16 %v43
    %v302 = vunpack.c.l.bf16 %v44
    %v303 = vunpack.c.h.bf16 %v44
    %v304 = vunpack.c.l.bf16 %v45
    %v305 = vunpack.c.h.bf16 %v45
    %v306 = vunpack.c.l.bf16 %v46
    %v307 = vunpack.c.h.bf16 %v46
    %v308 = vunpack.c.l.bf16 %v47
    %v309 = vunpack.c.h.bf16 %v47
    %v310 = vunpack.c.l.bf16 %v48
    %v311 = vunpack.c.h.bf16 %v48
    %v312 = vunpack.c.l.bf16 %v49
    %v313 = vunpack.c.h.bf16 %v49
    %v314 = vunpack.c.l.bf16 %v50
    %v315 = vunpack.c.h.bf16 %v50
    %v316 = vunpack.c.l.bf16 %v51
    %v317 = vunpack.c.h.bf16 %v51
    %v318 = vunpack.c.l.bf16 %v52
    %v319 = vunpack.c.h.bf16 %v52
    %v320 = vunpack.c.l.bf16 %v53
    %v321 = vunpack.c.h.bf16 %v53
    %v322 = vunpack.c.l.bf16 %v54
    %v323 = vunpack.c.h.bf16 %v54
    %v324 = vunpack.c.l.bf16 %v55
    %v325 = vunpack.c.h.bf16 %v55
    %v326 = vunpack.c.l.bf16 %v56
    %v327 = vunpack.c.h.bf16 %v56
    %v328 = vunpack.c.l.bf16 %v57
    %v329 = vunpack.c.h.bf16 %v57
    %v330 = vunpack.c.l.bf16 %v58
    %v331 = vunpack.c.h.bf16 %v58
    %v332 = vunpack.c.l.bf16 %v59
    %v333 = vunpack.c.h.bf16 %v59
    %v334 = vunpack.c.l.bf16 %v60
    %v335 = vunpack.c.h.bf16 %v60
    %v336 = vunpack.c.l.bf16 %v61
    %v337 = vunpack.c.h.bf16 %v61
    %v338 = vunpack.c.l.bf16 %v62
    %v339 = vunpack.c.h.bf16 %v62
    %v340 = vunpack.c.l.bf16 %v63
    %v341 = vunpack.c.h.bf16 %v63
    %v342 = vunpack.c.l.bf16 %v64
    %v343 = vunpack.c.h.bf16 %v64
    %v344 = vunpack.c.l.bf16 %v65
    %v345 = vunpack.c.h.bf16 %v65
    %v346 = vunpack.c.l.bf16 %v66
    %v347 = vunpack.c.h.bf16 %v66
    %v348 = vunpack.c.l.bf16 %v67
    %v349 = vunpack.c.h.bf16 %v67
    %v350 = vunpack.c.l.bf16 %v68
    %v351 = vunpack.c.h.bf16 %v68
    %v352 = vunpack.c.l.bf16 %v69
    %v353 = vunpack.c.h.bf16 %v69
    %v354 = vunpack.c.l.bf16 %v70
    %v355 = vunpack.c.h.bf16 %v70
    %v356 = vunpack.c.l.bf16 %v71
    %v357 = vunpack.c.h.bf16 %v71
    %v358 = vunpack.c.l.bf16 %v72
    %v359 = vunpack.c.h.bf16 %v72
    %v360 = vunpack.c.l.bf16 %v73
    %v361 = vunpack.c.h.bf16 %v73
    %v362 = vunpack.c.l.bf16 %v74
    %v363 = vunpack.c.h.bf16 %v74
    %v364 = vunpack.c.l.bf16 %v75
    %v365 = vunpack.c.h.bf16 %v75
    %v366 = vunpack.c.l.bf16 %v76
    %v367 = vunpack.c.h.bf16 %v76
    %v368 = vunpack.c.l.bf16 %v77
    %v369 = vunpack.c.h.bf16 %v77
    %v370 = vunpack.c.l.bf16 %v78
    %v371 = vunpack.c.h.bf16 %v78
    %v372 = vunpack.c.l.bf16 %v79
    %v373 = vunpack.c.h.bf16 %v79
    %v374 = vunpack.c.l.bf16 %v80
    %v375 = vunpack.c.h.bf16 %v80
    %v376 = vunpack.c.l.bf16 %v81
    %v377 = vunpack.c.h.bf16 %v81
    %v378 = vunpack.c.l.bf16 %v82
    %v379 = vunpack.c.h.bf16 %v82
    %v380 = vunpack.c.l.bf16 %v83
    %v381 = vunpack.c.h.bf16 %v83
    %v382 = vunpack.c.l.bf16 %v84
    %v383 = vunpack.c.h.bf16 %v84
    %v384 = vunpack.c.l.bf16 %v85
    %v385 = vunpack.c.h.bf16 %v85
    %v386 = vunpack.c.l.bf16 %v86
    %v387 = vunpack.c.h.bf16 %v86
    %v388 = vunpack.c.l.bf16 %v87
    %v389 = vunpack.c.h.bf16 %v87
    %v390 = vunpack.c.l.bf16 %v88
    %v391 = vunpack.c.h.bf16 %v88
    %v392 = vunpack.c.l.bf16 %v89
    %v393 = vunpack.c.h.bf16 %v89
    %v394 = vunpack.c.l.bf16 %v90
    %v395 = vunpack.c.h.bf16 %v90
    %v396 = vunpack.c.l.bf16 %v91
    %v397 = vunpack.c.h.bf16 %v91
    %v398 = vunpack.c.l.bf16 %v92
    %v399 = vunpack.c.h.bf16 %v92
    %v400 = vunpack.c.l.bf16 %v93
    %v401 = vunpack.c.h.bf16 %v93
    %v402 = vunpack.c.l.bf16 %v94
    %v403 = vunpack.c.h.bf16 %v94
    %v404 = vunpack.c.l.bf16 %v95
    %v405 = vunpack.c.h.bf16 %v95
    %v406 = vunpack.c.l.bf16 %v96
    %v407 = vunpack.c.h.bf16 %v96
    %v408 = vunpack.c.l.bf16 %v97
    %v409 = vunpack.c.h.bf16 %v97
    %v410 = vunpack.c.l.bf16 %v98
    %v411 = vunpack.c.h.bf16 %v98
    %v412 = vunpack.c.l.bf16 %v99
    %v413 = vunpack.c.h.bf16 %v99
    %v414 = vunpack.c.l.bf16 %v100
    %v415 = vunpack.c.h.bf16 %v100
    %v416 = vunpack.c.l.bf16 %v101
    %v417 = vunpack.c.h.bf16 %v101
    %v418 = vunpack.c.l.bf16 %v102
    %v419 = vunpack.c.h.bf16 %v102
    %v420 = vunpack.c.l.bf16 %v103
    %v421 = vunpack.c.h.bf16 %v103
    %v422 = vunpack.c.l.bf16 %v104
    %v423 = vunpack.c.h.bf16 %v104
    %v424 = vunpack.c.l.bf16 %v105
    %v425 = vunpack.c.h.bf16 %v105
    %v426 = vunpack.c.l.bf16 %v106
    %v427 = vunpack.c.h.bf16 %v106
    %v428 = vunpack.c.l.bf16 %v107
    %v429 = vunpack.c.h.bf16 %v107
    %v430 = vunpack.c.l.bf16 %v108
    %v431 = vunpack.c.h.bf16 %v108
    %v432 = vunpack.c.l.bf16 %v109
    %v433 = vunpack.c.h.bf16 %v109
    %v434 = vunpack.c.l.bf16 %v110
    %v435 = vunpack.c.h.bf16 %v110
    %v436 = vunpack.c.l.bf16 %v111
    %v437 = vunpack.c.h.bf16 %v111
    %v438 = vunpack.c.l.bf16 %v112
    %v439 = vunpack.c.h.bf16 %v112
    %v440 = vunpack.c.l.bf16 %v113
    %v441 = vunpack.c.h.bf16 %v113
    %v442 = vunpack.c.l.bf16 %v114
    %v443 = vunpack.c.h.bf16 %v114
    %v444 = vunpack.c.l.bf16 %v115
    %v445 = vunpack.c.h.bf16 %v115
    %v446 = vunpack.c.l.bf16 %v116
    %v447 = vunpack.c.h.bf16 %v116
    %v448 = vunpack.c.l.bf16 %v117
    %v449 = vunpack.c.h.bf16 %v117
    %v450 = vunpack.c.l.bf16 %v118
    %v451 = vunpack.c.h.bf16 %v118
    %v452 = vunpack.c.l.bf16 %v119
    %v453 = vunpack.c.h.bf16 %v119
    %v454 = vunpack.c.l.bf16 %v120
    %v455 = vunpack.c.h.bf16 %v120
    %v456 = vunpack.c.l.bf16 %v121
    %v457 = vunpack.c.h.bf16 %v121
    %v458 = vunpack.c.l.bf16 %v122
    %v459 = vunpack.c.h.bf16 %v122
    %v460 = vunpack.c.l.bf16 %v123
    %v461 = vunpack.c.h.bf16 %v123
    %v462 = vunpack.c.l.bf16 %v124
    %v463 = vunpack.c.h.bf16 %v124
    %v464 = vunpack.c.l.bf16 %v125
    %v465 = vunpack.c.h.bf16 %v125
    %v466 = vunpack.c.l.bf16 %v126
    %v467 = vunpack.c.h.bf16 %v126
    %v468 = vunpack.c.l.bf16 %v127
    %v469 = vunpack.c.h.bf16 %v127
    %v470 = vunpack.c.l.bf16 %v128
    %v471 = vunpack.c.h.bf16 %v128
    %v472 = vunpack.c.l.bf16 %v129
    %v473 = vunpack.c.h.bf16 %v129
    %v474 = vunpack.c.l.bf16 %v130
    %v475 = vunpack.c.h.bf16 %v130
    %v476 = vunpack.c.l.bf16 %v131
    %v477 = vunpack.c.h.bf16 %v131
    %v478 = vunpack.c.l.bf16 %v132
    %v479 = vunpack.c.h.bf16 %v132
    %v480 = vunpack.c.l.bf16 %v133
    %v481 = vunpack.c.h.bf16 %v133
    %v482 = vunpack.c.l.bf16 %v134
    %v483 = vunpack.c.h.bf16 %v134
    %v484 = vunpack.c.l.bf16 %v135
    %v485 = vunpack.c.h.bf16 %v135
    %v486 = vunpack.c.l.bf16 %v136
    %v487 = vunpack.c.h.bf16 %v136
    %v488 = vunpack.c.l.bf16 %v137
    %v489 = vunpack.c.h.bf16 %v137
    %v490 = vunpack.c.l.bf16 %v138
    %v491 = vunpack.c.h.bf16 %v138
    %v492 = vunpack.c.l.bf16 %v139
    %v493 = vunpack.c.h.bf16 %v139
    %v494 = vunpack.c.l.bf16 %v140
    %v495 = vunpack.c.h.bf16 %v140
    %v496 = vunpack.c.l.bf16 %v141
    %v497 = vunpack.c.h.bf16 %v141
    %v498 = vunpack.c.l.bf16 %v142
    %v499 = vunpack.c.h.bf16 %v142
    %v500 = vunpack.c.l.bf16 %v143
    %v501 = vunpack.c.h.bf16 %v143
    %v502 = vunpack.c.l.bf16 %v144
    %v503 = vunpack.c.h.bf16 %v144
    %v504 = vunpack.c.l.bf16 %v145
    %v505 = vunpack.c.h.bf16 %v145
    %v506 = vunpack.c.l.bf16 %v146
    %v507 = vunpack.c.h.bf16 %v146
    %v508 = vunpack.c.l.bf16 %v147
    %v509 = vunpack.c.h.bf16 %v147
    %v510 = vunpack.c.l.bf16 %v148
    %v511 = vunpack.c.h.bf16 %v148
    %v512 = vunpack.c.l.bf16 %v149
    %v513 = vunpack.c.h.bf16 %v149
    %v514 = vunpack.c.l.bf16 %v150
    %v515 = vunpack.c.h.bf16 %v150
    %v516 = vunpack.c.l.bf16 %v151
    %v517 = vunpack.c.h.bf16 %v151
    %v518 = vunpack.c.l.bf16 %v152
    %v519 = vunpack.c.h.bf16 %v152
    %v520 = vunpack.c.l.bf16 %v153
    %v521 = vunpack.c.h.bf16 %v153
    %v522 = vunpack.c.l.bf16 %v154
    %v523 = vunpack.c.h.bf16 %v154
    %v524 = vunpack.c.l.bf16 %v155
    %v525 = vunpack.c.h.bf16 %v155
    %v526 = vunpack.c.l.bf16 %v156
    %v527 = vunpack.c.h.bf16 %v156
    %v528 = vunpack.c.l.bf16 %v157
    %v529 = vunpack.c.h.bf16 %v157
    %v530 = vunpack.c.l.bf16 %v158
    %v531 = vunpack.c.h.bf16 %v158
    %v532 = vunpack.c.l.bf16 %v159
    %v533 = vunpack.c.h.bf16 %v159
    %v534 = vunpack.c.l.bf16 %v160
    %v535 = vunpack.c.h.bf16 %v160
    %v536 = vunpack.c.l.bf16 %v161
    %v537 = vunpack.c.h.bf16 %v161
    %v538 = vunpack.c.l.bf16 %v162
    %v539 = vunpack.c.h.bf16 %v162
    %v540 = vunpack.c.l.bf16 %v163
    %v541 = vunpack.c.h.bf16 %v163
    %v542 = vunpack.c.l.bf16 %v164
    %v543 = vunpack.c.h.bf16 %v164
    %v544 = vunpack.c.l.bf16 %v165
    %v545 = vunpack.c.h.bf16 %v165
    %v546 = vunpack.c.l.bf16 %v166
    %v547 = vunpack.c.h.bf16 %v166
    %v548 = vunpack.c.l.bf16 %v167
    %v549 = vunpack.c.h.bf16 %v167
    %v550 = vunpack.c.l.bf16 %v168
    %v551 = vunpack.c.h.bf16 %v168
    %v552 = vunpack.c.l.bf16 %v169
    %v553 = vunpack.c.h.bf16 %v169
    %v554 = vunpack.c.l.bf16 %v170
    %v555 = vunpack.c.h.bf16 %v170
    %v556 = vunpack.c.l.bf16 %v171
    %v557 = vunpack.c.h.bf16 %v171
    %v558 = vunpack.c.l.bf16 %v172
    %v559 = vunpack.c.h.bf16 %v172
    %v560 = vunpack.c.l.bf16 %v173
    %v561 = vunpack.c.h.bf16 %v173
    %v562 = vunpack.c.l.bf16 %v174
    %v563 = vunpack.c.h.bf16 %v174
    %v564 = vunpack.c.l.bf16 %v175
    %v565 = vunpack.c.h.bf16 %v175
    %v566 = vunpack.c.l.bf16 %v176
    %v567 = vunpack.c.h.bf16 %v176
    %v568 = vunpack.c.l.bf16 %v177
    %v569 = vunpack.c.h.bf16 %v177
    %v570 = vunpack.c.l.bf16 %v178
    %v571 = vunpack.c.h.bf16 %v178
    %v572 = vunpack.c.l.bf16 %v179
    %v573 = vunpack.c.h.bf16 %v179
    %v574 = vunpack.c.l.bf16 %v180
    %v575 = vunpack.c.h.bf16 %v180
    %v576 = vunpack.c.l.bf16 %v181
    %v577 = vunpack.c.h.bf16 %v181
    %v578 = vunpack.c.l.bf16 %v182
    %v579 = vunpack.c.h.bf16 %v182
    %v580 = vunpack.c.l.bf16 %v183
    %v581 = vunpack.c.h.bf16 %v183
    %v582 = vunpack.c.l.bf16 %v184
    %v583 = vunpack.c.h.bf16 %v184
    %v584 = vunpack.c.l.bf16 %v185
    %v585 = vunpack.c.h.bf16 %v185
    %v586 = vunpack.c.l.bf16 %v186
    %v587 = vunpack.c.h.bf16 %v186
    %v588 = vunpack.c.l.bf16 %v187
    %v589 = vunpack.c.h.bf16 %v187
    %v590 = vunpack.c.l.bf16 %v188
    %v591 = vunpack.c.h.bf16 %v188
    %v592 = vunpack.c.l.bf16 %v189
    %v593 = vunpack.c.h.bf16 %v189
    %v594 = vunpack.c.l.bf16 %v190
    %v595 = vunpack.c.h.bf16 %v190
    %v596 = vunpack.c.l.bf16 %v191
    %v597 = vunpack.c.h.bf16 %v191
    %v598 = vunpack.c.l.bf16 %v192
    %v599 = vunpack.c.h.bf16 %v192
    %v600 = vunpack.c.l.bf16 %v193
    %v601 = vunpack.c.h.bf16 %v193
    %v602 = vunpack.c.l.bf16 %v194
    %v603 = vunpack.c.h.bf16 %v194
    %v604 = vunpack.c.l.bf16 %v195
    %v605 = vunpack.c.h.bf16 %v195
    %v606 = vunpack.c.l.bf16 %v196
    %v607 = vunpack.c.h.bf16 %v196
    %v608 = vunpack.c.l.bf16 %v197
    %v609 = vunpack.c.h.bf16 %v197
    %v610 = vunpack.c.l.bf16 %v198
    %v611 = vunpack.c.h.bf16 %v198
    %v612 = vunpack.c.l.bf16 %v199
    %v613 = vunpack.c.h.bf16 %v199
    %v614 = vunpack.c.l.bf16 %v200
    %v615 = vunpack.c.h.bf16 %v200
    %v616 = vunpack.c.l.bf16 %v201
    %v617 = vunpack.c.h.bf16 %v201
    %v618 = vunpack.c.l.bf16 %v202
    %v619 = vunpack.c.h.bf16 %v202
    %v620 = vunpack.c.l.bf16 %v203
    %v621 = vunpack.c.h.bf16 %v203
    %v622 = vunpack.c.l.bf16 %v204
    %v623 = vunpack.c.h.bf16 %v204
    %v624 = vunpack.c.l.bf16 %v205
    %v625 = vunpack.c.h.bf16 %v205
    %v626 = vunpack.c.l.bf16 %v206
    %v627 = vunpack.c.h.bf16 %v206
    %v628 = vunpack.c.l.bf16 %v207
    %v629 = vunpack.c.h.bf16 %v207
    %v630 = vunpack.c.l.bf16 %v208
    %v631 = vunpack.c.h.bf16 %v208
    %v632 = vunpack.c.l.bf16 %v209
    %v633 = vunpack.c.h.bf16 %v209
    %v634 = vunpack.c.l.bf16 %v210
    %v635 = vunpack.c.h.bf16 %v210
    %v636 = vunpack.c.l.bf16 %v211
    %v637 = vunpack.c.h.bf16 %v211
    %v638 = vunpack.c.l.bf16 %v212
    %v639 = vunpack.c.h.bf16 %v212
    %v640 = vunpack.c.l.bf16 %v213
    %v641 = vunpack.c.h.bf16 %v213
    %v642 = vunpack.c.l.bf16 %v214
    %v643 = vunpack.c.h.bf16 %v214
    %v644 = vunpack.c.l.bf16 %v215
    %v645 = vunpack.c.h.bf16 %v215
    %v646 = vunpack.c.l.bf16 %v216
    %v647 = vunpack.c.h.bf16 %v216
    %v648 = vunpack.c.l.bf16 %v217
    %v649 = vunpack.c.h.bf16 %v217
    %v650 = vunpack.c.l.bf16 %v218
    %v651 = vunpack.c.h.bf16 %v218
    %v652 = vunpack.c.l.bf16 %v219
    %v653 = vunpack.c.h.bf16 %v219
    %v654 = vunpack.c.l.bf16 %v220
    %v655 = vunpack.c.h.bf16 %v220
    %v656 = vunpack.c.l.bf16 %v221
    %v657 = vunpack.c.h.bf16 %v221
    %v658 = vunpack.c.l.bf16 %v222
    %v659 = vunpack.c.h.bf16 %v222
    %v660 = vunpack.c.l.bf16 %v223
    %v661 = vunpack.c.h.bf16 %v223
    %v662 = vunpack.c.l.bf16 %v224
    %v663 = vunpack.c.h.bf16 %v224
    %v664 = vunpack.c.l.bf16 %v225
    %v665 = vunpack.c.h.bf16 %v225
    %v666 = vunpack.c.l.bf16 %v226
    %v667 = vunpack.c.h.bf16 %v226
    %v668 = vunpack.c.l.bf16 %v227
    %v669 = vunpack.c.h.bf16 %v227
    %v670 = vunpack.c.l.bf16 %v228
    %v671 = vunpack.c.h.bf16 %v228
    %v672 = vunpack.c.l.bf16 %v229
    %v673 = vunpack.c.h.bf16 %v229
    %v674 = vunpack.c.l.bf16 %v230
    %v675 = vunpack.c.h.bf16 %v230
    %v676 = vunpack.c.l.bf16 %v231
    %v677 = vunpack.c.h.bf16 %v231
    %v678 = vunpack.c.l.bf16 %v232
    %v679 = vunpack.c.h.bf16 %v232
    %v680 = vunpack.c.l.bf16 %v233
    %v681 = vunpack.c.h.bf16 %v233
    %v682 = vunpack.c.l.bf16 %v234
    %v683 = vunpack.c.h.bf16 %v234
    %v684 = vunpack.c.l.bf16 %v235
    %v685 = vunpack.c.h.bf16 %v235
    %v686 = vunpack.c.l.bf16 %v236
    %v687 = vunpack.c.h.bf16 %v236
    %v688 = vunpack.c.l.bf16 %v237
    %v689 = vunpack.c.h.bf16 %v237
    %v690 = vunpack.c.l.bf16 %v238
    %v691 = vunpack.c.h.bf16 %v238
    %v692 = vunpack.c.l.bf16 %v239
    %v693 = vunpack.c.h.bf16 %v239
    %v694 = vunpack.c.l.bf16 %v240
    %v695 = vunpack.c.h.bf16 %v240
    %v696 = vunpack.c.l.bf16 %v241
    %v697 = vunpack.c.h.bf16 %v241
    %v698 = vunpack.c.l.bf16 %v242
    %v699 = vunpack.c.h.bf16 %v242
    %v700 = vunpack.c.l.bf16 %v243
    %v701 = vunpack.c.h.bf16 %v243
    %v702 = vunpack.c.l.bf16 %v244
    %v703 = vunpack.c.h.bf16 %v244
    %v704 = vunpack.c.l.bf16 %v245
    %v705 = vunpack.c.h.bf16 %v245
    %v706 = vunpack.c.l.bf16 %v246
    %v707 = vunpack.c.h.bf16 %v246
    %v708 = vunpack.c.l.bf16 %v247
    %v709 = vunpack.c.h.bf16 %v247
    %v710 = vunpack.c.l.bf16 %v248
    %v711 = vunpack.c.h.bf16 %v248
    %v712 = vunpack.c.l.bf16 %v249
    %v713 = vunpack.c.h.bf16 %v249
    %v714 = vunpack.c.l.bf16 %v250
    %v715 = vunpack.c.h.bf16 %v250
    %v716 = vunpack.c.l.bf16 %v251
    %v717 = vunpack.c.h.bf16 %v251
    %v718 = vunpack.c.l.bf16 %v252
    %v719 = vunpack.c.h.bf16 %v252
    %v720 = vunpack.c.l.bf16 %v253
    %v721 = vunpack.c.h.bf16 %v253
    %v722 = vunpack.c.l.bf16 %v254
    %v723 = vunpack.c.h.bf16 %v254
    %v724 = vunpack.c.l.bf16 %v255
    %v725 = vunpack.c.h.bf16 %v255
    %v726 = vunpack.c.l.bf16 %v256
    %v727 = vunpack.c.h.bf16 %v256
    %v728 = vunpack.c.l.bf16 %v257
    %v729 = vunpack.c.h.bf16 %v257
    %v730 = vunpack.c.l.bf16 %v258
    %v731 = vunpack.c.h.bf16 %v258
    %v732 = vunpack.c.l.bf16 %v259
    %v733 = vunpack.c.h.bf16 %v259
    %v734 = vunpack.c.l.bf16 %v260
    %v735 = vunpack.c.h.bf16 %v260
    %v736 = vunpack.c.l.bf16 %v261
    %v737 = vunpack.c.h.bf16 %v261
    %v738 = vunpack.c.l.bf16 %v262
    %v739 = vunpack.c.h.bf16 %v262
    %v740 = vunpack.c.l.bf16 %v263
    %v741 = vunpack.c.h.bf16 %v263
    %v742 = vunpack.c.l.bf16 %v264
    %v743 = vunpack.c.h.bf16 %v264
    %v744 = vunpack.c.l.bf16 %v265
    %v745 = vunpack.c.h.bf16 %v265
    %v746 = vunpack.c.l.bf16 %v266
    %v747 = vunpack.c.h.bf16 %v266
    %v748 = vunpack.c.l.bf16 %v267
    %v749 = vunpack.c.h.bf16 %v267
    %v750 = vunpack.c.l.bf16 %v268
    %v751 = vunpack.c.h.bf16 %v268
    %v752 = vunpack.c.l.bf16 %v269
    %v753 = vunpack.c.h.bf16 %v269
    %v754 = vunpack.c.l.bf16 %v270
    %v755 = vunpack.c.h.bf16 %v270
    %v756 = vunpack.c.l.bf16 %v271
    %v757 = vunpack.c.h.bf16 %v271
    %v758 = vunpack.c.l.bf16 %v272
    %v759 = vunpack.c.h.bf16 %v272
    %v760 = vunpack.c.l.bf16 %v273
    %v761 = vunpack.c.h.bf16 %v273
    %v762 = vunpack.c.l.bf16 %v274
    %v763 = vunpack.c.h.bf16 %v274
    %v764 = vunpack.c.l.bf16 %v275
    %v765 = vunpack.c.h.bf16 %v275
    %v766 = vunpack.c.l.bf16 %v276
    %v767 = vunpack.c.h.bf16 %v276
    %v768 = vunpack.c.l.bf16 %v277
    %v769 = vunpack.c.h.bf16 %v277
    %v770 = vunpack.c.l.bf16 %v278
    %v771 = vunpack.c.h.bf16 %v278
    %v772 = vunpack.c.l.bf16 %v279
    %v773 = vunpack.c.h.bf16 %v279
    %v774 = vunpack.c.l.bf16 %v280
    %v775 = vunpack.c.h.bf16 %v280
    %v776 = vunpack.c.l.bf16 %v281
    %v777 = vunpack.c.h.bf16 %v281
    %v778 = vunpack.c.l.bf16 %v282
    %v779 = vunpack.c.h.bf16 %v282
    %v780 = vunpack.c.l.bf16 %v283
    %v781 = vunpack.c.h.bf16 %v283
    %v782 = vunpack.c.l.bf16 %v284
    %v783 = vunpack.c.h.bf16 %v284
    %v784 = vunpack.c.l.bf16 %v285
    %v785 = vunpack.c.h.bf16 %v285
    %v786 = vunpack.c.l.bf16 %v286
    %v787 = vunpack.c.h.bf16 %v286
    %v788 = vunpack.c.l.bf16 %v287
    %v789 = vunpack.c.h.bf16 %v287
    %v790 = vunpack.c.l.bf16 %v288
    %v791 = vunpack.c.h.bf16 %v288
    %v792 = vunpack.c.l.bf16 %v289
    %v793 = vunpack.c.h.bf16 %v289
    %v794 = vunpack.c.l.bf16 %v290
    %v795 = vunpack.c.h.bf16 %v290
    %v796 = vunpack.c.l.bf16 %v291
    %v797 = vunpack.c.h.bf16 %v291
    %v798 = vunpack.c.l.bf16 %v292
    %v799 = vunpack.c.h.bf16 %v292
    %v800 = vunpack.c.l.bf16 %v293
    %v801 = vunpack.c.h.bf16 %v293
    %v802 = vunpack.c.l.bf16 %v294
    %v803 = vunpack.c.h.bf16 %v294
    %v804 = vunpack.c.l.bf16 %v295
    %v805 = vunpack.c.h.bf16 %v295
    %v806 = vunpack.c.l.bf16 %v296
    %v807 = vunpack.c.h.bf16 %v296
    %v808 = vunpack.c.l.bf16 %v297
    %v809 = vunpack.c.h.bf16 %v297
    %v810 = vld [vmem:[%s2] sm:$0xf]
    %v812 = vlaneseq
    %v813 = vshrl.u32 %v812, 7
    %v814 = vsub.s32 0, %v813
    %v815 = vrot.slane %v810, %v814
    %v816 = vlaneseq
    %v817 = vshrl.u32 %v816, 7
    %v818 = vsub.s32 1, %v817
    %v819 = vrot.slane %v810, %v818
    %v820 = vlaneseq
    %v821 = vshrl.u32 %v820, 7
    %v822 = vsub.s32 2, %v821
    %v823 = vrot.slane %v810, %v822
    %v824 = vlaneseq
    %v825 = vshrl.u32 %v824, 7
    %v826 = vsub.s32 3, %v825
    %v827 = vrot.slane %v810, %v826
    %v834 = vcombine.high %v40, %v40
    %v836 = vunpack.c.l.s4 1983009808
    %v837 = vunpack.c.0.s8 %v836
    %v838 = vlaneseq
    %v839 = vshrl.u32 %v838, 7
    %v840 = vsub.s32 %v837, %v839
    %v841 = vrot.slane %v40, %v840
    %v843 = vunpack.c.l.s4 1983009808
    %v844 = vunpack.c.0.s8 %v843
    %v845 = vlaneseq
    %v846 = vshrl.u32 %v845, 7
    %v847 = vsub.s32 %v844, %v846
    %v848 = vrot.slane %v834, %v847
    %v849 = vcombine.high %v841, %v841
    %v850 = vcombine.high %v848, %v848
    %v851 = vcombine.high %v41, %v41
    %v853 = vunpack.c.l.s4 1983009808
    %v854 = vunpack.c.0.s8 %v853
    %v855 = vlaneseq
    %v856 = vshrl.u32 %v855, 7
    %v857 = vsub.s32 %v854, %v856
    %v858 = vrot.slane %v41, %v857
    %v860 = vunpack.c.l.s4 1983009808
    %v861 = vunpack.c.0.s8 %v860
    %v862 = vlaneseq
    %v863 = vshrl.u32 %v862, 7
    %v864 = vsub.s32 %v861, %v863
    %v865 = vrot.slane %v851, %v864
    %v866 = vcombine.high %v858, %v858
    %v867 = vcombine.high %v865, %v865
    %876 = vmatprep.subr.mxu0 %v299
    %877 = vmatpush1.msra.mxu0 %v298
    %878 = vmatprep.subr.mxu0 %v303
    %879 = vmatpush1.msra.mxu0 %v302
    %880 = vmatprep.subr.mxu0 %v307
    %881 = vmatpush1.msra.mxu0 %v306
    %882 = vmatprep.subr.mxu0 %v311
    %883 = vmatpush1.msra.mxu0 %v310
    %884 = vmatprep.subr.mxu0 %v315
    %885 = vmatpush1.msra.mxu0 %v314
    %886 = vmatprep.subr.mxu0 %v319
    %887 = vmatpush1.msra.mxu0 %v318
    %888 = vmatprep.subr.mxu0 %v323
    %889 = vmatpush1.msra.mxu0 %v322
    %890 = vmatprep.subr.mxu0 %v327
    %891 = vmatpush1.msra.mxu0 %v326
    %892 = vmatprep.subr.mxu0 %v331
    %893 = vmatpush1.msra.mxu0 %v330
    %894 = vmatprep.subr.mxu0 %v335
    %895 = vmatpush1.msra.mxu0 %v334
    %896 = vmatprep.subr.mxu0 %v339
    %897 = vmatpush1.msra.mxu0 %v338
    %898 = vmatprep.subr.mxu0 %v343
    %899 = vmatpush1.msra.mxu0 %v342
    %900 = vmatprep.subr.mxu0 %v347
    %901 = vmatpush1.msra.mxu0 %v346
    %902 = vmatprep.subr.mxu0 %v351
    %903 = vmatpush1.msra.mxu0 %v350
    %904 = vmatprep.subr.mxu0 %v355
    %905 = vmatpush1.msra.mxu0 %v354
    %906 = vmatprep.subr.mxu0 %v359
    %907 = vmatpush1.msra.mxu0 %v358
    %908 = vmatprep.subr.mxu0 %v363
    %909 = vmatpush1.msra.mxu0 %v362
    %910 = vmatprep.subr.mxu0 %v367
    %911 = vmatpush1.msra.mxu0 %v366
    %912 = vmatprep.subr.mxu0 %v371
    %913 = vmatpush1.msra.mxu0 %v370
    %914 = vmatprep.subr.mxu0 %v375
    %915 = vmatpush1.msra.mxu0 %v374
    %916 = vmatprep.subr.mxu0 %v379
    %917 = vmatpush1.msra.mxu0 %v378
    %918 = vmatprep.subr.mxu0 %v383
    %919 = vmatpush1.msra.mxu0 %v382
    %920 = vmatprep.subr.mxu0 %v387
    %921 = vmatpush1.msra.mxu0 %v386
    %922 = vmatprep.subr.mxu0 %v391
    %923 = vmatpush1.msra.mxu0 %v390
    %924 = vmatprep.subr.mxu0 %v395
    %925 = vmatpush1.msra.mxu0 %v394
    %926 = vmatprep.subr.mxu0 %v399
    %927 = vmatpush1.msra.mxu0 %v398
    %928 = vmatprep.subr.mxu0 %v403
    %929 = vmatpush1.msra.mxu0 %v402
    %930 = vmatprep.subr.mxu0 %v407
    %931 = vmatpush1.msra.mxu0 %v406
    %932 = vmatprep.subr.mxu0 %v411
    %933 = vmatpush1.msra.mxu0 %v410
    %934 = vmatprep.subr.mxu0 %v415
    %935 = vmatpush1.msra.mxu0 %v414
    %936 = vmatprep.subr.mxu0 %v419
    %937 = vmatpush1.msra.mxu0 %v418
    %938 = vmatprep.subr.mxu0 %v423
    %939 = vmatpush1.msra.mxu0 %v422
    %940 = vmatprep.mubr.f32.mxu0 %v849
    %941 = vmatmul.mubr.f32.gmra.mrb[0].mxu0 %v841
    %v942 = vpop.f32.mrb[0].mxu0
    %v943 = vadd.f32 %v815, %v942
    %v944 = vpop.f32.mrb[0].mxu0
    %v945 = vadd.f32 %v819, %v944
    %946 = vdwg.mxu0
    %947 = vmatprep.subr.mxu0 %v427
    %948 = vmatpush1.msra.mxu0 %v426
    %949 = vmatprep.subr.mxu0 %v431
    %950 = vmatpush1.msra.mxu0 %v430
    %951 = vmatprep.subr.mxu0 %v435
    %952 = vmatpush1.msra.mxu0 %v434
    %953 = vmatprep.subr.mxu0 %v439
    %954 = vmatpush1.msra.mxu0 %v438
    %955 = vmatprep.subr.mxu0 %v443
    %956 = vmatpush1.msra.mxu0 %v442
    %957 = vmatprep.subr.mxu0 %v447
    %958 = vmatpush1.msra.mxu0 %v446
    %959 = vmatprep.subr.mxu0 %v451
    %960 = vmatpush1.msra.mxu0 %v450
    %961 = vmatprep.subr.mxu0 %v455
    %962 = vmatpush1.msra.mxu0 %v454
    %963 = vmatprep.subr.mxu0 %v459
    %964 = vmatpush1.msra.mxu0 %v458
    %965 = vmatprep.subr.mxu0 %v463
    %966 = vmatpush1.msra.mxu0 %v462
    %967 = vmatprep.subr.mxu0 %v467
    %968 = vmatpush1.msra.mxu0 %v466
    %969 = vmatprep.subr.mxu0 %v471
    %970 = vmatpush1.msra.mxu0 %v470
    %971 = vmatprep.subr.mxu0 %v475
    %972 = vmatpush1.msra.mxu0 %v474
    %973 = vmatprep.subr.mxu0 %v479
    %974 = vmatpush1.msra.mxu0 %v478
    %975 = vmatprep.subr.mxu0 %v483
    %976 = vmatpush1.msra.mxu0 %v482
    %977 = vmatprep.subr.mxu0 %v487
    %978 = vmatpush1.msra.mxu0 %v486
    %979 = vmatprep.subr.mxu0 %v491
    %980 = vmatpush1.msra.mxu0 %v490
    %981 = vmatprep.subr.mxu0 %v495
    %982 = vmatpush1.msra.mxu0 %v494
    %983 = vmatprep.subr.mxu0 %v499
    %984 = vmatpush1.msra.mxu0 %v498
    %985 = vmatprep.subr.mxu0 %v503
    %986 = vmatpush1.msra.mxu0 %v502
    %987 = vmatprep.subr.mxu0 %v507
    %988 = vmatpush1.msra.mxu0 %v506
    %989 = vmatprep.subr.mxu0 %v511
    %990 = vmatpush1.msra.mxu0 %v510
    %991 = vmatprep.subr.mxu0 %v515
    %992 = vmatpush1.msra.mxu0 %v514
    %993 = vmatprep.subr.mxu0 %v519
    %994 = vmatpush1.msra.mxu0 %v518
    %995 = vmatprep.subr.mxu0 %v523
    %996 = vmatpush1.msra.mxu0 %v522
    %997 = vmatprep.subr.mxu0 %v527
    %998 = vmatpush1.msra.mxu0 %v526
    %999 = vmatprep.subr.mxu0 %v531
    %1000 = vmatpush1.msra.mxu0 %v530
    %1001 = vmatprep.subr.mxu0 %v535
    %1002 = vmatpush1.msra.mxu0 %v534
    %1003 = vmatprep.subr.mxu0 %v539
    %1004 = vmatpush1.msra.mxu0 %v538
    %1005 = vmatprep.subr.mxu0 %v543
    %1006 = vmatpush1.msra.mxu0 %v542
    %1007 = vmatprep.subr.mxu0 %v547
    %1008 = vmatpush1.msra.mxu0 %v546
    %1009 = vmatprep.subr.mxu0 %v551
    %1010 = vmatpush1.msra.mxu0 %v550
    %1011 = vmatprep.mubr.f32.mxu0 %v850
    %1012 = vmatmul.mubr.f32.gmra.mrb[0].mxu0 %v848
    %v1013 = vpop.f32.mrb[0].mxu0
    %v1014 = vadd.f32 %v943, %v1013
    %v1015 = vpop.f32.mrb[0].mxu0
    %v1016 = vadd.f32 %v945, %v1015
    %1017 = vdwg.mxu0
    %1018 = vmatprep.subr.mxu0 %v555
    %1019 = vmatpush1.msra.mxu0 %v554
    %1020 = vmatprep.subr.mxu0 %v559
    %1021 = vmatpush1.msra.mxu0 %v558
    %1022 = vmatprep.subr.mxu0 %v563
    %1023 = vmatpush1.msra.mxu0 %v562
    %1024 = vmatprep.subr.mxu0 %v567
    %1025 = vmatpush1.msra.mxu0 %v566
    %1026 = vmatprep.subr.mxu0 %v571
    %1027 = vmatpush1.msra.mxu0 %v570
    %1028 = vmatprep.subr.mxu0 %v575
    %1029 = vmatpush1.msra.mxu0 %v574
    %1030 = vmatprep.subr.mxu0 %v579
    %1031 = vmatpush1.msra.mxu0 %v578
    %1032 = vmatprep.subr.mxu0 %v583
    %1033 = vmatpush1.msra.mxu0 %v582
    %1034 = vmatprep.subr.mxu0 %v587
    %1035 = vmatpush1.msra.mxu0 %v586
    %1036 = vmatprep.subr.mxu0 %v591
    %1037 = vmatpush1.msra.mxu0 %v590
    %1038 = vmatprep.subr.mxu0 %v595
    %1039 = vmatpush1.msra.mxu0 %v594
    %1040 = vmatprep.subr.mxu0 %v599
    %1041 = vmatpush1.msra.mxu0 %v598
    %1042 = vmatprep.subr.mxu0 %v603
    %1043 = vmatpush1.msra.mxu0 %v602
    %1044 = vmatprep.subr.mxu0 %v607
    %1045 = vmatpush1.msra.mxu0 %v606
    %1046 = vmatprep.subr.mxu0 %v611
    %1047 = vmatpush1.msra.mxu0 %v610
    %1048 = vmatprep.subr.mxu0 %v615
    %1049 = vmatpush1.msra.mxu0 %v614
    %1050 = vmatprep.subr.mxu0 %v619
    %1051 = vmatpush1.msra.mxu0 %v618
    %1052 = vmatprep.subr.mxu0 %v623
    %1053 = vmatpush1.msra.mxu0 %v622
    %1054 = vmatprep.subr.mxu0 %v627
    %1055 = vmatpush1.msra.mxu0 %v626
    %1056 = vmatprep.subr.mxu0 %v631
    %1057 = vmatpush1.msra.mxu0 %v630
    %1058 = vmatprep.subr.mxu0 %v635
    %1059 = vmatpush1.msra.mxu0 %v634
    %1060 = vmatprep.subr.mxu0 %v639
    %1061 = vmatpush1.msra.mxu0 %v638
    %1062 = vmatprep.subr.mxu0 %v643
    %1063 = vmatpush1.msra.mxu0 %v642
    %1064 = vmatprep.subr.mxu0 %v647
    %1065 = vmatpush1.msra.mxu0 %v646
    %1066 = vmatprep.subr.mxu0 %v651
    %1067 = vmatpush1.msra.mxu0 %v650
    %1068 = vmatprep.subr.mxu0 %v655
    %1069 = vmatpush1.msra.mxu0 %v654
    %1070 = vmatprep.subr.mxu0 %v659
    %1071 = vmatpush1.msra.mxu0 %v658
    %1072 = vmatprep.subr.mxu0 %v663
    %1073 = vmatpush1.msra.mxu0 %v662
    %1074 = vmatprep.subr.mxu0 %v667
    %1075 = vmatpush1.msra.mxu0 %v666
    %1076 = vmatprep.subr.mxu0 %v671
    %1077 = vmatpush1.msra.mxu0 %v670
    %1078 = vmatprep.subr.mxu0 %v675
    %1079 = vmatpush1.msra.mxu0 %v674
    %1080 = vmatprep.subr.mxu0 %v679
    %1081 = vmatpush1.msra.mxu0 %v678
    %1082 = vmatprep.mubr.f32.mxu0 %v866
    %1083 = vmatmul.mubr.f32.gmra.mrb[0].mxu0 %v858
    %v1084 = vpop.f32.mrb[0].mxu0
    %v1085 = vadd.f32 %v1014, %v1084
    %v1086 = vpop.f32.mrb[0].mxu0
    %v1087 = vadd.f32 %v1016, %v1086
    %1088 = vdwg.mxu0
    %1089 = vmatprep.subr.mxu0 %v683
    %1090 = vmatpush1.msra.mxu0 %v682
    %1091 = vmatprep.subr.mxu0 %v687
    %1092 = vmatpush1.msra.mxu0 %v686
    %1093 = vmatprep.subr.mxu0 %v691
    %1094 = vmatpush1.msra.mxu0 %v690
    %1095 = vmatprep.subr.mxu0 %v695
    %1096 = vmatpush1.msra.mxu0 %v694
    %1097 = vmatprep.subr.mxu0 %v699
    %1098 = vmatpush1.msra.mxu0 %v698
    %1099 = vmatprep.subr.mxu0 %v703
    %1100 = vmatpush1.msra.mxu0 %v702
    %1101 = vmatprep.subr.mxu0 %v707
    %1102 = vmatpush1.msra.mxu0 %v706
    %1103 = vmatprep.subr.mxu0 %v711
    %1104 = vmatpush1.msra.mxu0 %v710
    %1105 = vmatprep.subr.mxu0 %v715
    %1106 = vmatpush1.msra.mxu0 %v714
    %1107 = vmatprep.subr.mxu0 %v719
    %1108 = vmatpush1.msra.mxu0 %v718
    %1109 = vmatprep.subr.mxu0 %v723
    %1110 = vmatpush1.msra.mxu0 %v722
    %1111 = vmatprep.subr.mxu0 %v727
    %1112 = vmatpush1.msra.mxu0 %v726
    %1113 = vmatprep.subr.mxu0 %v731
    %1114 = vmatpush1.msra.mxu0 %v730
    %1115 = vmatprep.subr.mxu0 %v735
    %1116 = vmatpush1.msra.mxu0 %v734
    %1117 = vmatprep.subr.mxu0 %v739
    %1118 = vmatpush1.msra.mxu0 %v738
    %1119 = vmatprep.subr.mxu0 %v743
    %1120 = vmatpush1.msra.mxu0 %v742
    %1121 = vmatprep.subr.mxu0 %v747
    %1122 = vmatpush1.msra.mxu0 %v746
    %1123 = vmatprep.subr.mxu0 %v751
    %1124 = vmatpush1.msra.mxu0 %v750
    %1125 = vmatprep.subr.mxu0 %v755
    %1126 = vmatpush1.msra.mxu0 %v754
    %1127 = vmatprep.subr.mxu0 %v759
    %1128 = vmatpush1.msra.mxu0 %v758
    %1129 = vmatprep.subr.mxu0 %v763
    %1130 = vmatpush1.msra.mxu0 %v762
    %1131 = vmatprep.subr.mxu0 %v767
    %1132 = vmatpush1.msra.mxu0 %v766
    %1133 = vmatprep.subr.mxu0 %v771
    %1134 = vmatpush1.msra.mxu0 %v770
    %1135 = vmatprep.subr.mxu0 %v775
    %1136 = vmatpush1.msra.mxu0 %v774
    %1137 = vmatprep.subr.mxu0 %v779
    %1138 = vmatpush1.msra.mxu0 %v778
    %1139 = vmatprep.subr.mxu0 %v783
    %1140 = vmatpush1.msra.mxu0 %v782
    %1141 = vmatprep.subr.mxu0 %v787
    %1142 = vmatpush1.msra.mxu0 %v786
    %1143 = vmatprep.subr.mxu0 %v791
    %1144 = vmatpush1.msra.mxu0 %v790
    %1145 = vmatprep.subr.mxu0 %v795
    %1146 = vmatpush1.msra.mxu0 %v794
    %1147 = vmatprep.subr.mxu0 %v799
    %1148 = vmatpush1.msra.mxu0 %v798
    %1149 = vmatprep.subr.mxu0 %v803
    %1150 = vmatpush1.msra.mxu0 %v802
    %1151 = vmatprep.subr.mxu0 %v807
    %1152 = vmatpush1.msra.mxu0 %v806
    %1153 = vmatprep.mubr.f32.mxu0 %v867
    %1154 = vmatmul.mubr.f32.gmra.mrb[0].mxu0 %v865
    %v1155 = vpop.f32.mrb[0].mxu0
    %v1156 = vadd.f32 %v1085, %v1155
    %v1157 = vpop.f32.mrb[0].mxu0
    %v1158 = vadd.f32 %v1087, %v1157
    %1159 = vdwg.mxu0
    %1160 = vmatprep.subr.mxu0 %v301
    %1161 = vmatpush1.msra.mxu0 %v300
    %1162 = vmatprep.subr.mxu0 %v305
    %1163 = vmatpush1.msra.mxu0 %v304
    %1164 = vmatprep.subr.mxu0 %v309
    %1165 = vmatpush1.msra.mxu0 %v308
    %1166 = vmatprep.subr.mxu0 %v313
    %1167 = vmatpush1.msra.mxu0 %v312
    %1168 = vmatprep.subr.mxu0 %v317
    %1169 = vmatpush1.msra.mxu0 %v316
    %1170 = vmatprep.subr.mxu0 %v321
    %1171 = vmatpush1.msra.mxu0 %v320
    %1172 = vmatprep.subr.mxu0 %v325
    %1173 = vmatpush1.msra.mxu0 %v324
    %1174 = vmatprep.subr.mxu0 %v329
    %1175 = vmatpush1.msra.mxu0 %v328
    %1176 = vmatprep.subr.mxu0 %v333
    %1177 = vmatpush1.msra.mxu0 %v332
    %1178 = vmatprep.subr.mxu0 %v337
    %1179 = vmatpush1.msra.mxu0 %v336
    %1180 = vmatprep.subr.mxu0 %v341
    %1181 = vmatpush1.msra.mxu0 %v340
    %1182 = vmatprep.subr.mxu0 %v345
    %1183 = vmatpush1.msra.mxu0 %v344
    %1184 = vmatprep.subr.mxu0 %v349
    %1185 = vmatpush1.msra.mxu0 %v348
    %1186 = vmatprep.subr.mxu0 %v353
    %1187 = vmatpush1.msra.mxu0 %v352
    %1188 = vmatprep.subr.mxu0 %v357
    %1189 = vmatpush1.msra.mxu0 %v356
    %1190 = vmatprep.subr.mxu0 %v361
    %1191 = vmatpush1.msra.mxu0 %v360
    %1192 = vmatprep.subr.mxu0 %v365
    %1193 = vmatpush1.msra.mxu0 %v364
    %1194 = vmatprep.subr.mxu0 %v369
    %1195 = vmatpush1.msra.mxu0 %v368
    %1196 = vmatprep.subr.mxu0 %v373
    %1197 = vmatpush1.msra.mxu0 %v372
    %1198 = vmatprep.subr.mxu0 %v377
    %1199 = vmatpush1.msra.mxu0 %v376
    %1200 = vmatprep.subr.mxu0 %v381
    %1201 = vmatpush1.msra.mxu0 %v380
    %1202 = vmatprep.subr.mxu0 %v385
    %1203 = vmatpush1.msra.mxu0 %v384
    %1204 = vmatprep.subr.mxu0 %v389
    %1205 = vmatpush1.msra.mxu0 %v388
    %1206 = vmatprep.subr.mxu0 %v393
    %1207 = vmatpush1.msra.mxu0 %v392
    %1208 = vmatprep.subr.mxu0 %v397
    %1209 = vmatpush1.msra.mxu0 %v396
    %1210 = vmatprep.subr.mxu0 %v401
    %1211 = vmatpush1.msra.mxu0 %v400
    %1212 = vmatprep.subr.mxu0 %v405
    %1213 = vmatpush1.msra.mxu0 %v404
    %1214 = vmatprep.subr.mxu0 %v409
    %1215 = vmatpush1.msra.mxu0 %v408
    %1216 = vmatprep.subr.mxu0 %v413
    %1217 = vmatpush1.msra.mxu0 %v412
    %1218 = vmatprep.subr.mxu0 %v417
    %1219 = vmatpush1.msra.mxu0 %v416
    %1220 = vmatprep.subr.mxu0 %v421
    %1221 = vmatpush1.msra.mxu0 %v420
    %1222 = vmatprep.subr.mxu0 %v425
    %1223 = vmatpush1.msra.mxu0 %v424
    %1224 = vmatprep.mubr.f32.mxu0 %v849
    %1225 = vmatmul.mubr.f32.gmra.mrb[0].mxu0 %v841
    %v1226 = vpop.f32.mrb[0].mxu0
    %v1227 = vadd.f32 %v823, %v1226
    %v1228 = vpop.f32.mrb[0].mxu0
    %v1229 = vadd.f32 %v827, %v1228
    %1230 = vdwg.mxu0
    %1231 = vmatprep.subr.mxu0 %v429
    %1232 = vmatpush1.msra.mxu0 %v428
    %1233 = vmatprep.subr.mxu0 %v433
    %1234 = vmatpush1.msra.mxu0 %v432
    %1235 = vmatprep.subr.mxu0 %v437
    %1236 = vmatpush1.msra.mxu0 %v436
    %1237 = vmatprep.subr.mxu0 %v441
    %1238 = vmatpush1.msra.mxu0 %v440
    %1239 = vmatprep.subr.mxu0 %v445
    %1240 = vmatpush1.msra.mxu0 %v444
    %1241 = vmatprep.subr.mxu0 %v449
    %1242 = vmatpush1.msra.mxu0 %v448
    %1243 = vmatprep.subr.mxu0 %v453
    %1244 = vmatpush1.msra.mxu0 %v452
    %1245 = vmatprep.subr.mxu0 %v457
    %1246 = vmatpush1.msra.mxu0 %v456
    %1247 = vmatprep.subr.mxu0 %v461
    %1248 = vmatpush1.msra.mxu0 %v460
    %1249 = vmatprep.subr.mxu0 %v465
    %1250 = vmatpush1.msra.mxu0 %v464
    %1251 = vmatprep.subr.mxu0 %v469
    %1252 = vmatpush1.msra.mxu0 %v468
    %1253 = vmatprep.subr.mxu0 %v473
    %1254 = vmatpush1.msra.mxu0 %v472
    %1255 = vmatprep.subr.mxu0 %v477
    %1256 = vmatpush1.msra.mxu0 %v476
    %1257 = vmatprep.subr.mxu0 %v481
    %1258 = vmatpush1.msra.mxu0 %v480
    %1259 = vmatprep.subr.mxu0 %v485
    %1260 = vmatpush1.msra.mxu0 %v484
    %1261 = vmatprep.subr.mxu0 %v489
    %1262 = vmatpush1.msra.mxu0 %v488
    %1263 = vmatprep.subr.mxu0 %v493
    %1264 = vmatpush1.msra.mxu0 %v492
    %1265 = vmatprep.subr.mxu0 %v497
    %1266 = vmatpush1.msra.mxu0 %v496
    %1267 = vmatprep.subr.mxu0 %v501
    %1268 = vmatpush1.msra.mxu0 %v500
    %1269 = vmatprep.subr.mxu0 %v505
    %1270 = vmatpush1.msra.mxu0 %v504
    %1271 = vmatprep.subr.mxu0 %v509
    %1272 = vmatpush1.msra.mxu0 %v508
    %1273 = vmatprep.subr.mxu0 %v513
    %1274 = vmatpush1.msra.mxu0 %v512
    %1275 = vmatprep.subr.mxu0 %v517
    %1276 = vmatpush1.msra.mxu0 %v516
    %1277 = vmatprep.subr.mxu0 %v521
    %1278 = vmatpush1.msra.mxu0 %v520
    %1279 = vmatprep.subr.mxu0 %v525
    %1280 = vmatpush1.msra.mxu0 %v524
    %1281 = vmatprep.subr.mxu0 %v529
    %1282 = vmatpush1.msra.mxu0 %v528
    %1283 = vmatprep.subr.mxu0 %v533
    %1284 = vmatpush1.msra.mxu0 %v532
    %1285 = vmatprep.subr.mxu0 %v537
    %1286 = vmatpush1.msra.mxu0 %v536
    %1287 = vmatprep.subr.mxu0 %v541
    %1288 = vmatpush1.msra.mxu0 %v540
    %1289 = vmatprep.subr.mxu0 %v545
    %1290 = vmatpush1.msra.mxu0 %v544
    %1291 = vmatprep.subr.mxu0 %v549
    %1292 = vmatpush1.msra.mxu0 %v548
    %1293 = vmatprep.subr.mxu0 %v553
    %1294 = vmatpush1.msra.mxu0 %v552
    %1295 = vmatprep.mubr.f32.mxu0 %v850
    %1296 = vmatmul.mubr.f32.gmra.mrb[0].mxu0 %v848
    %v1297 = vpop.f32.mrb[0].mxu0
    %v1298 = vadd.f32 %v1227, %v1297
    %v1299 = vpop.f32.mrb[0].mxu0
    %v1300 = vadd.f32 %v1229, %v1299
    %1301 = vdwg.mxu0
    %1302 = vmatprep.subr.mxu0 %v557
    %1303 = vmatpush1.msra.mxu0 %v556
    %1304 = vmatprep.subr.mxu0 %v561
    %1305 = vmatpush1.msra.mxu0 %v560
    %1306 = vmatprep.subr.mxu0 %v565
    %1307 = vmatpush1.msra.mxu0 %v564
    %1308 = vmatprep.subr.mxu0 %v569
    %1309 = vmatpush1.msra.mxu0 %v568
    %1310 = vmatprep.subr.mxu0 %v573
    %1311 = vmatpush1.msra.mxu0 %v572
    %1312 = vmatprep.subr.mxu0 %v577
    %1313 = vmatpush1.msra.mxu0 %v576
    %1314 = vmatprep.subr.mxu0 %v581
    %1315 = vmatpush1.msra.mxu0 %v580
    %1316 = vmatprep.subr.mxu0 %v585
    %1317 = vmatpush1.msra.mxu0 %v584
    %1318 = vmatprep.subr.mxu0 %v589
    %1319 = vmatpush1.msra.mxu0 %v588
    %1320 = vmatprep.subr.mxu0 %v593
    %1321 = vmatpush1.msra.mxu0 %v592
    %1322 = vmatprep.subr.mxu0 %v597
    %1323 = vmatpush1.msra.mxu0 %v596
    %1324 = vmatprep.subr.mxu0 %v601
    %1325 = vmatpush1.msra.mxu0 %v600
    %1326 = vmatprep.subr.mxu0 %v605
    %1327 = vmatpush1.msra.mxu0 %v604
    %1328 = vmatprep.subr.mxu0 %v609
    %1329 = vmatpush1.msra.mxu0 %v608
    %1330 = vmatprep.subr.mxu0 %v613
    %1331 = vmatpush1.msra.mxu0 %v612
    %1332 = vmatprep.subr.mxu0 %v617
    %1333 = vmatpush1.msra.mxu0 %v616
    %1334 = vmatprep.subr.mxu0 %v621
    %1335 = vmatpush1.msra.mxu0 %v620
    %1336 = vmatprep.subr.mxu0 %v625
    %1337 = vmatpush1.msra.mxu0 %v624
    %1338 = vmatprep.subr.mxu0 %v629
    %1339 = vmatpush1.msra.mxu0 %v628
    %1340 = vmatprep.subr.mxu0 %v633
    %1341 = vmatpush1.msra.mxu0 %v632
    %1342 = vmatprep.subr.mxu0 %v637
    %1343 = vmatpush1.msra.mxu0 %v636
    %1344 = vmatprep.subr.mxu0 %v641
    %1345 = vmatpush1.msra.mxu0 %v640
    %1346 = vmatprep.subr.mxu0 %v645
    %1347 = vmatpush1.msra.mxu0 %v644
    %1348 = vmatprep.subr.mxu0 %v649
    %1349 = vmatpush1.msra.mxu0 %v648
    %1350 = vmatprep.subr.mxu0 %v653
    %1351 = vmatpush1.msra.mxu0 %v652
    %1352 = vmatprep.subr.mxu0 %v657
    %1353 = vmatpush1.msra.mxu0 %v656
    %1354 = vmatprep.subr.mxu0 %v661
    %1355 = vmatpush1.msra.mxu0 %v660
    %1356 = vmatprep.subr.mxu0 %v665
    %1357 = vmatpush1.msra.mxu0 %v664
    %1358 = vmatprep.subr.mxu0 %v669
    %1359 = vmatpush1.msra.mxu0 %v668
    %1360 = vmatprep.subr.mxu0 %v673
    %1361 = vmatpush1.msra.mxu0 %v672
    %1362 = vmatprep.subr.mxu0 %v677
    %1363 = vmatpush1.msra.mxu0 %v676
    %1364 = vmatprep.subr.mxu0 %v681
    %1365 = vmatpush1.msra.mxu0 %v680
    %1366 = vmatprep.mubr.f32.mxu0 %v866
    %1367 = vmatmul.mubr.f32.gmra.mrb[0].mxu0 %v858
    %v1368 = vpop.f32.mrb[0].mxu0
    %v1369 = vadd.f32 %v1298, %v1368
    %v1370 = vpop.f32.mrb[0].mxu0
    %v1371 = vadd.f32 %v1300, %v1370
    %1372 = vdwg.mxu0
    %1373 = vmatprep.subr.mxu0 %v685
    %1374 = vmatpush1.msra.mxu0 %v684
    %1375 = vmatprep.subr.mxu0 %v689
    %1376 = vmatpush1.msra.mxu0 %v688
    %1377 = vmatprep.subr.mxu0 %v693
    %1378 = vmatpush1.msra.mxu0 %v692
    %1379 = vmatprep.subr.mxu0 %v697
    %1380 = vmatpush1.msra.mxu0 %v696
    %1381 = vmatprep.subr.mxu0 %v701
    %1382 = vmatpush1.msra.mxu0 %v700
    %1383 = vmatprep.subr.mxu0 %v705
    %1384 = vmatpush1.msra.mxu0 %v704
    %1385 = vmatprep.subr.mxu0 %v709
    %1386 = vmatpush1.msra.mxu0 %v708
    %1387 = vmatprep.subr.mxu0 %v713
    %1388 = vmatpush1.msra.mxu0 %v712
    %1389 = vmatprep.subr.mxu0 %v717
    %1390 = vmatpush1.msra.mxu0 %v716
    %1391 = vmatprep.subr.mxu0 %v721
    %1392 = vmatpush1.msra.mxu0 %v720
    %1393 = vmatprep.subr.mxu0 %v725
    %1394 = vmatpush1.msra.mxu0 %v724
    %1395 = vmatprep.subr.mxu0 %v729
    %1396 = vmatpush1.msra.mxu0 %v728
    %1397 = vmatprep.subr.mxu0 %v733
    %1398 = vmatpush1.msra.mxu0 %v732
    %1399 = vmatprep.subr.mxu0 %v737
    %1400 = vmatpush1.msra.mxu0 %v736
    %1401 = vmatprep.subr.mxu0 %v741
    %1402 = vmatpush1.msra.mxu0 %v740
    %1403 = vmatprep.subr.mxu0 %v745
    %1404 = vmatpush1.msra.mxu0 %v744
    %1405 = vmatprep.subr.mxu0 %v749
    %1406 = vmatpush1.msra.mxu0 %v748
    %1407 = vmatprep.subr.mxu0 %v753
    %1408 = vmatpush1.msra.mxu0 %v752
    %1409 = vmatprep.subr.mxu0 %v757
    %1410 = vmatpush1.msra.mxu0 %v756
    %1411 = vmatprep.subr.mxu0 %v761
    %1412 = vmatpush1.msra.mxu0 %v760
    %1413 = vmatprep.subr.mxu0 %v765
    %1414 = vmatpush1.msra.mxu0 %v764
    %1415 = vmatprep.subr.mxu0 %v769
    %1416 = vmatpush1.msra.mxu0 %v768
    %1417 = vmatprep.subr.mxu0 %v773
    %1418 = vmatpush1.msra.mxu0 %v772
    %1419 = vmatprep.subr.mxu0 %v777
    %1420 = vmatpush1.msra.mxu0 %v776
    %1421 = vmatprep.subr.mxu0 %v781
    %1422 = vmatpush1.msra.mxu0 %v780
    %1423 = vmatprep.subr.mxu0 %v785
    %1424 = vmatpush1.msra.mxu0 %v784
    %1425 = vmatprep.subr.mxu0 %v789
    %1426 = vmatpush1.msra.mxu0 %v788
    %1427 = vmatprep.subr.mxu0 %v793
    %1428 = vmatpush1.msra.mxu0 %v792
    %1429 = vmatprep.subr.mxu0 %v797
    %1430 = vmatpush1.msra.mxu0 %v796
    %1431 = vmatprep.subr.mxu0 %v801
    %1432 = vmatpush1.msra.mxu0 %v800
    %1433 = vmatprep.subr.mxu0 %v805
    %1434 = vmatpush1.msra.mxu0 %v804
    %1435 = vmatprep.subr.mxu0 %v809
    %1436 = vmatpush1.msra.mxu0 %v808
    %1437 = vmatprep.mubr.f32.mxu0 %v867
    %1438 = vmatmul.mubr.f32.gmra.mrb[0].mxu0 %v865
    %v1439 = vpop.f32.mrb[0].mxu0
    %v1440 = vadd.f32 %v1369, %v1439
    %v1441 = vpop.f32.mrb[0].mxu0
    %v1442 = vadd.f32 %v1371, %v1441
    %1443 = vdwg.mxu0
    %v1444 = vmax.f32 %v1156, 0.0
    %v1445 = vmax.f32 %v1158, 0.0
    %v1446 = vmax.f32 %v1440, 0.0
    %v1447 = vmax.f32 %v1442, 0.0
    %v1448 = vld [vmem:[%s3] sm:$0xff]
    %v1449 = vld [vmem:[%s3 + $0x8] sm:$0xff]
    %v1450 = vld [vmem:[%s3 + $0x10] sm:$0xff]
    %v1451 = vld [vmem:[%s3 + $0x18] sm:$0xff]
    %v1452 = vld [vmem:[%s3 + $0x20] sm:$0xff]
    %v1453 = vld [vmem:[%s3 + $0x28] sm:$0xff]
    %v1454 = vld [vmem:[%s3 + $0x30] sm:$0xff]
    %v1455 = vld [vmem:[%s3 + $0x38] sm:$0xff]
    %v1456 = vld [vmem:[%s3 + $0x40] sm:$0xff]
    %v1457 = vld [vmem:[%s3 + $0x48] sm:$0xff]
    %v1458 = vld [vmem:[%s3 + $0x50] sm:$0xff]
    %v1459 = vld [vmem:[%s3 + $0x58] sm:$0xff]
    %v1460 = vld [vmem:[%s3 + $0x60] sm:$0xff]
    %v1461 = vld [vmem:[%s3 + $0x68] sm:$0xff]
    %v1462 = vld [vmem:[%s3 + $0x70] sm:$0xff]
    %v1463 = vld [vmem:[%s3 + $0x78] sm:$0xff]
    %v1464 = vld [vmem:[%s3 + $0x80] sm:$0xff]
    %v1465 = vld [vmem:[%s3 + $0x88] sm:$0xff]
    %v1466 = vld [vmem:[%s3 + $0x90] sm:$0xff]
    %v1467 = vld [vmem:[%s3 + $0x98] sm:$0xff]
    %v1468 = vld [vmem:[%s3 + $0xa0] sm:$0xff]
    %v1469 = vld [vmem:[%s3 + $0xa8] sm:$0xff]
    %v1470 = vld [vmem:[%s3 + $0xb0] sm:$0xff]
    %v1471 = vld [vmem:[%s3 + $0xb8] sm:$0xff]
    %v1472 = vld [vmem:[%s3 + $0xc0] sm:$0xff]
    %v1473 = vld [vmem:[%s3 + $0xc8] sm:$0xff]
    %v1474 = vld [vmem:[%s3 + $0xd0] sm:$0xff]
    %v1475 = vld [vmem:[%s3 + $0xd8] sm:$0xff]
    %v1476 = vld [vmem:[%s3 + $0xe0] sm:$0xff]
    %v1477 = vld [vmem:[%s3 + $0xe8] sm:$0xff]
    %v1478 = vld [vmem:[%s3 + $0xf0] sm:$0xff]
    %v1479 = vld [vmem:[%s3 + $0xf8] sm:$0xff]
    %v1480 = vld [vmem:[%s3 + $0x100] sm:$0xff]
    %v1481 = vld [vmem:[%s3 + $0x108] sm:$0xff]
    %v1482 = vld [vmem:[%s3 + $0x110] sm:$0xff]
    %v1483 = vld [vmem:[%s3 + $0x118] sm:$0xff]
    %v1484 = vld [vmem:[%s3 + $0x120] sm:$0xff]
    %v1485 = vld [vmem:[%s3 + $0x128] sm:$0xff]
    %v1486 = vld [vmem:[%s3 + $0x130] sm:$0xff]
    %v1487 = vld [vmem:[%s3 + $0x138] sm:$0xff]
    %v1488 = vld [vmem:[%s3 + $0x140] sm:$0xff]
    %v1489 = vld [vmem:[%s3 + $0x148] sm:$0xff]
    %v1490 = vld [vmem:[%s3 + $0x150] sm:$0xff]
    %v1491 = vld [vmem:[%s3 + $0x158] sm:$0xff]
    %v1492 = vld [vmem:[%s3 + $0x160] sm:$0xff]
    %v1493 = vld [vmem:[%s3 + $0x168] sm:$0xff]
    %v1494 = vld [vmem:[%s3 + $0x170] sm:$0xff]
    %v1495 = vld [vmem:[%s3 + $0x178] sm:$0xff]
    %v1496 = vld [vmem:[%s3 + $0x180] sm:$0xff]
    %v1497 = vld [vmem:[%s3 + $0x188] sm:$0xff]
    %v1498 = vld [vmem:[%s3 + $0x190] sm:$0xff]
    %v1499 = vld [vmem:[%s3 + $0x198] sm:$0xff]
    %v1500 = vld [vmem:[%s3 + $0x1a0] sm:$0xff]
    %v1501 = vld [vmem:[%s3 + $0x1a8] sm:$0xff]
    %v1502 = vld [vmem:[%s3 + $0x1b0] sm:$0xff]
    %v1503 = vld [vmem:[%s3 + $0x1b8] sm:$0xff]
    %v1504 = vld [vmem:[%s3 + $0x1c0] sm:$0xff]
    %v1505 = vld [vmem:[%s3 + $0x1c8] sm:$0xff]
    %v1506 = vld [vmem:[%s3 + $0x1d0] sm:$0xff]
    %v1507 = vld [vmem:[%s3 + $0x1d8] sm:$0xff]
    %v1508 = vld [vmem:[%s3 + $0x1e0] sm:$0xff]
    %v1509 = vld [vmem:[%s3 + $0x1e8] sm:$0xff]
    %v1510 = vld [vmem:[%s3 + $0x1f0] sm:$0xff]
    %v1511 = vld [vmem:[%s3 + $0x1f8] sm:$0xff]
    %v1512 = vunpack.c.l.bf16 %v1448
    %v1513 = vunpack.c.h.bf16 %v1448
    %v1514 = vunpack.c.l.bf16 %v1449
    %v1515 = vunpack.c.h.bf16 %v1449
    %v1516 = vunpack.c.l.bf16 %v1450
    %v1517 = vunpack.c.h.bf16 %v1450
    %v1518 = vunpack.c.l.bf16 %v1451
    %v1519 = vunpack.c.h.bf16 %v1451
    %v1520 = vunpack.c.l.bf16 %v1452
    %v1521 = vunpack.c.h.bf16 %v1452
    %v1522 = vunpack.c.l.bf16 %v1453
    %v1523 = vunpack.c.h.bf16 %v1453
    %v1524 = vunpack.c.l.bf16 %v1454
    %v1525 = vunpack.c.h.bf16 %v1454
    %v1526 = vunpack.c.l.bf16 %v1455
    %v1527 = vunpack.c.h.bf16 %v1455
    %v1528 = vunpack.c.l.bf16 %v1456
    %v1529 = vunpack.c.h.bf16 %v1456
    %v1530 = vunpack.c.l.bf16 %v1457
    %v1531 = vunpack.c.h.bf16 %v1457
    %v1532 = vunpack.c.l.bf16 %v1458
    %v1533 = vunpack.c.h.bf16 %v1458
    %v1534 = vunpack.c.l.bf16 %v1459
    %v1535 = vunpack.c.h.bf16 %v1459
    %v1536 = vunpack.c.l.bf16 %v1460
    %v1537 = vunpack.c.h.bf16 %v1460
    %v1538 = vunpack.c.l.bf16 %v1461
    %v1539 = vunpack.c.h.bf16 %v1461
    %v1540 = vunpack.c.l.bf16 %v1462
    %v1541 = vunpack.c.h.bf16 %v1462
    %v1542 = vunpack.c.l.bf16 %v1463
    %v1543 = vunpack.c.h.bf16 %v1463
    %v1544 = vunpack.c.l.bf16 %v1464
    %v1545 = vunpack.c.h.bf16 %v1464
    %v1546 = vunpack.c.l.bf16 %v1465
    %v1547 = vunpack.c.h.bf16 %v1465
    %v1548 = vunpack.c.l.bf16 %v1466
    %v1549 = vunpack.c.h.bf16 %v1466
    %v1550 = vunpack.c.l.bf16 %v1467
    %v1551 = vunpack.c.h.bf16 %v1467
    %v1552 = vunpack.c.l.bf16 %v1468
    %v1553 = vunpack.c.h.bf16 %v1468
    %v1554 = vunpack.c.l.bf16 %v1469
    %v1555 = vunpack.c.h.bf16 %v1469
    %v1556 = vunpack.c.l.bf16 %v1470
    %v1557 = vunpack.c.h.bf16 %v1470
    %v1558 = vunpack.c.l.bf16 %v1471
    %v1559 = vunpack.c.h.bf16 %v1471
    %v1560 = vunpack.c.l.bf16 %v1472
    %v1561 = vunpack.c.h.bf16 %v1472
    %v1562 = vunpack.c.l.bf16 %v1473
    %v1563 = vunpack.c.h.bf16 %v1473
    %v1564 = vunpack.c.l.bf16 %v1474
    %v1565 = vunpack.c.h.bf16 %v1474
    %v1566 = vunpack.c.l.bf16 %v1475
    %v1567 = vunpack.c.h.bf16 %v1475
    %v1568 = vunpack.c.l.bf16 %v1476
    %v1569 = vunpack.c.h.bf16 %v1476
    %v1570 = vunpack.c.l.bf16 %v1477
    %v1571 = vunpack.c.h.bf16 %v1477
    %v1572 = vunpack.c.l.bf16 %v1478
    %v1573 = vunpack.c.h.bf16 %v1478
    %v1574 = vunpack.c.l.bf16 %v1479
    %v1575 = vunpack.c.h.bf16 %v1479
    %v1576 = vunpack.c.l.bf16 %v1480
    %v1577 = vunpack.c.h.bf16 %v1480
    %v1578 = vunpack.c.l.bf16 %v1481
    %v1579 = vunpack.c.h.bf16 %v1481
    %v1580 = vunpack.c.l.bf16 %v1482
    %v1581 = vunpack.c.h.bf16 %v1482
    %v1582 = vunpack.c.l.bf16 %v1483
    %v1583 = vunpack.c.h.bf16 %v1483
    %v1584 = vunpack.c.l.bf16 %v1484
    %v1585 = vunpack.c.h.bf16 %v1484
    %v1586 = vunpack.c.l.bf16 %v1485
    %v1587 = vunpack.c.h.bf16 %v1485
    %v1588 = vunpack.c.l.bf16 %v1486
    %v1589 = vunpack.c.h.bf16 %v1486
    %v1590 = vunpack.c.l.bf16 %v1487
    %v1591 = vunpack.c.h.bf16 %v1487
    %v1592 = vunpack.c.l.bf16 %v1488
    %v1593 = vunpack.c.h.bf16 %v1488
    %v1594 = vunpack.c.l.bf16 %v1489
    %v1595 = vunpack.c.h.bf16 %v1489
    %v1596 = vunpack.c.l.bf16 %v1490
    %v1597 = vunpack.c.h.bf16 %v1490
    %v1598 = vunpack.c.l.bf16 %v1491
    %v1599 = vunpack.c.h.bf16 %v1491
    %v1600 = vunpack.c.l.bf16 %v1492
    %v1601 = vunpack.c.h.bf16 %v1492
    %v1602 = vunpack.c.l.bf16 %v1493
    %v1603 = vunpack.c.h.bf16 %v1493
    %v1604 = vunpack.c.l.bf16 %v1494
    %v1605 = vunpack.c.h.bf16 %v1494
    %v1606 = vunpack.c.l.bf16 %v1495
    %v1607 = vunpack.c.h.bf16 %v1495
    %v1608 = vunpack.c.l.bf16 %v1496
    %v1609 = vunpack.c.h.bf16 %v1496
    %v1610 = vunpack.c.l.bf16 %v1497
    %v1611 = vunpack.c.h.bf16 %v1497
    %v1612 = vunpack.c.l.bf16 %v1498
    %v1613 = vunpack.c.h.bf16 %v1498
    %v1614 = vunpack.c.l.bf16 %v1499
    %v1615 = vunpack.c.h.bf16 %v1499
    %v1616 = vunpack.c.l.bf16 %v1500
    %v1617 = vunpack.c.h.bf16 %v1500
    %v1618 = vunpack.c.l.bf16 %v1501
    %v1619 = vunpack.c.h.bf16 %v1501
    %v1620 = vunpack.c.l.bf16 %v1502
    %v1621 = vunpack.c.h.bf16 %v1502
    %v1622 = vunpack.c.l.bf16 %v1503
    %v1623 = vunpack.c.h.bf16 %v1503
    %v1624 = vunpack.c.l.bf16 %v1504
    %v1625 = vunpack.c.h.bf16 %v1504
    %v1626 = vunpack.c.l.bf16 %v1505
    %v1627 = vunpack.c.h.bf16 %v1505
    %v1628 = vunpack.c.l.bf16 %v1506
    %v1629 = vunpack.c.h.bf16 %v1506
    %v1630 = vunpack.c.l.bf16 %v1507
    %v1631 = vunpack.c.h.bf16 %v1507
    %v1632 = vunpack.c.l.bf16 %v1508
    %v1633 = vunpack.c.h.bf16 %v1508
    %v1634 = vunpack.c.l.bf16 %v1509
    %v1635 = vunpack.c.h.bf16 %v1509
    %v1636 = vunpack.c.l.bf16 %v1510
    %v1637 = vunpack.c.h.bf16 %v1510
    %v1638 = vunpack.c.l.bf16 %v1511
    %v1639 = vunpack.c.h.bf16 %v1511
    %v1640 = vld [vmem:[%s4] sm:$0x3]
    %v1642 = vlaneseq
    %v1643 = vshrl.u32 %v1642, 7
    %v1644 = vsub.s32 0, %v1643
    %v1645 = vrot.slane %v1640, %v1644
    %v1646 = vlaneseq
    %v1647 = vshrl.u32 %v1646, 7
    %v1648 = vsub.s32 1, %v1647
    %v1649 = vrot.slane %v1640, %v1648
    %1652 = vmatprep.subr.mxu0 %v1513
    %1653 = vmatpush1.msra.mxu0 %v1512
    %1654 = vmatprep.subr.mxu0 %v1515
    %1655 = vmatpush1.msra.mxu0 %v1514
    %1656 = vmatprep.subr.mxu0 %v1517
    %1657 = vmatpush1.msra.mxu0 %v1516
    %1658 = vmatprep.subr.mxu0 %v1519
    %1659 = vmatpush1.msra.mxu0 %v1518
    %1660 = vmatprep.subr.mxu0 %v1521
    %1661 = vmatpush1.msra.mxu0 %v1520
    %1662 = vmatprep.subr.mxu0 %v1523
    %1663 = vmatpush1.msra.mxu0 %v1522
    %1664 = vmatprep.subr.mxu0 %v1525
    %1665 = vmatpush1.msra.mxu0 %v1524
    %1666 = vmatprep.subr.mxu0 %v1527
    %1667 = vmatpush1.msra.mxu0 %v1526
    %1668 = vmatprep.subr.mxu0 %v1529
    %1669 = vmatpush1.msra.mxu0 %v1528
    %1670 = vmatprep.subr.mxu0 %v1531
    %1671 = vmatpush1.msra.mxu0 %v1530
    %1672 = vmatprep.subr.mxu0 %v1533
    %1673 = vmatpush1.msra.mxu0 %v1532
    %1674 = vmatprep.subr.mxu0 %v1535
    %1675 = vmatpush1.msra.mxu0 %v1534
    %1676 = vmatprep.subr.mxu0 %v1537
    %1677 = vmatpush1.msra.mxu0 %v1536
    %1678 = vmatprep.subr.mxu0 %v1539
    %1679 = vmatpush1.msra.mxu0 %v1538
    %1680 = vmatprep.subr.mxu0 %v1541
    %1681 = vmatpush1.msra.mxu0 %v1540
    %1682 = vmatprep.subr.mxu0 %v1543
    %1683 = vmatpush1.msra.mxu0 %v1542
    %1684 = vmatprep.subr.mxu0 %v1545
    %1685 = vmatpush1.msra.mxu0 %v1544
    %1686 = vmatprep.subr.mxu0 %v1547
    %1687 = vmatpush1.msra.mxu0 %v1546
    %1688 = vmatprep.subr.mxu0 %v1549
    %1689 = vmatpush1.msra.mxu0 %v1548
    %1690 = vmatprep.subr.mxu0 %v1551
    %1691 = vmatpush1.msra.mxu0 %v1550
    %1692 = vmatprep.subr.mxu0 %v1553
    %1693 = vmatpush1.msra.mxu0 %v1552
    %1694 = vmatprep.subr.mxu0 %v1555
    %1695 = vmatpush1.msra.mxu0 %v1554
    %1696 = vmatprep.subr.mxu0 %v1557
    %1697 = vmatpush1.msra.mxu0 %v1556
    %1698 = vmatprep.subr.mxu0 %v1559
    %1699 = vmatpush1.msra.mxu0 %v1558
    %1700 = vmatprep.subr.mxu0 %v1561
    %1701 = vmatpush1.msra.mxu0 %v1560
    %1702 = vmatprep.subr.mxu0 %v1563
    %1703 = vmatpush1.msra.mxu0 %v1562
    %1704 = vmatprep.subr.mxu0 %v1565
    %1705 = vmatpush1.msra.mxu0 %v1564
    %1706 = vmatprep.subr.mxu0 %v1567
    %1707 = vmatpush1.msra.mxu0 %v1566
    %1708 = vmatprep.subr.mxu0 %v1569
    %1709 = vmatpush1.msra.mxu0 %v1568
    %1710 = vmatprep.subr.mxu0 %v1571
    %1711 = vmatpush1.msra.mxu0 %v1570
    %1712 = vmatprep.subr.mxu0 %v1573
    %1713 = vmatpush1.msra.mxu0 %v1572
    %1714 = vmatprep.subr.mxu0 %v1575
    %1715 = vmatpush1.msra.mxu0 %v1574
    %1716 = vmatprep.mubr.f32.mxu0 %v1445
    %1717 = vmatmul.mubr.f32.gmra.mrb[0].mxu0 %v1444
    %v1718 = vpop.f32.mrb[0].mxu0
    %v1719 = vadd.f32 %v1645, %v1718
    %v1720 = vpop.f32.mrb[0].mxu0
    %v1721 = vadd.f32 %v1649, %v1720
    %1722 = vdwg.mxu0
    %1723 = vmatprep.subr.mxu0 %v1577
    %1724 = vmatpush1.msra.mxu0 %v1576
    %1725 = vmatprep.subr.mxu0 %v1579
    %1726 = vmatpush1.msra.mxu0 %v1578
    %1727 = vmatprep.subr.mxu0 %v1581
    %1728 = vmatpush1.msra.mxu0 %v1580
    %1729 = vmatprep.subr.mxu0 %v1583
    %1730 = vmatpush1.msra.mxu0 %v1582
    %1731 = vmatprep.subr.mxu0 %v1585
    %1732 = vmatpush1.msra.mxu0 %v1584
    %1733 = vmatprep.subr.mxu0 %v1587
    %1734 = vmatpush1.msra.mxu0 %v1586
    %1735 = vmatprep.subr.mxu0 %v1589
    %1736 = vmatpush1.msra.mxu0 %v1588
    %1737 = vmatprep.subr.mxu0 %v1591
    %1738 = vmatpush1.msra.mxu0 %v1590
    %1739 = vmatprep.subr.mxu0 %v1593
    %1740 = vmatpush1.msra.mxu0 %v1592
    %1741 = vmatprep.subr.mxu0 %v1595
    %1742 = vmatpush1.msra.mxu0 %v1594
    %1743 = vmatprep.subr.mxu0 %v1597
    %1744 = vmatpush1.msra.mxu0 %v1596
    %1745 = vmatprep.subr.mxu0 %v1599
    %1746 = vmatpush1.msra.mxu0 %v1598
    %1747 = vmatprep.subr.mxu0 %v1601
    %1748 = vmatpush1.msra.mxu0 %v1600
    %1749 = vmatprep.subr.mxu0 %v1603
    %1750 = vmatpush1.msra.mxu0 %v1602
    %1751 = vmatprep.subr.mxu0 %v1605
    %1752 = vmatpush1.msra.mxu0 %v1604
    %1753 = vmatprep.subr.mxu0 %v1607
    %1754 = vmatpush1.msra.mxu0 %v1606
    %1755 = vmatprep.subr.mxu0 %v1609
    %1756 = vmatpush1.msra.mxu0 %v1608
    %1757 = vmatprep.subr.mxu0 %v1611
    %1758 = vmatpush1.msra.mxu0 %v1610
    %1759 = vmatprep.subr.mxu0 %v1613
    %1760 = vmatpush1.msra.mxu0 %v1612
    %1761 = vmatprep.subr.mxu0 %v1615
    %1762 = vmatpush1.msra.mxu0 %v1614
    %1763 = vmatprep.subr.mxu0 %v1617
    %1764 = vmatpush1.msra.mxu0 %v1616
    %1765 = vmatprep.subr.mxu0 %v1619
    %1766 = vmatpush1.msra.mxu0 %v1618
    %1767 = vmatprep.subr.mxu0 %v1621
    %1768 = vmatpush1.msra.mxu0 %v1620
    %1769 = vmatprep.subr.mxu0 %v1623
    %1770 = vmatpush1.msra.mxu0 %v1622
    %1771 = vmatprep.subr.mxu0 %v1625
    %1772 = vmatpush1.msra.mxu0 %v1624
    %1773 = vmatprep.subr.mxu0 %v1627
    %1774 = vmatpush1.msra.mxu0 %v1626
    %1775 = vmatprep.subr.mxu0 %v1629
    %1776 = vmatpush1.msra.mxu0 %v1628
    %1777 = vmatprep.subr.mxu0 %v1631
    %1778 = vmatpush1.msra.mxu0 %v1630
    %1779 = vmatprep.subr.mxu0 %v1633
    %1780 = vmatpush1.msra.mxu0 %v1632
    %1781 = vmatprep.subr.mxu0 %v1635
    %1782 = vmatpush1.msra.mxu0 %v1634
    %1783 = vmatprep.subr.mxu0 %v1637
    %1784 = vmatpush1.msra.mxu0 %v1636
    %1785 = vmatprep.subr.mxu0 %v1639
    %1786 = vmatpush1.msra.mxu0 %v1638
    %1787 = vmatprep.mubr.f32.mxu0 %v1447
    %1788 = vmatmul.mubr.f32.gmra.mrb[0].mxu0 %v1446
    %v1789 = vpop.f32.mrb[0].mxu0
    %v1790 = vadd.f32 %v1719, %v1789
    %v1791 = vpop.f32.mrb[0].mxu0
    %v1792 = vadd.f32 %v1721, %v1791
    %1793 = vdwg.mxu0
    %v1794 = vmax.f32 %v1790, 0.0
    %v1795 = vmax.f32 %v1792, 0.0
    %v1796 = vld [vmem:[%s5] sm:$0xf]
    %v1797 = vld [vmem:[%s5 + $0x4] sm:$0xf]
    %v1798 = vld [vmem:[%s5 + $0x8] sm:$0xf]
    %v1799 = vld [vmem:[%s5 + $0xc] sm:$0xf]
    %v1800 = vld [vmem:[%s5 + $0x10] sm:$0xf]
    %v1801 = vld [vmem:[%s5 + $0x14] sm:$0xf]
    %v1802 = vld [vmem:[%s5 + $0x18] sm:$0xf]
    %v1803 = vld [vmem:[%s5 + $0x1c] sm:$0xf]
    %v1804 = vld [vmem:[%s5 + $0x20] sm:$0xf]
    %v1805 = vld [vmem:[%s5 + $0x24] sm:$0xf]
    %v1806 = vld [vmem:[%s5 + $0x28] sm:$0xf]
    %v1807 = vld [vmem:[%s5 + $0x2c] sm:$0xf]
    %v1808 = vld [vmem:[%s5 + $0x30] sm:$0xf]
    %v1809 = vld [vmem:[%s5 + $0x34] sm:$0xf]
    %v1810 = vld [vmem:[%s5 + $0x38] sm:$0xf]
    %v1811 = vld [vmem:[%s5 + $0x3c] sm:$0xf]
    %v1812 = vld [vmem:[%s5 + $0x40] sm:$0xf]
    %v1813 = vld [vmem:[%s5 + $0x44] sm:$0xf]
    %v1814 = vld [vmem:[%s5 + $0x48] sm:$0xf]
    %v1815 = vld [vmem:[%s5 + $0x4c] sm:$0xf]
    %v1816 = vld [vmem:[%s5 + $0x50] sm:$0xf]
    %v1817 = vld [vmem:[%s5 + $0x54] sm:$0xf]
    %v1818 = vld [vmem:[%s5 + $0x58] sm:$0xf]
    %v1819 = vld [vmem:[%s5 + $0x5c] sm:$0xf]
    %v1820 = vld [vmem:[%s5 + $0x60] sm:$0xf]
    %v1821 = vld [vmem:[%s5 + $0x64] sm:$0xf]
    %v1822 = vld [vmem:[%s5 + $0x68] sm:$0xf]
    %v1823 = vld [vmem:[%s5 + $0x6c] sm:$0xf]
    %v1824 = vld [vmem:[%s5 + $0x70] sm:$0xf]
    %v1825 = vld [vmem:[%s5 + $0x74] sm:$0xf]
    %v1826 = vld [vmem:[%s5 + $0x78] sm:$0xf]
    %v1827 = vld [vmem:[%s5 + $0x7c] sm:$0xf]
    %v1828 = vunpack.c.l.bf16 %v1796
    %v1829 = vunpack.c.l.bf16 %v1797
    %v1830 = vunpack.c.l.bf16 %v1798
    %v1831 = vunpack.c.l.bf16 %v1799
    %v1832 = vunpack.c.l.bf16 %v1800
    %v1833 = vunpack.c.l.bf16 %v1801
    %v1834 = vunpack.c.l.bf16 %v1802
    %v1835 = vunpack.c.l.bf16 %v1803
    %v1836 = vunpack.c.l.bf16 %v1804
    %v1837 = vunpack.c.l.bf16 %v1805
    %v1838 = vunpack.c.l.bf16 %v1806
    %v1839 = vunpack.c.l.bf16 %v1807
    %v1840 = vunpack.c.l.bf16 %v1808
    %v1841 = vunpack.c.l.bf16 %v1809
    %v1842 = vunpack.c.l.bf16 %v1810
    %v1843 = vunpack.c.l.bf16 %v1811
    %v1844 = vunpack.c.l.bf16 %v1812
    %v1845 = vunpack.c.l.bf16 %v1813
    %v1846 = vunpack.c.l.bf16 %v1814
    %v1847 = vunpack.c.l.bf16 %v1815
    %v1848 = vunpack.c.l.bf16 %v1816
    %v1849 = vunpack.c.l.bf16 %v1817
    %v1850 = vunpack.c.l.bf16 %v1818
    %v1851 = vunpack.c.l.bf16 %v1819
    %v1852 = vunpack.c.l.bf16 %v1820
    %v1853 = vunpack.c.l.bf16 %v1821
    %v1854 = vunpack.c.l.bf16 %v1822
    %v1855 = vunpack.c.l.bf16 %v1823
    %v1856 = vunpack.c.l.bf16 %v1824
    %v1857 = vunpack.c.l.bf16 %v1825
    %v1858 = vunpack.c.l.bf16 %v1826
    %v1859 = vunpack.c.l.bf16 %v1827
    %v1860 = vld [vmem:[%s6] sm:$0x1]
    %v1862 = vlaneseq
    %v1863 = vshrl.u32 %v1862, 7
    %v1864 = vsub.s32 0, %v1863
    %v1865 = vrot.slane %v1860, %v1864
    %1867 = vmatprep.subr.mxu0 0.0
    %1868 = vmatpush1.msra.mxu0 %v1828
    %1869 = vmatprep.subr.mxu0 0.0
    %1870 = vmatpush1.msra.mxu0 %v1829
    %1871 = vmatprep.subr.mxu0 0.0
    %1872 = vmatpush1.msra.mxu0 %v1830
    %1873 = vmatprep.subr.mxu0 0.0
    %1874 = vmatpush1.msra.mxu0 %v1831
    %1875 = vmatprep.subr.mxu0 0.0
    %1876 = vmatpush1.msra.mxu0 %v1832
    %1877 = vmatprep.subr.mxu0 0.0
    %1878 = vmatpush1.msra.mxu0 %v1833
    %1879 = vmatprep.subr.mxu0 0.0
    %1880 = vmatpush1.msra.mxu0 %v1834
    %1881 = vmatprep.subr.mxu0 0.0
    %1882 = vmatpush1.msra.mxu0 %v1835
    %1883 = vmatprep.subr.mxu0 0.0
    %1884 = vmatpush1.msra.mxu0 %v1836
    %1885 = vmatprep.subr.mxu0 0.0
    %1886 = vmatpush1.msra.mxu0 %v1837
    %1887 = vmatprep.subr.mxu0 0.0
    %1888 = vmatpush1.msra.mxu0 %v1838
    %1889 = vmatprep.subr.mxu0 0.0
    %1890 = vmatpush1.msra.mxu0 %v1839
    %1891 = vmatprep.subr.mxu0 0.0
    %1892 = vmatpush1.msra.mxu0 %v1840
    %1893 = vmatprep.subr.mxu0 0.0
    %1894 = vmatpush1.msra.mxu0 %v1841
    %1895 = vmatprep.subr.mxu0 0.0
    %1896 = vmatpush1.msra.mxu0 %v1842
    %1897 = vmatprep.subr.mxu0 0.0
    %1898 = vmatpush1.msra.mxu0 %v1843
    %1899 = vmatprep.subr.mxu0 0.0
    %1900 = vmatpush1.msra.mxu0 %v1844
    %1901 = vmatprep.subr.mxu0 0.0
    %1902 = vmatpush1.msra.mxu0 %v1845
    %1903 = vmatprep.subr.mxu0 0.0
    %1904 = vmatpush1.msra.mxu0 %v1846
    %1905 = vmatprep.subr.mxu0 0.0
    %1906 = vmatpush1.msra.mxu0 %v1847
    %1907 = vmatprep.subr.mxu0 0.0
    %1908 = vmatpush1.msra.mxu0 %v1848
    %1909 = vmatprep.subr.mxu0 0.0
    %1910 = vmatpush1.msra.mxu0 %v1849
    %1911 = vmatprep.subr.mxu0 0.0
    %1912 = vmatpush1.msra.mxu0 %v1850
    %1913 = vmatprep.subr.mxu0 0.0
    %1914 = vmatpush1.msra.mxu0 %v1851
    %1915 = vmatprep.subr.mxu0 0.0
    %1916 = vmatpush1.msra.mxu0 %v1852
    %1917 = vmatprep.subr.mxu0 0.0
    %1918 = vmatpush1.msra.mxu0 %v1853
    %1919 = vmatprep.subr.mxu0 0.0
    %1920 = vmatpush1.msra.mxu0 %v1854
    %1921 = vmatprep.subr.mxu0 0.0
    %1922 = vmatpush1.msra.mxu0 %v1855
    %1923 = vmatprep.subr.mxu0 0.0
    %1924 = vmatpush1.msra.mxu0 %v1856
    %1925 = vmatprep.subr.mxu0 0.0
    %1926 = vmatpush1.msra.mxu0 %v1857
    %1927 = vmatprep.subr.mxu0 0.0
    %1928 = vmatpush1.msra.mxu0 %v1858
    %1929 = vmatprep.subr.mxu0 0.0
    %1930 = vmatpush1.msra.mxu0 %v1859
    %1931 = vmatprep.mubr.f32.mxu0 %v1795
    %1932 = vmatmul.mubr.f32.gmra.mrb[0].mxu0 %v1794
    %v1933 = vpop.f32.mrb[0].mxu0
    %v1934 = vadd.f32 %v1865, %v1933
    %v1935 = vpop.f32.mrb[0].mxu0
    %1936 = vdwg.mxu0
    %1937 = vst [vmem:[%s7] sm:$0x3] %v1934
    // Predicated region
    $region34: #{stn3d_forward.3} parent=1 // pred_check
      _
    $region35: #{stn3d_forward.3} parent=1 // pred_check_branch
      %1939 = sbr.rel (0) target = $region37
    $region36: #{stn3d_forward.3} parent=1 // pred_region
      _
    $region37: #{stn3d_forward.3} parent=1 // pred_fallthru
      _
    // Predicated region
    $region38: #{stn3d_forward.3} parent=1 // pred_check
      _
    $region39: #{stn3d_forward.3} parent=1 // pred_check_branch
      %1941 = sbr.rel (0) target = $region41
    $region40: #{stn3d_forward.3} parent=1 // pred_region
      _
    $region41: #{stn3d_forward.3} parent=1 // pred_fallthru
      _
    %1942 = vsyncpa [#allocation3], 1

</llo_original>
